<compile_context>
chip_gen: v7x
topology: tpu7x:2x2x1
jax: 0.10.0
libtpu: 0.0.40
codegen_flags: <defaults>
</compile_context>

<pallas_src>
import functools

import jax
import jax.numpy as jnp
from jax.experimental import pallas as pl
from jax.experimental.pallas import tpu as pltpu

# ReLU placement for the 10 linear layers (last linear of each encoder and the
# classifier linear have no ReLU).
RELU_FLAGS = (True, True, False,   # encoder1
              True, True, False,   # encoder2
              True, True, False,   # encoder3
              False)               # classifier

LANE = 128
NEG_BIG = -1e30  # finite "minus infinity" for padded softmax lanes (avoids NaN)


def _round_up(a, m):
    return ((a + m - 1) // m) * m


def sae_kernel(x_ref, *refs):
    """refs = (w0, b0, ..., w9, b9, out_ref).

    x tile: (TB, in_dim) f32; weights bf16 (in, out); biases f32 (1, out);
    out tile: (TB, 128) f32 (lane-dense, padded lanes carry ~0 probability).
    """
    out_ref = refs[-1]
    param_refs = refs[:-1]
    n_layers = len(param_refs) // 2

    h = x_ref[...].astype(jnp.float32)
    for li in range(n_layers):
        w = param_refs[2 * li][...]          # (in, out)   bf16
        b = param_refs[2 * li + 1][...]      # (1,  out)   f32
        # bf16 MXU inputs, f32 accumulation; bias/ReLU stay f32 on the VPU.
        h = jnp.dot(h.astype(w.dtype), w,
                    preferred_element_type=jnp.float32) + b
        if RELU_FLAGS[li]:
            h = jnp.maximum(h, 0.0)

    # Stable softmax over the (padded, 128-wide) last axis. Padded lanes have
    # bias -1e30 -> exp underflows to exactly 0, so they never contribute.
    m = jnp.max(h, axis=-1, keepdims=True)
    e = jnp.exp(h - m)
    s = jnp.sum(e, axis=-1, keepdims=True)
    out_ref[...] = (e * pl.reciprocal(s, approx=True)).astype(out_ref.dtype)


@functools.partial(jax.jit, static_argnames=("tile_b",))
def stacked_autoencoder_forward(x, params, *, tile_b=256):
    """x: (B, ae1_input) f32. params: list of 10 (W_t, b) with W_t (in, out),
    b (1, out). Returns softmax probabilities (B, output_num) in f32."""
    B, in_dim = x.shape
    out_dim = params[-1][0].shape[1]
    out_pad = _round_up(out_dim, LANE)           # lane-dense output width (128)

    # --- prepare parameters: pre-transpose already done by caller; here we pad
    # the classifier to lane-dense width and cast weights to bf16 for the MXU.
    flat = []
    n_layers = len(params)
    for li, (w, b) in enumerate(params):
        if li == n_layers - 1:
            w = jnp.zeros((w.shape[0], out_pad), w.dtype).at[:, :out_dim].set(w)
            b = jnp.full((1, out_pad), NEG_BIG, jnp.float32).at[:, :out_dim].set(b)
        flat.append(w.astype(jnp.bfloat16))
        flat.append(b.astype(jnp.float32))

    # --- batch tiling: TB rows per grid step (multiple of 8), pad B up to a
    # multiple of TB so every tile is full (padded rows sliced off at the end).
    TB = min(tile_b, _round_up(B, 8))
    TB = _round_up(TB, 8)
    B_pad = _round_up(B, TB)
    if B_pad != B:
        x = jnp.pad(x, ((0, B_pad - B), (0, 0)))
    grid = (B_pad // TB,)

    # Params stay resident across grid steps (same block index every iteration);
    # x / out are double-buffered by the BlockSpec pipeline.
    def resident_spec(arr):
        nd = arr.ndim
        return pl.BlockSpec(arr.shape, lambda i, _nd=nd: (0,) * _nd)

    in_specs = [pl.BlockSpec((TB, in_dim), lambda i: (i, 0))]
    in_specs += [resident_spec(a) for a in flat]
    out_specs = pl.BlockSpec((TB, out_pad), lambda i: (i, 0))

    # Advisory cost estimate for the XLA scheduler.
    flops = 2 * B_pad * sum(int(w.shape[0]) * int(w.shape[1]) for w in flat[::2])
    transcendentals = B_pad * (out_pad + 1)      # exp per lane + 1 reciprocal/row
    bytes_accessed = (x.size * x.dtype.itemsize
                      + sum(a.size * a.dtype.itemsize for a in flat)
                      + B_pad * out_pad * 4)

    out = pl.pallas_call(
        sae_kernel,
        out_shape=jax.ShapeDtypeStruct((B_pad, out_pad), jnp.float32),
        grid=grid,
        in_specs=in_specs,
        out_specs=out_specs,
        compiler_params=pltpu.CompilerParams(
            dimension_semantics=("parallel",)),
        cost_estimate=pl.CostEstimate(
            flops=flops,
            transcendentals=transcendentals,
            bytes_accessed=bytes_accessed),
    )(x, *flat)

    return out[:B, :out_dim]


def ref_forward(x, params, matmul_dtype=jnp.float32):
    """Pure-JAX reference mirroring the PyTorch module. matmul_dtype lets us also
    emulate the kernel's bf16-input / f32-accumulate matmuls for a tight check."""
    h = x.astype(jnp.float32)
    for li, (w, b) in enumerate(params):
        h = jnp.dot(h.astype(matmul_dtype), w.astype(matmul_dtype),
                    preferred_element_type=jnp.float32) + b
        if RELU_FLAGS[li]:
            h = jnp.maximum(h, 0.0)
    return jax.nn.softmax(h, axis=-1)


def make_params(key, layer_dims):
    """Deterministic init mimicking PyTorch nn.Linear default
    U(-1/sqrt(fan_in), 1/sqrt(fan_in)). Weights already (in, out)."""
    params = []
    for (din, dout) in layer_dims:
        key, kw, kb = jax.random.split(key, 3)
        bound = 1.0 / jnp.sqrt(jnp.float32(din))
        w = jax.random.uniform(kw, (din, dout), jnp.float32, -bound, bound)
        b = jax.random.uniform(kb, (1, dout), jnp.float32, -bound, bound)
        params.append((w, b))
    return params


if __name__ == "__main__":
    # Small synthetic cfg consistent with the module's constructor.
    cfg = dict(
        ae1_input=32, ae1_hidden1=64, ae1_hidden2=48, ae1_output=32,
        ae2_input=32, ae2_hidden1=48, ae2_hidden2=32, ae2_output=16,
        ae3_input=16, ae3_hidden1=32, ae3_hidden2=16, ae3_output=16,
        output_num=10,
    )
    layer_dims = [
        # encoder1
        (cfg["ae1_input"], cfg["ae1_hidden1"]),
        (cfg["ae1_hidden1"], cfg["ae1_hidden2"]),
        (cfg["ae1_hidden2"], cfg["ae1_output"]),
        # encoder2
        (cfg["ae2_input"], cfg["ae2_hidden1"]),
        (cfg["ae2_hidden1"], cfg["ae2_hidden2"]),
        (cfg["ae2_hidden2"], cfg["ae2_output"]),
        # encoder3
        (cfg["ae3_input"], cfg["ae3_hidden1"]),
        (cfg["ae3_hidden1"], cfg["ae3_hidden2"]),
        (cfg["ae3_hidden2"], cfg["ae3_output"]),
        # classifier
        (cfg["ae3_output"], cfg["output_num"]),
    ]

    key = jax.random.PRNGKey(0)
    key, kx = jax.random.split(key)
    # B=300 with tile_b=256 exercises multi-tile batch pipelining + batch padding.
    B = 300
    x = jax.random.normal(kx, (B, cfg["ae1_input"]), jnp.float32)
    params = make_params(key, layer_dims)

    y = stacked_autoencoder_forward(x, params, tile_b=256)
    y = jax.block_until_ready(y)

    assert y.shape == (B, cfg["output_num"])
    # Probabilities sum to 1 (approx reciprocal in the epilogue => loose tol).
    assert jnp.allclose(jnp.sum(y, axis=-1), 1.0, atol=2e-3)
    # Tight check against a reference that emulates the kernel math (bf16 matmul
    # inputs, f32 accumulation).
    y_ref_bf16 = ref_forward(x, params, matmul_dtype=jnp.bfloat16)
    assert jnp.allclose(y, y_ref_bf16, atol=2e-3, rtol=2e-3)
    # Semantic check against the full-f32 PyTorch-equivalent reference.
    y_ref_f32 = ref_forward(x, params, matmul_dtype=jnp.float32)
    assert jnp.allclose(y, y_ref_f32, atol=2e-2, rtol=2e-2)

    print("KERNEL_OK")
</pallas_src>

<mosaic_0001>
module attributes {stable_mosaic.version = 11 : i64} {
  func.func @sae_kernel(%arg0: i32, %arg1: memref<256x32xf32, #tpu.memory_space<vmem>>, %arg2: memref<32x64xbf16, #tpu.memory_space<vmem>>, %arg3: memref<1x64xf32, #tpu.memory_space<vmem>>, %arg4: memref<64x48xbf16, #tpu.memory_space<vmem>>, %arg5: memref<1x48xf32, #tpu.memory_space<vmem>>, %arg6: memref<48x32xbf16, #tpu.memory_space<vmem>>, %arg7: memref<1x32xf32, #tpu.memory_space<vmem>>, %arg8: memref<32x48xbf16, #tpu.memory_space<vmem>>, %arg9: memref<1x48xf32, #tpu.memory_space<vmem>>, %arg10: memref<48x32xbf16, #tpu.memory_space<vmem>>, %arg11: memref<1x32xf32, #tpu.memory_space<vmem>>, %arg12: memref<32x16xbf16, #tpu.memory_space<vmem>>, %arg13: memref<1x16xf32, #tpu.memory_space<vmem>>, %arg14: memref<16x32xbf16, #tpu.memory_space<vmem>>, %arg15: memref<1x32xf32, #tpu.memory_space<vmem>>, %arg16: memref<32x16xbf16, #tpu.memory_space<vmem>>, %arg17: memref<1x16xf32, #tpu.memory_space<vmem>>, %arg18: memref<16x16xbf16, #tpu.memory_space<vmem>>, %arg19: memref<1x16xf32, #tpu.memory_space<vmem>>, %arg20: memref<16x128xbf16, #tpu.memory_space<vmem>>, %arg21: memref<1x128xf32, #tpu.memory_space<vmem>>, %arg22: memref<256x128xf32, #tpu.memory_space<vmem>>) attributes {dimension_semantics = [#tpu.dimension_semantics<parallel>], iteration_bounds = array<i64: 2>, scalar_prefetch = 0 : i64, scratch_operands = 0 : i64, tpu.core_type = #tpu.core_type<tc>, window_params = [{transform_indices = @transform_0, window_bounds = array<i64: 256, 32>}, {pipeline_mode = #tpu.pipeline_mode<synchronous>, transform_indices = @transform_1, window_bounds = array<i64: 32, 64>}, {pipeline_mode = #tpu.pipeline_mode<synchronous>, transform_indices = @transform_2, window_bounds = array<i64: 1, 64>}, {pipeline_mode = #tpu.pipeline_mode<synchronous>, transform_indices = @transform_3, window_bounds = array<i64: 64, 48>}, {pipeline_mode = #tpu.pipeline_mode<synchronous>, transform_indices = @transform_4, window_bounds = array<i64: 1, 48>}, {pipeline_mode = #tpu.pipeline_mode<synchronous>, transform_indices = @transform_5, window_bounds = array<i64: 48, 32>}, {pipeline_mode = #tpu.pipeline_mode<synchronous>, transform_indices = @transform_6, window_bounds = array<i64: 1, 32>}, {pipeline_mode = #tpu.pipeline_mode<synchronous>, transform_indices = @transform_7, window_bounds = array<i64: 32, 48>}, {pipeline_mode = #tpu.pipeline_mode<synchronous>, transform_indices = @transform_8, window_bounds = array<i64: 1, 48>}, {pipeline_mode = #tpu.pipeline_mode<synchronous>, transform_indices = @transform_9, window_bounds = array<i64: 48, 32>}, {pipeline_mode = #tpu.pipeline_mode<synchronous>, transform_indices = @transform_10, window_bounds = array<i64: 1, 32>}, {pipeline_mode = #tpu.pipeline_mode<synchronous>, transform_indices = @transform_11, window_bounds = array<i64: 32, 16>}, {pipeline_mode = #tpu.pipeline_mode<synchronous>, transform_indices = @transform_12, window_bounds = array<i64: 1, 16>}, {pipeline_mode = #tpu.pipeline_mode<synchronous>, transform_indices = @transform_13, window_bounds = array<i64: 16, 32>}, {pipeline_mode = #tpu.pipeline_mode<synchronous>, transform_indices = @transform_14, window_bounds = array<i64: 1, 32>}, {pipeline_mode = #tpu.pipeline_mode<synchronous>, transform_indices = @transform_15, window_bounds = array<i64: 32, 16>}, {pipeline_mode = #tpu.pipeline_mode<synchronous>, transform_indices = @transform_16, window_bounds = array<i64: 1, 16>}, {pipeline_mode = #tpu.pipeline_mode<synchronous>, transform_indices = @transform_17, window_bounds = array<i64: 16, 16>}, {pipeline_mode = #tpu.pipeline_mode<synchronous>, transform_indices = @transform_18, window_bounds = array<i64: 1, 16>}, {pipeline_mode = #tpu.pipeline_mode<synchronous>, transform_indices = @transform_19, window_bounds = array<i64: 16, 128>}, {pipeline_mode = #tpu.pipeline_mode<synchronous>, transform_indices = @transform_20, window_bounds = array<i64: 1, 128>}, {transform_indices = @transform_21, window_bounds = array<i64: 256, 128>}]} {
    %c0 = arith.constant 0 : index
    %c0_0 = arith.constant 0 : index
    %0 = vector.load %arg1[%c0, %c0_0] : memref<256x32xf32, #tpu.memory_space<vmem>>, vector<256x32xf32>
    %c0_1 = arith.constant 0 : index
    %c0_2 = arith.constant 0 : index
    %1 = vector.load %arg2[%c0_1, %c0_2] : memref<32x64xbf16, #tpu.memory_space<vmem>>, vector<32x64xbf16>
    %c0_3 = arith.constant 0 : index
    %c0_4 = arith.constant 0 : index
    %2 = vector.load %arg3[%c0_3, %c0_4] : memref<1x64xf32, #tpu.memory_space<vmem>>, vector<1x64xf32>
    %3 = arith.truncf %0 : vector<256x32xf32> to vector<256x32xbf16>
    %cst = arith.constant dense<0.000000e+00> : vector<256x64xf32>
    %4 = tpu.matmul %3, %1, %cst {dimension_numbers = #tpu.dot_dimension_numbers<[1], [0], [0], [1], [0, 0, 1, 1], [], []>} : vector<256x32xbf16>, vector<32x64xbf16>, vector<256x64xf32> -> vector<256x64xf32>
    %5 = vector.broadcast %2 : vector<1x64xf32> to vector<256x64xf32>
    %6 = arith.addf %4, %5 : vector<256x64xf32>
    %cst_5 = arith.constant 0.000000e+00 : f32
    %7 = vector.broadcast %cst_5 : f32 to vector<256x64xf32>
    %8 = arith.maximumf %6, %7 : vector<256x64xf32>
    %c0_6 = arith.constant 0 : index
    %c0_7 = arith.constant 0 : index
    %9 = vector.load %arg4[%c0_6, %c0_7] : memref<64x48xbf16, #tpu.memory_space<vmem>>, vector<64x48xbf16>
    %c0_8 = arith.constant 0 : index
    %c0_9 = arith.constant 0 : index
    %10 = vector.load %arg5[%c0_8, %c0_9] : memref<1x48xf32, #tpu.memory_space<vmem>>, vector<1x48xf32>
    %11 = arith.truncf %8 : vector<256x64xf32> to vector<256x64xbf16>
    %cst_10 = arith.constant dense<0.000000e+00> : vector<256x48xf32>
    %12 = tpu.matmul %11, %9, %cst_10 {dimension_numbers = #tpu.dot_dimension_numbers<[1], [0], [0], [1], [0, 0, 1, 1], [], []>} : vector<256x64xbf16>, vector<64x48xbf16>, vector<256x48xf32> -> vector<256x48xf32>
    %13 = vector.broadcast %10 : vector<1x48xf32> to vector<256x48xf32>
    %14 = arith.addf %12, %13 : vector<256x48xf32>
    %cst_11 = arith.constant 0.000000e+00 : f32
    %15 = vector.broadcast %cst_11 : f32 to vector<256x48xf32>
    %16 = arith.maximumf %14, %15 : vector<256x48xf32>
    %c0_12 = arith.constant 0 : index
    %c0_13 = arith.constant 0 : index
    %17 = vector.load %arg6[%c0_12, %c0_13] : memref<48x32xbf16, #tpu.memory_space<vmem>>, vector<48x32xbf16>
    %c0_14 = arith.constant 0 : index
    %c0_15 = arith.constant 0 : index
    %18 = vector.load %arg7[%c0_14, %c0_15] : memref<1x32xf32, #tpu.memory_space<vmem>>, vector<1x32xf32>
    %19 = arith.truncf %16 : vector<256x48xf32> to vector<256x48xbf16>
    %cst_16 = arith.constant dense<0.000000e+00> : vector<256x32xf32>
    %20 = tpu.matmul %19, %17, %cst_16 {dimension_numbers = #tpu.dot_dimension_numbers<[1], [0], [0], [1], [0, 0, 1, 1], [], []>} : vector<256x48xbf16>, vector<48x32xbf16>, vector<256x32xf32> -> vector<256x32xf32>
    %21 = vector.broadcast %18 : vector<1x32xf32> to vector<256x32xf32>
    %22 = arith.addf %20, %21 : vector<256x32xf32>
    %c0_17 = arith.constant 0 : index
    %c0_18 = arith.constant 0 : index
    %23 = vector.load %arg8[%c0_17, %c0_18] : memref<32x48xbf16, #tpu.memory_space<vmem>>, vector<32x48xbf16>
    %c0_19 = arith.constant 0 : index
    %c0_20 = arith.constant 0 : index
    %24 = vector.load %arg9[%c0_19, %c0_20] : memref<1x48xf32, #tpu.memory_space<vmem>>, vector<1x48xf32>
    %25 = arith.truncf %22 : vector<256x32xf32> to vector<256x32xbf16>
    %cst_21 = arith.constant dense<0.000000e+00> : vector<256x48xf32>
    %26 = tpu.matmul %25, %23, %cst_21 {dimension_numbers = #tpu.dot_dimension_numbers<[1], [0], [0], [1], [0, 0, 1, 1], [], []>} : vector<256x32xbf16>, vector<32x48xbf16>, vector<256x48xf32> -> vector<256x48xf32>
    %27 = vector.broadcast %24 : vector<1x48xf32> to vector<256x48xf32>
    %28 = arith.addf %26, %27 : vector<256x48xf32>
    %cst_22 = arith.constant 0.000000e+00 : f32
    %29 = vector.broadcast %cst_22 : f32 to vector<256x48xf32>
    %30 = arith.maximumf %28, %29 : vector<256x48xf32>
    %c0_23 = arith.constant 0 : index
    %c0_24 = arith.constant 0 : index
    %31 = vector.load %arg10[%c0_23, %c0_24] : memref<48x32xbf16, #tpu.memory_space<vmem>>, vector<48x32xbf16>
    %c0_25 = arith.constant 0 : index
    %c0_26 = arith.constant 0 : index
    %32 = vector.load %arg11[%c0_25, %c0_26] : memref<1x32xf32, #tpu.memory_space<vmem>>, vector<1x32xf32>
    %33 = arith.truncf %30 : vector<256x48xf32> to vector<256x48xbf16>
    %cst_27 = arith.constant dense<0.000000e+00> : vector<256x32xf32>
    %34 = tpu.matmul %33, %31, %cst_27 {dimension_numbers = #tpu.dot_dimension_numbers<[1], [0], [0], [1], [0, 0, 1, 1], [], []>} : vector<256x48xbf16>, vector<48x32xbf16>, vector<256x32xf32> -> vector<256x32xf32>
    %35 = vector.broadcast %32 : vector<1x32xf32> to vector<256x32xf32>
    %36 = arith.addf %34, %35 : vector<256x32xf32>
    %cst_28 = arith.constant 0.000000e+00 : f32
    %37 = vector.broadcast %cst_28 : f32 to vector<256x32xf32>
    %38 = arith.maximumf %36, %37 : vector<256x32xf32>
    %c0_29 = arith.constant 0 : index
    %c0_30 = arith.constant 0 : index
    %39 = vector.load %arg12[%c0_29, %c0_30] : memref<32x16xbf16, #tpu.memory_space<vmem>>, vector<32x16xbf16>
    %c0_31 = arith.constant 0 : index
    %c0_32 = arith.constant 0 : index
    %40 = vector.load %arg13[%c0_31, %c0_32] : memref<1x16xf32, #tpu.memory_space<vmem>>, vector<1x16xf32>
    %41 = arith.truncf %38 : vector<256x32xf32> to vector<256x32xbf16>
    %cst_33 = arith.constant dense<0.000000e+00> : vector<256x16xf32>
    %42 = tpu.matmul %41, %39, %cst_33 {dimension_numbers = #tpu.dot_dimension_numbers<[1], [0], [0], [1], [0, 0, 1, 1], [], []>} : vector<256x32xbf16>, vector<32x16xbf16>, vector<256x16xf32> -> vector<256x16xf32>
    %43 = vector.broadcast %40 : vector<1x16xf32> to vector<256x16xf32>
    %44 = arith.addf %42, %43 : vector<256x16xf32>
    %c0_34 = arith.constant 0 : index
    %c0_35 = arith.constant 0 : index
    %45 = vector.load %arg14[%c0_34, %c0_35] : memref<16x32xbf16, #tpu.memory_space<vmem>>, vector<16x32xbf16>
    %c0_36 = arith.constant 0 : index
    %c0_37 = arith.constant 0 : index
    %46 = vector.load %arg15[%c0_36, %c0_37] : memref<1x32xf32, #tpu.memory_space<vmem>>, vector<1x32xf32>
    %47 = arith.truncf %44 : vector<256x16xf32> to vector<256x16xbf16>
    %cst_38 = arith.constant dense<0.000000e+00> : vector<256x32xf32>
    %48 = tpu.matmul %47, %45, %cst_38 {dimension_numbers = #tpu.dot_dimension_numbers<[1], [0], [0], [1], [0, 0, 1, 1], [], []>} : vector<256x16xbf16>, vector<16x32xbf16>, vector<256x32xf32> -> vector<256x32xf32>
    %49 = vector.broadcast %46 : vector<1x32xf32> to vector<256x32xf32>
    %50 = arith.addf %48, %49 : vector<256x32xf32>
    %cst_39 = arith.constant 0.000000e+00 : f32
    %51 = vector.broadcast %cst_39 : f32 to vector<256x32xf32>
    %52 = arith.maximumf %50, %51 : vector<256x32xf32>
    %c0_40 = arith.constant 0 : index
    %c0_41 = arith.constant 0 : index
    %53 = vector.load %arg16[%c0_40, %c0_41] : memref<32x16xbf16, #tpu.memory_space<vmem>>, vector<32x16xbf16>
    %c0_42 = arith.constant 0 : index
    %c0_43 = arith.constant 0 : index
    %54 = vector.load %arg17[%c0_42, %c0_43] : memref<1x16xf32, #tpu.memory_space<vmem>>, vector<1x16xf32>
    %55 = arith.truncf %52 : vector<256x32xf32> to vector<256x32xbf16>
    %cst_44 = arith.constant dense<0.000000e+00> : vector<256x16xf32>
    %56 = tpu.matmul %55, %53, %cst_44 {dimension_numbers = #tpu.dot_dimension_numbers<[1], [0], [0], [1], [0, 0, 1, 1], [], []>} : vector<256x32xbf16>, vector<32x16xbf16>, vector<256x16xf32> -> vector<256x16xf32>
    %57 = vector.broadcast %54 : vector<1x16xf32> to vector<256x16xf32>
    %58 = arith.addf %56, %57 : vector<256x16xf32>
    %cst_45 = arith.constant 0.000000e+00 : f32
    %59 = vector.broadcast %cst_45 : f32 to vector<256x16xf32>
    %60 = arith.maximumf %58, %59 : vector<256x16xf32>
    %c0_46 = arith.constant 0 : index
    %c0_47 = arith.constant 0 : index
    %61 = vector.load %arg18[%c0_46, %c0_47] : memref<16x16xbf16, #tpu.memory_space<vmem>>, vector<16x16xbf16>
    %c0_48 = arith.constant 0 : index
    %c0_49 = arith.constant 0 : index
    %62 = vector.load %arg19[%c0_48, %c0_49] : memref<1x16xf32, #tpu.memory_space<vmem>>, vector<1x16xf32>
    %63 = arith.truncf %60 : vector<256x16xf32> to vector<256x16xbf16>
    %cst_50 = arith.constant dense<0.000000e+00> : vector<256x16xf32>
    %64 = tpu.matmul %63, %61, %cst_50 {dimension_numbers = #tpu.dot_dimension_numbers<[1], [0], [0], [1], [0, 0, 1, 1], [], []>} : vector<256x16xbf16>, vector<16x16xbf16>, vector<256x16xf32> -> vector<256x16xf32>
    %65 = vector.broadcast %62 : vector<1x16xf32> to vector<256x16xf32>
    %66 = arith.addf %64, %65 : vector<256x16xf32>
    %c0_51 = arith.constant 0 : index
    %c0_52 = arith.constant 0 : index
    %67 = vector.load %arg20[%c0_51, %c0_52] : memref<16x128xbf16, #tpu.memory_space<vmem>>, vector<16x128xbf16>
    %c0_53 = arith.constant 0 : index
    %c0_54 = arith.constant 0 : index
    %68 = vector.load %arg21[%c0_53, %c0_54] : memref<1x128xf32, #tpu.memory_space<vmem>>, vector<1x128xf32>
    %69 = arith.truncf %66 : vector<256x16xf32> to vector<256x16xbf16>
    %cst_55 = arith.constant dense<0.000000e+00> : vector<256x128xf32>
    %70 = tpu.matmul %69, %67, %cst_55 {dimension_numbers = #tpu.dot_dimension_numbers<[1], [0], [0], [1], [0, 0, 1, 1], [], []>} : vector<256x16xbf16>, vector<16x128xbf16>, vector<256x128xf32> -> vector<256x128xf32>
    %71 = vector.broadcast %68 : vector<1x128xf32> to vector<256x128xf32>
    %72 = arith.addf %70, %71 : vector<256x128xf32>
    %cst_56 = arith.constant dense<0xFF800000> : vector<256xf32>
    %73 = vector.multi_reduction <maximumf>, %72, %cst_56 [1] : vector<256x128xf32> to vector<256xf32>
    %74 = vector.shape_cast %73 : vector<256xf32> to vector<256x1xf32>
    %75 = vector.broadcast %74 : vector<256x1xf32> to vector<256x128xf32>
    %76 = arith.subf %72, %75 : vector<256x128xf32>
    %77 = math.exp %76 : vector<256x128xf32>
    %cst_57 = arith.constant dense<0.000000e+00> : vector<256xf32>
    %78 = vector.multi_reduction <add>, %77, %cst_57 [1] : vector<256x128xf32> to vector<256xf32>
    %79 = vector.shape_cast %78 : vector<256xf32> to vector<256x1xf32>
    %80 = tpu.reciprocal %79 {approx = true} : vector<256x1xf32> -> vector<256x1xf32>
    %81 = vector.broadcast %80 : vector<256x1xf32> to vector<256x128xf32>
    %82 = arith.mulf %77, %81 : vector<256x128xf32>
    %c0_58 = arith.constant 0 : index
    %c0_59 = arith.constant 0 : index
    %83 = vector.load %arg22[%c0_58, %c0_59] : memref<256x128xf32, #tpu.memory_space<vmem>>, vector<256x128xf32>
    tpu.vector_store %arg22[%c0_58, %c0_59], %82 {strides = array<i32>} : memref<256x128xf32, #tpu.memory_space<vmem>>, vector<256x128xf32>,
    return
  }
  func.func @transform_0(%arg0: i32) -> (i32, i32) {
    %c0_i32 = arith.constant 0 : i32
    %c0_i32_0 = arith.constant 0 : i32
    return %arg0, %c0_i32 : i32, i32
  }
  func.func @transform_1(%arg0: i32) -> (i32, i32) {
    %c0_i32 = arith.constant 0 : i32
    %c0_i32_0 = arith.constant 0 : i32
    %c0_i32_1 = arith.constant 0 : i32
    return %c0_i32, %c0_i32_0 : i32, i32
  }
  func.func @transform_2(%arg0: i32) -> (i32, i32) {
    %c0_i32 = arith.constant 0 : i32
    %c0_i32_0 = arith.constant 0 : i32
    %c0_i32_1 = arith.constant 0 : i32
    return %c0_i32, %c0_i32_0 : i32, i32
  }
  func.func @transform_3(%arg0: i32) -> (i32, i32) {
    %c0_i32 = arith.constant 0 : i32
    %c0_i32_0 = arith.constant 0 : i32
    %c0_i32_1 = arith.constant 0 : i32
    return %c0_i32, %c0_i32_0 : i32, i32
  }
  func.func @transform_4(%arg0: i32) -> (i32, i32) {
    %c0_i32 = arith.constant 0 : i32
    %c0_i32_0 = arith.constant 0 : i32
    %c0_i32_1 = arith.constant 0 : i32
    return %c0_i32, %c0_i32_0 : i32, i32
  }
  func.func @transform_5(%arg0: i32) -> (i32, i32) {
    %c0_i32 = arith.constant 0 : i32
    %c0_i32_0 = arith.constant 0 : i32
    %c0_i32_1 = arith.constant 0 : i32
    return %c0_i32, %c0_i32_0 : i32, i32
  }
  func.func @transform_6(%arg0: i32) -> (i32, i32) {
    %c0_i32 = arith.constant 0 : i32
    %c0_i32_0 = arith.constant 0 : i32
    %c0_i32_1 = arith.constant 0 : i32
    return %c0_i32, %c0_i32_0 : i32, i32
  }
  func.func @transform_7(%arg0: i32) -> (i32, i32) {
    %c0_i32 = arith.constant 0 : i32
    %c0_i32_0 = arith.constant 0 : i32
    %c0_i32_1 = arith.constant 0 : i32
    return %c0_i32, %c0_i32_0 : i32, i32
  }
  func.func @transform_8(%arg0: i32) -> (i32, i32) {
    %c0_i32 = arith.constant 0 : i32
    %c0_i32_0 = arith.constant 0 : i32
    %c0_i32_1 = arith.constant 0 : i32
    return %c0_i32, %c0_i32_0 : i32, i32
  }
  func.func @transform_9(%arg0: i32) -> (i32, i32) {
    %c0_i32 = arith.constant 0 : i32
    %c0_i32_0 = arith.constant 0 : i32
    %c0_i32_1 = arith.constant 0 : i32
    return %c0_i32, %c0_i32_0 : i32, i32
  }
  func.func @transform_10(%arg0: i32) -> (i32, i32) {
    %c0_i32 = arith.constant 0 : i32
    %c0_i32_0 = arith.constant 0 : i32
    %c0_i32_1 = arith.constant 0 : i32
    return %c0_i32, %c0_i32_0 : i32, i32
  }
  func.func @transform_11(%arg0: i32) -> (i32, i32) {
    %c0_i32 = arith.constant 0 : i32
    %c0_i32_0 = arith.constant 0 : i32
    %c0_i32_1 = arith.constant 0 : i32
    return %c0_i32, %c0_i32_0 : i32, i32
  }
  func.func @transform_12(%arg0: i32) -> (i32, i32) {
    %c0_i32 = arith.constant 0 : i32
    %c0_i32_0 = arith.constant 0 : i32
    %c0_i32_1 = arith.constant 0 : i32
    return %c0_i32, %c0_i32_0 : i32, i32
  }
  func.func @transform_13(%arg0: i32) -> (i32, i32) {
    %c0_i32 = arith.constant 0 : i32
    %c0_i32_0 = arith.constant 0 : i32
    %c0_i32_1 = arith.constant 0 : i32
    return %c0_i32, %c0_i32_0 : i32, i32
  }
  func.func @transform_14(%arg0: i32) -> (i32, i32) {
    %c0_i32 = arith.constant 0 : i32
    %c0_i32_0 = arith.constant 0 : i32
    %c0_i32_1 = arith.constant 0 : i32
    return %c0_i32, %c0_i32_0 : i32, i32
  }
  func.func @transform_15(%arg0: i32) -> (i32, i32) {
    %c0_i32 = arith.constant 0 : i32
    %c0_i32_0 = arith.constant 0 : i32
    %c0_i32_1 = arith.constant 0 : i32
    return %c0_i32, %c0_i32_0 : i32, i32
  }
  func.func @transform_16(%arg0: i32) -> (i32, i32) {
    %c0_i32 = arith.constant 0 : i32
    %c0_i32_0 = arith.constant 0 : i32
    %c0_i32_1 = arith.constant 0 : i32
    return %c0_i32, %c0_i32_0 : i32, i32
  }
  func.func @transform_17(%arg0: i32) -> (i32, i32) {
    %c0_i32 = arith.constant 0 : i32
    %c0_i32_0 = arith.constant 0 : i32
    %c0_i32_1 = arith.constant 0 : i32
    return %c0_i32, %c0_i32_0 : i32, i32
  }
  func.func @transform_18(%arg0: i32) -> (i32, i32) {
    %c0_i32 = arith.constant 0 : i32
    %c0_i32_0 = arith.constant 0 : i32
    %c0_i32_1 = arith.constant 0 : i32
    return %c0_i32, %c0_i32_0 : i32, i32
  }
  func.func @transform_19(%arg0: i32) -> (i32, i32) {
    %c0_i32 = arith.constant 0 : i32
    %c0_i32_0 = arith.constant 0 : i32
    %c0_i32_1 = arith.constant 0 : i32
    return %c0_i32, %c0_i32_0 : i32, i32
  }
  func.func @transform_20(%arg0: i32) -> (i32, i32) {
    %c0_i32 = arith.constant 0 : i32
    %c0_i32_0 = arith.constant 0 : i32
    %c0_i32_1 = arith.constant 0 : i32
    return %c0_i32, %c0_i32_0 : i32, i32
  }
  func.func @transform_21(%arg0: i32) -> (i32, i32) {
    %c0_i32 = arith.constant 0 : i32
    %c0_i32_0 = arith.constant 0 : i32
    return %arg0, %c0_i32 : i32, i32
  }
}

</mosaic_0001>

<llo_original>
// kernel: stacked_autoencoder_forward.1
$region0: #{stacked_autoencoder_forward.1}
  #allocation0 [shape = 'u32[]', space=smem, size = 0x4, offset = 0x4, fixed_abs, tag = 'smem constant byte address 0x4 - core index']
  #allocation1 [shape = 'u32[144,128]{1,0:T(1,128)}', space=vmem, size = 0x12000, scoped, tag = 'internal scratch']
  %s0 = inlined_call_operand.vmem [shape: f32[512,32], index: 0, kind: input, shape index: {}]
  %s1 = inlined_call_operand.vmem [shape: bf16[32,64], index: 1, kind: input, shape index: {}]
  %s2 = inlined_call_operand.vmem [shape: f32[1,64], index: 2, kind: input, shape index: {}]
  %s3 = inlined_call_operand.vmem [shape: bf16[64,48], index: 3, kind: input, shape index: {}]
  %s4 = inlined_call_operand.vmem [shape: f32[1,48], index: 4, kind: input, shape index: {}]
  %s5 = inlined_call_operand.vmem [shape: bf16[48,32], index: 5, kind: input, shape index: {}]
  %s6 = inlined_call_operand.vmem [shape: f32[1,32], index: 6, kind: input, shape index: {}]
  %s7 = inlined_call_operand.vmem [shape: bf16[32,48], index: 7, kind: input, shape index: {}]
  %s8 = inlined_call_operand.vmem [shape: f32[1,48], index: 8, kind: input, shape index: {}]
  %s9 = inlined_call_operand.vmem [shape: bf16[48,32], index: 9, kind: input, shape index: {}]
  %s10 = inlined_call_operand.vmem [shape: f32[1,32], index: 10, kind: input, shape index: {}]
  %s11 = inlined_call_operand.vmem [shape: bf16[32,16], index: 11, kind: input, shape index: {}]
  %s12 = inlined_call_operand.vmem [shape: f32[1,16], index: 12, kind: input, shape index: {}]
  %s13 = inlined_call_operand.vmem [shape: bf16[16,32], index: 13, kind: input, shape index: {}]
  %s14 = inlined_call_operand.vmem [shape: f32[1,32], index: 14, kind: input, shape index: {}]
  %s15 = inlined_call_operand.vmem [shape: bf16[32,16], index: 15, kind: input, shape index: {}]
  %s16 = inlined_call_operand.vmem [shape: f32[1,16], index: 16, kind: input, shape index: {}]
  %s17 = inlined_call_operand.vmem [shape: bf16[16,16], index: 17, kind: input, shape index: {}]
  %s18 = inlined_call_operand.vmem [shape: f32[1,16], index: 18, kind: input, shape index: {}]
  %s19 = inlined_call_operand.vmem [shape: bf16[16,128], index: 19, kind: input, shape index: {}]
  %s20 = inlined_call_operand.vmem [shape: f32[1,128], index: 20, kind: input, shape index: {}]
  %s21 = inlined_call_operand.vmem [shape: f32[512,128], index: 21, kind: output, shape index: {}]
  %s22 = sld [smem:[#allocation0]]
  $region117: #{stacked_autoencoder_forward.1} parent=0
    _
  %s24 = ssub.s32 1, %s22
  %s25 = scalar_select 0, %s24, %s22
  loop: start=0, step=1, limit=4
  $region2: #{stacked_autoencoder_forward.1} parent=0 // loop_pre_header
    _
  $region3: #{stacked_autoencoder_forward.1} parent=0 // loop_header
    %s27 = sphi 0, %s31
    %p28 = scmp.ge.s32.totalorder %s27, 4
    %s37 = sphi 0, %s39
    %s40 = sphi 0, %s37
    %s41 = sphi 0, %s40
    %s57 = sphi 0, %s41
    %s61 = sphi 0, %s61
    %s63 = sphi 0, %s61
    %s64 = sphi 0, %s63
    %s78 = sphi 0, %s64
    %s82 = sphi 0, %s82
    %s84 = sphi 0, %s82
    %s85 = sphi 0, %s84
    %s99 = sphi 0, %s85
    %s103 = sphi 0, %s103
    %s105 = sphi 0, %s103
    %s106 = sphi 0, %s105
    %s120 = sphi 0, %s106
    %s124 = sphi 0, %s124
    %s126 = sphi 0, %s124
    %s127 = sphi 0, %s126
    %s141 = sphi 0, %s127
    %s145 = sphi 0, %s145
    %s147 = sphi 0, %s145
    %s148 = sphi 0, %s147
    %s162 = sphi 0, %s148
    %s166 = sphi 0, %s166
    %s168 = sphi 0, %s166
    %s169 = sphi 0, %s168
    %s183 = sphi 0, %s169
    %s187 = sphi 0, %s187
    %s189 = sphi 0, %s187
    %s190 = sphi 0, %s189
    %s204 = sphi 0, %s190
    %s208 = sphi 0, %s208
    %s210 = sphi 0, %s208
    %s211 = sphi 0, %s210
    %s225 = sphi 0, %s211
    %s229 = sphi 0, %s229
    %s231 = sphi 0, %s229
    %s232 = sphi 0, %s231
    %s246 = sphi 0, %s232
    %s250 = sphi 0, %s250
    %s252 = sphi 0, %s250
    %s253 = sphi 0, %s252
    %s267 = sphi 0, %s253
    %s271 = sphi 0, %s271
    %s273 = sphi 0, %s271
    %s274 = sphi 0, %s273
    %s288 = sphi 0, %s274
    %s292 = sphi 0, %s292
    %s294 = sphi 0, %s292
    %s295 = sphi 0, %s294
    %s309 = sphi 0, %s295
    %s313 = sphi 0, %s313
    %s315 = sphi 0, %s313
    %s316 = sphi 0, %s315
    %s330 = sphi 0, %s316
    %s334 = sphi 0, %s334
    %s336 = sphi 0, %s334
    %s337 = sphi 0, %s336
    %s351 = sphi 0, %s337
    %s355 = sphi 0, %s355
    %s357 = sphi 0, %s355
    %s358 = sphi 0, %s357
    %s372 = sphi 0, %s358
    %s376 = sphi 0, %s376
    %s378 = sphi 0, %s376
    %s379 = sphi 0, %s378
    %s393 = sphi 0, %s379
    %s397 = sphi 0, %s397
    %s399 = sphi 0, %s397
    %s400 = sphi 0, %s399
    %s414 = sphi 0, %s400
    %s418 = sphi 0, %s418
    %s420 = sphi 0, %s418
    %s421 = sphi 0, %s420
    %s435 = sphi 0, %s421
    %s439 = sphi 0, %s439
    %s441 = sphi 0, %s439
    %s442 = sphi 0, %s441
    %s456 = sphi 0, %s442
    %s460 = sphi 0, %s460
    %s462 = sphi 0, %s460
    %s463 = sphi 0, %s462
    %s477 = sphi 0, %s463
    %s483 = sphi 0, %s485
    %s486 = sphi 0, %s483
    %s487 = sphi 0, %s486
    %s503 = sphi 0, %s487
  $region4: #{stacked_autoencoder_forward.1} parent=0 // loop_header_branch
    %30 = sbr.rel (%p28) target = $region8
  $region5: #{stacked_autoencoder_forward.1} parent=0 // loop_body
    %s32 = ssub.s32 %s27, 1
    %s33 = ssub.s32 %s27, 2
    %s34 = sadd.s32 %s27, 1
    %s35 = ssub.s32 %s27, %s34
    %p36 = scmp.eq.s32.totalorder %s35, 0
    %s38 = sadd.s32 %s37, 1
    %s39 = scalar_select %p36, %s37, %s38
    %p42 = pneg %p36
    %p43 = scmp.eq.s32.totalorder %s27, 1
    %p44 = por %p42, %p43
    %p45 = scmp.ne.s32.totalorder %s37, %s40
    %p46 = scmp.eq.s32.totalorder %s27, 0
    %p47 = por %p45, %p46
    %p48 = scmp.ne.s32.totalorder %s37, %s40
    %p49 = scmp.eq.s32.totalorder %s32, 1
    %p50 = por %p48, %p49
    %p51 = scmp.ne.s32.totalorder %s40, %s41
    %p52 = scmp.eq.s32.totalorder %s32, 0
    %p53 = por %p51, %p52
    %p54 = scmp.ne.s32.totalorder %s40, %s41
    %p55 = scmp.eq.s32.totalorder %s33, 1
    %p56 = por %p54, %p55
    %p58 = scmp.ne.s32.totalorder %s41, %s57
    %p59 = scmp.eq.s32.totalorder %s33, 0
    %p60 = por %p58, %p59
    %s62 = sadd.s32 %s61, 1
    %p65 = scmp.eq.s32.totalorder %s27, 1
    %p66 = scmp.ne.s32.totalorder %s61, %s63
    %p67 = scmp.eq.s32.totalorder %s27, 0
    %p68 = por %p66, %p67
    %p69 = scmp.ne.s32.totalorder %s61, %s63
    %p70 = scmp.eq.s32.totalorder %s32, 1
    %p71 = por %p69, %p70
    %p72 = scmp.ne.s32.totalorder %s63, %s64
    %p73 = scmp.eq.s32.totalorder %s32, 0
    %p74 = por %p72, %p73
    %p75 = scmp.ne.s32.totalorder %s63, %s64
    %p76 = scmp.eq.s32.totalorder %s33, 1
    %p77 = por %p75, %p76
    %p79 = scmp.ne.s32.totalorder %s64, %s78
    %p80 = scmp.eq.s32.totalorder %s33, 0
    %p81 = por %p79, %p80
    %s83 = sadd.s32 %s82, 1
    %p86 = scmp.eq.s32.totalorder %s27, 1
    %p87 = scmp.ne.s32.totalorder %s82, %s84
    %p88 = scmp.eq.s32.totalorder %s27, 0
    %p89 = por %p87, %p88
    %p90 = scmp.ne.s32.totalorder %s82, %s84
    %p91 = scmp.eq.s32.totalorder %s32, 1
    %p92 = por %p90, %p91
    %p93 = scmp.ne.s32.totalorder %s84, %s85
    %p94 = scmp.eq.s32.totalorder %s32, 0
    %p95 = por %p93, %p94
    %p96 = scmp.ne.s32.totalorder %s84, %s85
    %p97 = scmp.eq.s32.totalorder %s33, 1
    %p98 = por %p96, %p97
    %p100 = scmp.ne.s32.totalorder %s85, %s99
    %p101 = scmp.eq.s32.totalorder %s33, 0
    %p102 = por %p100, %p101
    %s104 = sadd.s32 %s103, 1
    %p107 = scmp.eq.s32.totalorder %s27, 1
    %p108 = scmp.ne.s32.totalorder %s103, %s105
    %p109 = scmp.eq.s32.totalorder %s27, 0
    %p110 = por %p108, %p109
    %p111 = scmp.ne.s32.totalorder %s103, %s105
    %p112 = scmp.eq.s32.totalorder %s32, 1
    %p113 = por %p111, %p112
    %p114 = scmp.ne.s32.totalorder %s105, %s106
    %p115 = scmp.eq.s32.totalorder %s32, 0
    %p116 = por %p114, %p115
    %p117 = scmp.ne.s32.totalorder %s105, %s106
    %p118 = scmp.eq.s32.totalorder %s33, 1
    %p119 = por %p117, %p118
    %p121 = scmp.ne.s32.totalorder %s106, %s120
    %p122 = scmp.eq.s32.totalorder %s33, 0
    %p123 = por %p121, %p122
    %s125 = sadd.s32 %s124, 1
    %p128 = scmp.eq.s32.totalorder %s27, 1
    %p129 = scmp.ne.s32.totalorder %s124, %s126
    %p130 = scmp.eq.s32.totalorder %s27, 0
    %p131 = por %p129, %p130
    %p132 = scmp.ne.s32.totalorder %s124, %s126
    %p133 = scmp.eq.s32.totalorder %s32, 1
    %p134 = por %p132, %p133
    %p135 = scmp.ne.s32.totalorder %s126, %s127
    %p136 = scmp.eq.s32.totalorder %s32, 0
    %p137 = por %p135, %p136
    %p138 = scmp.ne.s32.totalorder %s126, %s127
    %p139 = scmp.eq.s32.totalorder %s33, 1
    %p140 = por %p138, %p139
    %p142 = scmp.ne.s32.totalorder %s127, %s141
    %p143 = scmp.eq.s32.totalorder %s33, 0
    %p144 = por %p142, %p143
    %s146 = sadd.s32 %s145, 1
    %p149 = scmp.eq.s32.totalorder %s27, 1
    %p150 = scmp.ne.s32.totalorder %s145, %s147
    %p151 = scmp.eq.s32.totalorder %s27, 0
    %p152 = por %p150, %p151
    %p153 = scmp.ne.s32.totalorder %s145, %s147
    %p154 = scmp.eq.s32.totalorder %s32, 1
    %p155 = por %p153, %p154
    %p156 = scmp.ne.s32.totalorder %s147, %s148
    %p157 = scmp.eq.s32.totalorder %s32, 0
    %p158 = por %p156, %p157
    %p159 = scmp.ne.s32.totalorder %s147, %s148
    %p160 = scmp.eq.s32.totalorder %s33, 1
    %p161 = por %p159, %p160
    %p163 = scmp.ne.s32.totalorder %s148, %s162
    %p164 = scmp.eq.s32.totalorder %s33, 0
    %p165 = por %p163, %p164
    %s167 = sadd.s32 %s166, 1
    %p170 = scmp.eq.s32.totalorder %s27, 1
    %p171 = scmp.ne.s32.totalorder %s166, %s168
    %p172 = scmp.eq.s32.totalorder %s27, 0
    %p173 = por %p171, %p172
    %p174 = scmp.ne.s32.totalorder %s166, %s168
    %p175 = scmp.eq.s32.totalorder %s32, 1
    %p176 = por %p174, %p175
    %p177 = scmp.ne.s32.totalorder %s168, %s169
    %p178 = scmp.eq.s32.totalorder %s32, 0
    %p179 = por %p177, %p178
    %p180 = scmp.ne.s32.totalorder %s168, %s169
    %p181 = scmp.eq.s32.totalorder %s33, 1
    %p182 = por %p180, %p181
    %p184 = scmp.ne.s32.totalorder %s169, %s183
    %p185 = scmp.eq.s32.totalorder %s33, 0
    %p186 = por %p184, %p185
    %s188 = sadd.s32 %s187, 1
    %p191 = scmp.eq.s32.totalorder %s27, 1
    %p192 = scmp.ne.s32.totalorder %s187, %s189
    %p193 = scmp.eq.s32.totalorder %s27, 0
    %p194 = por %p192, %p193
    %p195 = scmp.ne.s32.totalorder %s187, %s189
    %p196 = scmp.eq.s32.totalorder %s32, 1
    %p197 = por %p195, %p196
    %p198 = scmp.ne.s32.totalorder %s189, %s190
    %p199 = scmp.eq.s32.totalorder %s32, 0
    %p200 = por %p198, %p199
    %p201 = scmp.ne.s32.totalorder %s189, %s190
    %p202 = scmp.eq.s32.totalorder %s33, 1
    %p203 = por %p201, %p202
    %p205 = scmp.ne.s32.totalorder %s190, %s204
    %p206 = scmp.eq.s32.totalorder %s33, 0
    %p207 = por %p205, %p206
    %s209 = sadd.s32 %s208, 1
    %p212 = scmp.eq.s32.totalorder %s27, 1
    %p213 = scmp.ne.s32.totalorder %s208, %s210
    %p214 = scmp.eq.s32.totalorder %s27, 0
    %p215 = por %p213, %p214
    %p216 = scmp.ne.s32.totalorder %s208, %s210
    %p217 = scmp.eq.s32.totalorder %s32, 1
    %p218 = por %p216, %p217
    %p219 = scmp.ne.s32.totalorder %s210, %s211
    %p220 = scmp.eq.s32.totalorder %s32, 0
    %p221 = por %p219, %p220
    %p222 = scmp.ne.s32.totalorder %s210, %s211
    %p223 = scmp.eq.s32.totalorder %s33, 1
    %p224 = por %p222, %p223
    %p226 = scmp.ne.s32.totalorder %s211, %s225
    %p227 = scmp.eq.s32.totalorder %s33, 0
    %p228 = por %p226, %p227
    %s230 = sadd.s32 %s229, 1
    %p233 = scmp.eq.s32.totalorder %s27, 1
    %p234 = scmp.ne.s32.totalorder %s229, %s231
    %p235 = scmp.eq.s32.totalorder %s27, 0
    %p236 = por %p234, %p235
    %p237 = scmp.ne.s32.totalorder %s229, %s231
    %p238 = scmp.eq.s32.totalorder %s32, 1
    %p239 = por %p237, %p238
    %p240 = scmp.ne.s32.totalorder %s231, %s232
    %p241 = scmp.eq.s32.totalorder %s32, 0
    %p242 = por %p240, %p241
    %p243 = scmp.ne.s32.totalorder %s231, %s232
    %p244 = scmp.eq.s32.totalorder %s33, 1
    %p245 = por %p243, %p244
    %p247 = scmp.ne.s32.totalorder %s232, %s246
    %p248 = scmp.eq.s32.totalorder %s33, 0
    %p249 = por %p247, %p248
    %s251 = sadd.s32 %s250, 1
    %p254 = scmp.eq.s32.totalorder %s27, 1
    %p255 = scmp.ne.s32.totalorder %s250, %s252
    %p256 = scmp.eq.s32.totalorder %s27, 0
    %p257 = por %p255, %p256
    %p258 = scmp.ne.s32.totalorder %s250, %s252
    %p259 = scmp.eq.s32.totalorder %s32, 1
    %p260 = por %p258, %p259
    %p261 = scmp.ne.s32.totalorder %s252, %s253
    %p262 = scmp.eq.s32.totalorder %s32, 0
    %p263 = por %p261, %p262
    %p264 = scmp.ne.s32.totalorder %s252, %s253
    %p265 = scmp.eq.s32.totalorder %s33, 1
    %p266 = por %p264, %p265
    %p268 = scmp.ne.s32.totalorder %s253, %s267
    %p269 = scmp.eq.s32.totalorder %s33, 0
    %p270 = por %p268, %p269
    %s272 = sadd.s32 %s271, 1
    %p275 = scmp.eq.s32.totalorder %s27, 1
    %p276 = scmp.ne.s32.totalorder %s271, %s273
    %p277 = scmp.eq.s32.totalorder %s27, 0
    %p278 = por %p276, %p277
    %p279 = scmp.ne.s32.totalorder %s271, %s273
    %p280 = scmp.eq.s32.totalorder %s32, 1
    %p281 = por %p279, %p280
    %p282 = scmp.ne.s32.totalorder %s273, %s274
    %p283 = scmp.eq.s32.totalorder %s32, 0
    %p284 = por %p282, %p283
    %p285 = scmp.ne.s32.totalorder %s273, %s274
    %p286 = scmp.eq.s32.totalorder %s33, 1
    %p287 = por %p285, %p286
    %p289 = scmp.ne.s32.totalorder %s274, %s288
    %p290 = scmp.eq.s32.totalorder %s33, 0
    %p291 = por %p289, %p290
    %s293 = sadd.s32 %s292, 1
    %p296 = scmp.eq.s32.totalorder %s27, 1
    %p297 = scmp.ne.s32.totalorder %s292, %s294
    %p298 = scmp.eq.s32.totalorder %s27, 0
    %p299 = por %p297, %p298
    %p300 = scmp.ne.s32.totalorder %s292, %s294
    %p301 = scmp.eq.s32.totalorder %s32, 1
    %p302 = por %p300, %p301
    %p303 = scmp.ne.s32.totalorder %s294, %s295
    %p304 = scmp.eq.s32.totalorder %s32, 0
    %p305 = por %p303, %p304
    %p306 = scmp.ne.s32.totalorder %s294, %s295
    %p307 = scmp.eq.s32.totalorder %s33, 1
    %p308 = por %p306, %p307
    %p310 = scmp.ne.s32.totalorder %s295, %s309
    %p311 = scmp.eq.s32.totalorder %s33, 0
    %p312 = por %p310, %p311
    %s314 = sadd.s32 %s313, 1
    %p317 = scmp.eq.s32.totalorder %s27, 1
    %p318 = scmp.ne.s32.totalorder %s313, %s315
    %p319 = scmp.eq.s32.totalorder %s27, 0
    %p320 = por %p318, %p319
    %p321 = scmp.ne.s32.totalorder %s313, %s315
    %p322 = scmp.eq.s32.totalorder %s32, 1
    %p323 = por %p321, %p322
    %p324 = scmp.ne.s32.totalorder %s315, %s316
    %p325 = scmp.eq.s32.totalorder %s32, 0
    %p326 = por %p324, %p325
    %p327 = scmp.ne.s32.totalorder %s315, %s316
    %p328 = scmp.eq.s32.totalorder %s33, 1
    %p329 = por %p327, %p328
    %p331 = scmp.ne.s32.totalorder %s316, %s330
    %p332 = scmp.eq.s32.totalorder %s33, 0
    %p333 = por %p331, %p332
    %s335 = sadd.s32 %s334, 1
    %p338 = scmp.eq.s32.totalorder %s27, 1
    %p339 = scmp.ne.s32.totalorder %s334, %s336
    %p340 = scmp.eq.s32.totalorder %s27, 0
    %p341 = por %p339, %p340
    %p342 = scmp.ne.s32.totalorder %s334, %s336
    %p343 = scmp.eq.s32.totalorder %s32, 1
    %p344 = por %p342, %p343
    %p345 = scmp.ne.s32.totalorder %s336, %s337
    %p346 = scmp.eq.s32.totalorder %s32, 0
    %p347 = por %p345, %p346
    %p348 = scmp.ne.s32.totalorder %s336, %s337
    %p349 = scmp.eq.s32.totalorder %s33, 1
    %p350 = por %p348, %p349
    %p352 = scmp.ne.s32.totalorder %s337, %s351
    %p353 = scmp.eq.s32.totalorder %s33, 0
    %p354 = por %p352, %p353
    %s356 = sadd.s32 %s355, 1
    %p359 = scmp.eq.s32.totalorder %s27, 1
    %p360 = scmp.ne.s32.totalorder %s355, %s357
    %p361 = scmp.eq.s32.totalorder %s27, 0
    %p362 = por %p360, %p361
    %p363 = scmp.ne.s32.totalorder %s355, %s357
    %p364 = scmp.eq.s32.totalorder %s32, 1
    %p365 = por %p363, %p364
    %p366 = scmp.ne.s32.totalorder %s357, %s358
    %p367 = scmp.eq.s32.totalorder %s32, 0
    %p368 = por %p366, %p367
    %p369 = scmp.ne.s32.totalorder %s357, %s358
    %p370 = scmp.eq.s32.totalorder %s33, 1
    %p371 = por %p369, %p370
    %p373 = scmp.ne.s32.totalorder %s358, %s372
    %p374 = scmp.eq.s32.totalorder %s33, 0
    %p375 = por %p373, %p374
    %s377 = sadd.s32 %s376, 1
    %p380 = scmp.eq.s32.totalorder %s27, 1
    %p381 = scmp.ne.s32.totalorder %s376, %s378
    %p382 = scmp.eq.s32.totalorder %s27, 0
    %p383 = por %p381, %p382
    %p384 = scmp.ne.s32.totalorder %s376, %s378
    %p385 = scmp.eq.s32.totalorder %s32, 1
    %p386 = por %p384, %p385
    %p387 = scmp.ne.s32.totalorder %s378, %s379
    %p388 = scmp.eq.s32.totalorder %s32, 0
    %p389 = por %p387, %p388
    %p390 = scmp.ne.s32.totalorder %s378, %s379
    %p391 = scmp.eq.s32.totalorder %s33, 1
    %p392 = por %p390, %p391
    %p394 = scmp.ne.s32.totalorder %s379, %s393
    %p395 = scmp.eq.s32.totalorder %s33, 0
    %p396 = por %p394, %p395
    %s398 = sadd.s32 %s397, 1
    %p401 = scmp.eq.s32.totalorder %s27, 1
    %p402 = scmp.ne.s32.totalorder %s397, %s399
    %p403 = scmp.eq.s32.totalorder %s27, 0
    %p404 = por %p402, %p403
    %p405 = scmp.ne.s32.totalorder %s397, %s399
    %p406 = scmp.eq.s32.totalorder %s32, 1
    %p407 = por %p405, %p406
    %p408 = scmp.ne.s32.totalorder %s399, %s400
    %p409 = scmp.eq.s32.totalorder %s32, 0
    %p410 = por %p408, %p409
    %p411 = scmp.ne.s32.totalorder %s399, %s400
    %p412 = scmp.eq.s32.totalorder %s33, 1
    %p413 = por %p411, %p412
    %p415 = scmp.ne.s32.totalorder %s400, %s414
    %p416 = scmp.eq.s32.totalorder %s33, 0
    %p417 = por %p415, %p416
    %s419 = sadd.s32 %s418, 1
    %p422 = scmp.eq.s32.totalorder %s27, 1
    %p423 = scmp.ne.s32.totalorder %s418, %s420
    %p424 = scmp.eq.s32.totalorder %s27, 0
    %p425 = por %p423, %p424
    %p426 = scmp.ne.s32.totalorder %s418, %s420
    %p427 = scmp.eq.s32.totalorder %s32, 1
    %p428 = por %p426, %p427
    %p429 = scmp.ne.s32.totalorder %s420, %s421
    %p430 = scmp.eq.s32.totalorder %s32, 0
    %p431 = por %p429, %p430
    %p432 = scmp.ne.s32.totalorder %s420, %s421
    %p433 = scmp.eq.s32.totalorder %s33, 1
    %p434 = por %p432, %p433
    %p436 = scmp.ne.s32.totalorder %s421, %s435
    %p437 = scmp.eq.s32.totalorder %s33, 0
    %p438 = por %p436, %p437
    %s440 = sadd.s32 %s439, 1
    %p443 = scmp.eq.s32.totalorder %s27, 1
    %p444 = scmp.ne.s32.totalorder %s439, %s441
    %p445 = scmp.eq.s32.totalorder %s27, 0
    %p446 = por %p444, %p445
    %p447 = scmp.ne.s32.totalorder %s439, %s441
    %p448 = scmp.eq.s32.totalorder %s32, 1
    %p449 = por %p447, %p448
    %p450 = scmp.ne.s32.totalorder %s441, %s442
    %p451 = scmp.eq.s32.totalorder %s32, 0
    %p452 = por %p450, %p451
    %p453 = scmp.ne.s32.totalorder %s441, %s442
    %p454 = scmp.eq.s32.totalorder %s33, 1
    %p455 = por %p453, %p454
    %p457 = scmp.ne.s32.totalorder %s442, %s456
    %p458 = scmp.eq.s32.totalorder %s33, 0
    %p459 = por %p457, %p458
    %s461 = sadd.s32 %s460, 1
    %p464 = scmp.eq.s32.totalorder %s27, 1
    %p465 = scmp.ne.s32.totalorder %s460, %s462
    %p466 = scmp.eq.s32.totalorder %s27, 0
    %p467 = por %p465, %p466
    %p468 = scmp.ne.s32.totalorder %s460, %s462
    %p469 = scmp.eq.s32.totalorder %s32, 1
    %p470 = por %p468, %p469
    %p471 = scmp.ne.s32.totalorder %s462, %s463
    %p472 = scmp.eq.s32.totalorder %s32, 0
    %p473 = por %p471, %p472
    %p474 = scmp.ne.s32.totalorder %s462, %s463
    %p475 = scmp.eq.s32.totalorder %s33, 1
    %p476 = por %p474, %p475
    %p478 = scmp.ne.s32.totalorder %s463, %s477
    %p479 = scmp.eq.s32.totalorder %s33, 0
    %p480 = por %p478, %p479
    %s481 = ssub.s32 %s27, %s34
    %p482 = scmp.eq.s32.totalorder %s481, 0
    %s484 = sadd.s32 %s483, 1
    %s485 = scalar_select %p482, %s483, %s484
    %p488 = pneg %p482
    %p489 = scmp.eq.s32.totalorder %s27, 1
    %p490 = por %p488, %p489
    %p491 = scmp.ne.s32.totalorder %s483, %s486
    %p492 = scmp.eq.s32.totalorder %s27, 0
    %p493 = por %p491, %p492
    %p494 = scmp.ne.s32.totalorder %s483, %s486
    %p495 = scmp.eq.s32.totalorder %s32, 1
    %p496 = por %p494, %p495
    %p497 = scmp.ne.s32.totalorder %s486, %s487
    %p498 = scmp.eq.s32.totalorder %s32, 0
    %p499 = por %p497, %p498
    %p500 = scmp.ne.s32.totalorder %s486, %s487
    %p501 = scmp.eq.s32.totalorder %s33, 1
    %p502 = por %p500, %p501
    %p504 = scmp.ne.s32.totalorder %s487, %s503
    %p505 = scmp.eq.s32.totalorder %s33, 0
    %p506 = por %p504, %p505
    %p507 = scmp.le.s32.totalorder 1, %s27
    %p508 = scmp.lt.s32.totalorder %s27, 3
    %p509 = pnand %p507, %p508
    %p510 = pneg %p509
    // Predicated region
    $region9: #{stacked_autoencoder_forward.1} parent=5 // pred_check
      _
    $region10: #{stacked_autoencoder_forward.1} parent=5 // pred_check_branch
      %512 = sbr.rel (%p509) target = $region12
    $region11: #{stacked_autoencoder_forward.1} parent=5 // pred_region
      %s513 = ssub.s32 %s27, 1
      // Predicated region
      $region13: #{stacked_autoencoder_forward.1} parent=11 // pred_check
        %p514 = pneg %p74
      $region14: #{stacked_autoencoder_forward.1} parent=11 // pred_check_branch
        %516 = sbr.rel (%p514) target = $region16
      $region15: #{stacked_autoencoder_forward.1} parent=11 // pred_region
        _
      $region16: #{stacked_autoencoder_forward.1} parent=11 // pred_fallthru
        _
      // Predicated region
      $region17: #{stacked_autoencoder_forward.1} parent=11 // pred_check
        %p517 = pneg %p95
      $region18: #{stacked_autoencoder_forward.1} parent=11 // pred_check_branch
        %519 = sbr.rel (%p517) target = $region20
      $region19: #{stacked_autoencoder_forward.1} parent=11 // pred_region
        _
      $region20: #{stacked_autoencoder_forward.1} parent=11 // pred_fallthru
        _
      // Predicated region
      $region21: #{stacked_autoencoder_forward.1} parent=11 // pred_check
        %p520 = pneg %p116
      $region22: #{stacked_autoencoder_forward.1} parent=11 // pred_check_branch
        %522 = sbr.rel (%p520) target = $region24
      $region23: #{stacked_autoencoder_forward.1} parent=11 // pred_region
        _
      $region24: #{stacked_autoencoder_forward.1} parent=11 // pred_fallthru
        _
      // Predicated region
      $region25: #{stacked_autoencoder_forward.1} parent=11 // pred_check
        %p523 = pneg %p137
      $region26: #{stacked_autoencoder_forward.1} parent=11 // pred_check_branch
        %525 = sbr.rel (%p523) target = $region28
      $region27: #{stacked_autoencoder_forward.1} parent=11 // pred_region
        _
      $region28: #{stacked_autoencoder_forward.1} parent=11 // pred_fallthru
        _
      // Predicated region
      $region29: #{stacked_autoencoder_forward.1} parent=11 // pred_check
        %p526 = pneg %p158
      $region30: #{stacked_autoencoder_forward.1} parent=11 // pred_check_branch
        %528 = sbr.rel (%p526) target = $region32
      $region31: #{stacked_autoencoder_forward.1} parent=11 // pred_region
        _
      $region32: #{stacked_autoencoder_forward.1} parent=11 // pred_fallthru
        _
      // Predicated region
      $region33: #{stacked_autoencoder_forward.1} parent=11 // pred_check
        %p529 = pneg %p179
      $region34: #{stacked_autoencoder_forward.1} parent=11 // pred_check_branch
        %531 = sbr.rel (%p529) target = $region36
      $region35: #{stacked_autoencoder_forward.1} parent=11 // pred_region
        _
      $region36: #{stacked_autoencoder_forward.1} parent=11 // pred_fallthru
        _
      // Predicated region
      $region37: #{stacked_autoencoder_forward.1} parent=11 // pred_check
        %p532 = pneg %p200
      $region38: #{stacked_autoencoder_forward.1} parent=11 // pred_check_branch
        %534 = sbr.rel (%p532) target = $region40
      $region39: #{stacked_autoencoder_forward.1} parent=11 // pred_region
        _
      $region40: #{stacked_autoencoder_forward.1} parent=11 // pred_fallthru
        _
      // Predicated region
      $region41: #{stacked_autoencoder_forward.1} parent=11 // pred_check
        %p535 = pneg %p221
      $region42: #{stacked_autoencoder_forward.1} parent=11 // pred_check_branch
        %537 = sbr.rel (%p535) target = $region44
      $region43: #{stacked_autoencoder_forward.1} parent=11 // pred_region
        _
      $region44: #{stacked_autoencoder_forward.1} parent=11 // pred_fallthru
        _
      // Predicated region
      $region45: #{stacked_autoencoder_forward.1} parent=11 // pred_check
        %p538 = pneg %p242
      $region46: #{stacked_autoencoder_forward.1} parent=11 // pred_check_branch
        %540 = sbr.rel (%p538) target = $region48
      $region47: #{stacked_autoencoder_forward.1} parent=11 // pred_region
        _
      $region48: #{stacked_autoencoder_forward.1} parent=11 // pred_fallthru
        _
      // Predicated region
      $region49: #{stacked_autoencoder_forward.1} parent=11 // pred_check
        %p541 = pneg %p263
      $region50: #{stacked_autoencoder_forward.1} parent=11 // pred_check_branch
        %543 = sbr.rel (%p541) target = $region52
      $region51: #{stacked_autoencoder_forward.1} parent=11 // pred_region
        _
      $region52: #{stacked_autoencoder_forward.1} parent=11 // pred_fallthru
        _
      // Predicated region
      $region53: #{stacked_autoencoder_forward.1} parent=11 // pred_check
        %p544 = pneg %p284
      $region54: #{stacked_autoencoder_forward.1} parent=11 // pred_check_branch
        %546 = sbr.rel (%p544) target = $region56
      $region55: #{stacked_autoencoder_forward.1} parent=11 // pred_region
        _
      $region56: #{stacked_autoencoder_forward.1} parent=11 // pred_fallthru
        _
      // Predicated region
      $region57: #{stacked_autoencoder_forward.1} parent=11 // pred_check
        %p547 = pneg %p305
      $region58: #{stacked_autoencoder_forward.1} parent=11 // pred_check_branch
        %549 = sbr.rel (%p547) target = $region60
      $region59: #{stacked_autoencoder_forward.1} parent=11 // pred_region
        _
      $region60: #{stacked_autoencoder_forward.1} parent=11 // pred_fallthru
        _
      // Predicated region
      $region61: #{stacked_autoencoder_forward.1} parent=11 // pred_check
        %p550 = pneg %p326
      $region62: #{stacked_autoencoder_forward.1} parent=11 // pred_check_branch
        %552 = sbr.rel (%p550) target = $region64
      $region63: #{stacked_autoencoder_forward.1} parent=11 // pred_region
        _
      $region64: #{stacked_autoencoder_forward.1} parent=11 // pred_fallthru
        _
      // Predicated region
      $region65: #{stacked_autoencoder_forward.1} parent=11 // pred_check
        %p553 = pneg %p347
      $region66: #{stacked_autoencoder_forward.1} parent=11 // pred_check_branch
        %555 = sbr.rel (%p553) target = $region68
      $region67: #{stacked_autoencoder_forward.1} parent=11 // pred_region
        _
      $region68: #{stacked_autoencoder_forward.1} parent=11 // pred_fallthru
        _
      // Predicated region
      $region69: #{stacked_autoencoder_forward.1} parent=11 // pred_check
        %p556 = pneg %p368
      $region70: #{stacked_autoencoder_forward.1} parent=11 // pred_check_branch
        %558 = sbr.rel (%p556) target = $region72
      $region71: #{stacked_autoencoder_forward.1} parent=11 // pred_region
        _
      $region72: #{stacked_autoencoder_forward.1} parent=11 // pred_fallthru
        _
      // Predicated region
      $region73: #{stacked_autoencoder_forward.1} parent=11 // pred_check
        %p559 = pneg %p389
      $region74: #{stacked_autoencoder_forward.1} parent=11 // pred_check_branch
        %561 = sbr.rel (%p559) target = $region76
      $region75: #{stacked_autoencoder_forward.1} parent=11 // pred_region
        _
      $region76: #{stacked_autoencoder_forward.1} parent=11 // pred_fallthru
        _
      // Predicated region
      $region77: #{stacked_autoencoder_forward.1} parent=11 // pred_check
        %p562 = pneg %p410
      $region78: #{stacked_autoencoder_forward.1} parent=11 // pred_check_branch
        %564 = sbr.rel (%p562) target = $region80
      $region79: #{stacked_autoencoder_forward.1} parent=11 // pred_region
        _
      $region80: #{stacked_autoencoder_forward.1} parent=11 // pred_fallthru
        _
      // Predicated region
      $region81: #{stacked_autoencoder_forward.1} parent=11 // pred_check
        %p565 = pneg %p431
      $region82: #{stacked_autoencoder_forward.1} parent=11 // pred_check_branch
        %567 = sbr.rel (%p565) target = $region84
      $region83: #{stacked_autoencoder_forward.1} parent=11 // pred_region
        _
      $region84: #{stacked_autoencoder_forward.1} parent=11 // pred_fallthru
        _
      // Predicated region
      $region85: #{stacked_autoencoder_forward.1} parent=11 // pred_check
        %p568 = pneg %p452
      $region86: #{stacked_autoencoder_forward.1} parent=11 // pred_check_branch
        %570 = sbr.rel (%p568) target = $region88
      $region87: #{stacked_autoencoder_forward.1} parent=11 // pred_region
        _
      $region88: #{stacked_autoencoder_forward.1} parent=11 // pred_fallthru
        _
      // Predicated region
      $region89: #{stacked_autoencoder_forward.1} parent=11 // pred_check
        %p571 = pneg %p473
      $region90: #{stacked_autoencoder_forward.1} parent=11 // pred_check_branch
        %573 = sbr.rel (%p571) target = $region92
      $region91: #{stacked_autoencoder_forward.1} parent=11 // pred_region
        _
      $region92: #{stacked_autoencoder_forward.1} parent=11 // pred_fallthru
        _
    $region12: #{stacked_autoencoder_forward.1} parent=5 // pred_fallthru
      _
    %p574 = scmp.lt.s32.totalorder %s27, 2
    // Predicated region
    $region93: #{stacked_autoencoder_forward.1} parent=5 // pred_check
      %p575 = pneg %p574
    $region94: #{stacked_autoencoder_forward.1} parent=5 // pred_check_branch
      %577 = sbr.rel (%p575) target = $region96
    $region95: #{stacked_autoencoder_forward.1} parent=5 // pred_region
      // Predicated region
      $region97: #{stacked_autoencoder_forward.1} parent=95 // pred_check
        %p578 = pneg %p47
      $region98: #{stacked_autoencoder_forward.1} parent=95 // pred_check_branch
        %580 = sbr.rel (%p578) target = $region100
      $region99: #{stacked_autoencoder_forward.1} parent=95 // pred_region
        %s581 = smul.u32 32, %s27
        %p582 = scmp.lt.s32.totalorder %s581, 63
        %s583 = scalar_select %p582, %s581, 63
        %s584 = smul.addr %s583, 8
        %s585 = scalar_lea.vmem %s0, %s584
        %s586 = smul.u32 32, %s27
      $region100: #{stacked_autoencoder_forward.1} parent=95 // pred_fallthru
        _
    $region96: #{stacked_autoencoder_forward.1} parent=5 // pred_fallthru
      _
    %p587 = scmp.le.s32.totalorder 1, %s27
    %p588 = scmp.lt.s32.totalorder %s27, 3
    %p589 = pnand %p587, %p588
    %p590 = pneg %p589
    // Predicated region
    $region101: #{stacked_autoencoder_forward.1} parent=5 // pred_check
      _
    $region102: #{stacked_autoencoder_forward.1} parent=5 // pred_check_branch
      %592 = sbr.rel (%p589) target = $region104
    $region103: #{stacked_autoencoder_forward.1} parent=5 // pred_region
      %s593 = ssub.s32 %s27, 1
      %s594 = smul.u32 32, %s32
      %p595 = scmp.lt.s32.totalorder %s594, 63
      %s596 = scalar_select %p595, %s594, 63
      %s597 = smul.addr %s596, 8
      %s598 = scalar_lea.vmem %s0, %s597
      %p599 = pneg %p53
      %p600 = pneg %p50
      %p601 = pneg %p74
      %p602 = pneg %p71
      %p603 = pneg %p95
      %p604 = pneg %p92
      %p605 = pneg %p116
      %p606 = pneg %p113
      %p607 = pneg %p137
      %p608 = pneg %p134
      %p609 = pneg %p158
      %p610 = pneg %p155
      %p611 = pneg %p179
      %p612 = pneg %p176
      %p613 = pneg %p200
      %p614 = pneg %p197
      %p615 = pneg %p221
      %p616 = pneg %p218
      %p617 = pneg %p242
      %p618 = pneg %p239
      %p619 = pneg %p263
      %p620 = pneg %p260
      %p621 = pneg %p284
      %p622 = pneg %p281
      %p623 = pneg %p305
      %p624 = pneg %p302
      %p625 = pneg %p326
      %p626 = pneg %p323
      %p627 = pneg %p347
      %p628 = pneg %p344
      %p629 = pneg %p368
      %p630 = pneg %p365
      %p631 = pneg %p389
      %p632 = pneg %p386
      %p633 = pneg %p410
      %p634 = pneg %p407
      %p635 = pneg %p431
      %p636 = pneg %p428
      %p637 = pneg %p452
      %p638 = pneg %p449
      %p639 = pneg %p473
      %p640 = pneg %p470
      %p641 = pneg %p499
      %p642 = pneg %p496
      %s643 = smul.u32 32, %s32
      %p644 = scmp.lt.s32.totalorder %s643, 63
      %s645 = scalar_select %p644, %s643, 63
      %s646 = smul.addr %s645, 8
      %s647 = scalar_lea.vmem %s21, %s646
      %s648 = smul.u32 32, %s32
      %p649 = scmp.lt.s32.totalorder %s648, 63
      %s650 = scalar_select %p649, %s648, 63
      %s651 = smul.addr %s650, 8
      %s652 = scalar_lea.vmem %s0, %s651
      %s653 = smul.u32 32, %s32
      %s654 = smul.u32 32, %s32
      %p655 = scmp.lt.s32.totalorder %s654, 63
      %s656 = scalar_select %p655, %s654, 63
      %s657 = smul.addr %s656, 8
      %s658 = scalar_lea.vmem %s21, %s657
      %s659 = smul.u32 32, %s32
      %v661 = vld [vmem:[%s652] sm:$0xff]
      %v662 = vld [vmem:[%s652 + $0x8] sm:$0xff]
      %v663 = vld [vmem:[%s652 + $0x10] sm:$0xff]
      %v664 = vld [vmem:[%s652 + $0x18] sm:$0xff]
      %v665 = vld [vmem:[%s652 + $0x20] sm:$0xff]
      %v666 = vld [vmem:[%s652 + $0x28] sm:$0xff]
      %v667 = vld [vmem:[%s652 + $0x30] sm:$0xff]
      %v668 = vld [vmem:[%s652 + $0x38] sm:$0xff]
      %v669 = vld [vmem:[%s652 + $0x40] sm:$0xff]
      %v670 = vld [vmem:[%s652 + $0x48] sm:$0xff]
      %v671 = vld [vmem:[%s652 + $0x50] sm:$0xff]
      %v672 = vld [vmem:[%s652 + $0x58] sm:$0xff]
      %v673 = vld [vmem:[%s652 + $0x60] sm:$0xff]
      %v674 = vld [vmem:[%s652 + $0x68] sm:$0xff]
      %v675 = vld [vmem:[%s652 + $0x70] sm:$0xff]
      %v676 = vld [vmem:[%s652 + $0x78] sm:$0xff]
      %v677 = vld [vmem:[%s652 + $0x80] sm:$0xff]
      %v678 = vld [vmem:[%s652 + $0x88] sm:$0xff]
      %v679 = vld [vmem:[%s652 + $0x90] sm:$0xff]
      %v680 = vld [vmem:[%s652 + $0x98] sm:$0xff]
      %v681 = vld [vmem:[%s652 + $0xa0] sm:$0xff]
      %v682 = vld [vmem:[%s652 + $0xa8] sm:$0xff]
      %v683 = vld [vmem:[%s652 + $0xb0] sm:$0xff]
      %v684 = vld [vmem:[%s652 + $0xb8] sm:$0xff]
      %v685 = vld [vmem:[%s652 + $0xc0] sm:$0xff]
      %v686 = vld [vmem:[%s652 + $0xc8] sm:$0xff]
      %v687 = vld [vmem:[%s652 + $0xd0] sm:$0xff]
      %v688 = vld [vmem:[%s652 + $0xd8] sm:$0xff]
      %v689 = vld [vmem:[%s652 + $0xe0] sm:$0xff]
      %v690 = vld [vmem:[%s652 + $0xe8] sm:$0xff]
      %v691 = vld [vmem:[%s652 + $0xf0] sm:$0xff]
      %v692 = vld [vmem:[%s652 + $0xf8] sm:$0xff]
      %v693 = vld [vmem:[%s1] sm:$0xf]
      %v694 = vld [vmem:[%s1 + $0x4] sm:$0xf]
      %v695 = vld [vmem:[%s1 + $0x8] sm:$0xf]
      %v696 = vld [vmem:[%s1 + $0xc] sm:$0xf]
      %v697 = vld [vmem:[%s2] sm:$0x1]
      %v698 = vpack.c.bf16 %v662, %v661
      %v699 = vpack.c.bf16 %v664, %v663
      %v700 = vpack.c.bf16 %v666, %v665
      %v701 = vpack.c.bf16 %v668, %v667
      %v702 = vpack.c.bf16 %v670, %v669
      %v703 = vpack.c.bf16 %v672, %v671
      %v704 = vpack.c.bf16 %v674, %v673
      %v705 = vpack.c.bf16 %v676, %v675
      %v706 = vpack.c.bf16 %v678, %v677
      %v707 = vpack.c.bf16 %v680, %v679
      %v708 = vpack.c.bf16 %v682, %v681
      %v709 = vpack.c.bf16 %v684, %v683
      %v710 = vpack.c.bf16 %v686, %v685
      %v711 = vpack.c.bf16 %v688, %v687
      %v712 = vpack.c.bf16 %v690, %v689
      %v713 = vpack.c.bf16 %v692, %v691
      %v715 = vlaneseq
      %v716 = vshrl.u32 %v715, 7
      %v717 = vsub.s32 0, %v716
      %v718 = vrot.slane %v697, %v717
      %v724 = vunpack.c.l.b16 %v693
      %v725 = vunpack.c.l.b16 %v694
      %v726 = vunpack.c.l.b16 %v695
      %v727 = vunpack.c.l.b16 %v696
      %v728 = vpack.c.b16 %v725, %v724
      %v729 = vpack.c.b16 %v727, %v726
      %vm732 = vcmask 261120
      %v734 = vsel %vm732, %v698, 0
      %v737 = vsel %vm732, %v699, 0
      %v740 = vsel %vm732, %v700, 0
      %v743 = vsel %vm732, %v701, 0
      %v746 = vsel %vm732, %v702, 0
      %v749 = vsel %vm732, %v703, 0
      %v752 = vsel %vm732, %v704, 0
      %v755 = vsel %vm732, %v705, 0
      %v758 = vsel %vm732, %v706, 0
      %v761 = vsel %vm732, %v707, 0
      %v764 = vsel %vm732, %v708, 0
      %v767 = vsel %vm732, %v709, 0
      %v770 = vsel %vm732, %v710, 0
      %v773 = vsel %vm732, %v711, 0
      %v776 = vsel %vm732, %v712, 0
      %v779 = vsel %vm732, %v713, 0
      %781 = vmatprep.subr.bf16.mxu0 0
      %782 = vmatpush1.bf16.msra.mxu0 %v728
      %783 = vmatprep.subr.bf16.mxu0 0
      %784 = vmatpush1.bf16.msra.mxu0 %v729
      %785 = vmatprep.subr.bf16.mxu0 0
      %786 = vmatpush1.bf16.msra.mxu0 0
      %787 = vmatprep.subr.bf16.mxu0 0
      %788 = vmatpush1.bf16.msra.mxu0 0
      %789 = vmatprep.subr.bf16.mxu0 0
      %790 = vmatpush1.bf16.msra.mxu0 0
      %791 = vmatprep.subr.bf16.mxu0 0
      %792 = vmatpush1.bf16.msra.mxu0 0
      %793 = vmatprep.subr.bf16.mxu0 0
      %794 = vmatpush1.bf16.msra.mxu0 0
      %795 = vmatprep.subr.bf16.mxu0 0
      %796 = vmatpush1.bf16.msra.mxu0 0
      %797 = vmatprep.subr.bf16.mxu0 0
      %798 = vmatpush1.bf16.msra.mxu0 0
      %799 = vmatprep.subr.bf16.mxu0 0
      %800 = vmatpush1.bf16.msra.mxu0 0
      %801 = vmatprep.subr.bf16.mxu0 0
      %802 = vmatpush1.bf16.msra.mxu0 0
      %803 = vmatprep.subr.bf16.mxu0 0
      %804 = vmatpush1.bf16.msra.mxu0 0
      %805 = vmatprep.subr.bf16.mxu0 0
      %806 = vmatpush1.bf16.msra.mxu0 0
      %807 = vmatprep.subr.bf16.mxu0 0
      %808 = vmatpush1.bf16.msra.mxu0 0
      %809 = vmatprep.subr.bf16.mxu0 0
      %810 = vmatpush1.bf16.msra.mxu0 0
      %811 = vmatprep.subr.bf16.mxu0 0
      %812 = vmatpush1.bf16.msra.mxu0 0
      %813 = vmatprep.mubr.bf16.mxu0 0
      %814 = vmatmul.mubr.bf16.gmra.mrb[0].mxu0 %v734
      %v815 = vpop.f32.mrb[0].mxu0
      %v816 = vadd.f32 %v718, %v815
      %v817 = vpop.f32.mrb[0].mxu0
      %v818 = vpop.f32.mrb[0].mxu0
      %v819 = vadd.f32 %v718, %v818
      %v820 = vpop.f32.mrb[0].mxu0
      %821 = vmatprep.mubr.bf16.mxu0 0
      %822 = vmatmul.mubr.bf16.gmra.mrb[0].mxu0 %v737
      %v823 = vpop.f32.mrb[0].mxu0
      %v824 = vadd.f32 %v718, %v823
      %v825 = vpop.f32.mrb[0].mxu0
      %v826 = vpop.f32.mrb[0].mxu0
      %v827 = vadd.f32 %v718, %v826
      %v828 = vpop.f32.mrb[0].mxu0
      %829 = vmatprep.mubr.bf16.mxu0 0
      %830 = vmatmul.mubr.bf16.gmra.mrb[0].mxu0 %v740
      %v831 = vpop.f32.mrb[0].mxu0
      %v832 = vadd.f32 %v718, %v831
      %v833 = vpop.f32.mrb[0].mxu0
      %v834 = vpop.f32.mrb[0].mxu0
      %v835 = vadd.f32 %v718, %v834
      %v836 = vpop.f32.mrb[0].mxu0
      %837 = vmatprep.mubr.bf16.mxu0 0
      %838 = vmatmul.mubr.bf16.gmra.mrb[0].mxu0 %v743
      %v839 = vpop.f32.mrb[0].mxu0
      %v840 = vadd.f32 %v718, %v839
      %v841 = vpop.f32.mrb[0].mxu0
      %v842 = vpop.f32.mrb[0].mxu0
      %v843 = vadd.f32 %v718, %v842
      %v844 = vpop.f32.mrb[0].mxu0
      %845 = vmatprep.mubr.bf16.mxu0 0
      %846 = vmatmul.mubr.bf16.gmra.mrb[0].mxu0 %v746
      %v847 = vpop.f32.mrb[0].mxu0
      %v848 = vadd.f32 %v718, %v847
      %v849 = vpop.f32.mrb[0].mxu0
      %v850 = vpop.f32.mrb[0].mxu0
      %v851 = vadd.f32 %v718, %v850
      %v852 = vpop.f32.mrb[0].mxu0
      %853 = vmatprep.mubr.bf16.mxu0 0
      %854 = vmatmul.mubr.bf16.gmra.mrb[0].mxu0 %v749
      %v855 = vpop.f32.mrb[0].mxu0
      %v856 = vadd.f32 %v718, %v855
      %v857 = vpop.f32.mrb[0].mxu0
      %v858 = vpop.f32.mrb[0].mxu0
      %v859 = vadd.f32 %v718, %v858
      %v860 = vpop.f32.mrb[0].mxu0
      %861 = vmatprep.mubr.bf16.mxu0 0
      %862 = vmatmul.mubr.bf16.gmra.mrb[0].mxu0 %v752
      %v863 = vpop.f32.mrb[0].mxu0
      %v864 = vadd.f32 %v718, %v863
      %v865 = vpop.f32.mrb[0].mxu0
      %v866 = vpop.f32.mrb[0].mxu0
      %v867 = vadd.f32 %v718, %v866
      %v868 = vpop.f32.mrb[0].mxu0
      %869 = vmatprep.mubr.bf16.mxu0 0
      %870 = vmatmul.mubr.bf16.gmra.mrb[0].mxu0 %v755
      %v871 = vpop.f32.mrb[0].mxu0
      %v872 = vadd.f32 %v718, %v871
      %v873 = vpop.f32.mrb[0].mxu0
      %v874 = vpop.f32.mrb[0].mxu0
      %v875 = vadd.f32 %v718, %v874
      %v876 = vpop.f32.mrb[0].mxu0
      %877 = vmatprep.mubr.bf16.mxu0 0
      %878 = vmatmul.mubr.bf16.gmra.mrb[0].mxu0 %v758
      %v879 = vpop.f32.mrb[0].mxu0
      %v880 = vadd.f32 %v718, %v879
      %v881 = vpop.f32.mrb[0].mxu0
      %v882 = vpop.f32.mrb[0].mxu0
      %v883 = vadd.f32 %v718, %v882
      %v884 = vpop.f32.mrb[0].mxu0
      %885 = vmatprep.mubr.bf16.mxu0 0
      %886 = vmatmul.mubr.bf16.gmra.mrb[0].mxu0 %v761
      %v887 = vpop.f32.mrb[0].mxu0
      %v888 = vadd.f32 %v718, %v887
      %v889 = vpop.f32.mrb[0].mxu0
      %v890 = vpop.f32.mrb[0].mxu0
      %v891 = vadd.f32 %v718, %v890
      %v892 = vpop.f32.mrb[0].mxu0
      %893 = vmatprep.mubr.bf16.mxu0 0
      %894 = vmatmul.mubr.bf16.gmra.mrb[0].mxu0 %v764
      %v895 = vpop.f32.mrb[0].mxu0
      %v896 = vadd.f32 %v718, %v895
      %v897 = vpop.f32.mrb[0].mxu0
      %v898 = vpop.f32.mrb[0].mxu0
      %v899 = vadd.f32 %v718, %v898
      %v900 = vpop.f32.mrb[0].mxu0
      %901 = vmatprep.mubr.bf16.mxu0 0
      %902 = vmatmul.mubr.bf16.gmra.mrb[0].mxu0 %v767
      %v903 = vpop.f32.mrb[0].mxu0
      %v904 = vadd.f32 %v718, %v903
      %v905 = vpop.f32.mrb[0].mxu0
      %v906 = vpop.f32.mrb[0].mxu0
      %v907 = vadd.f32 %v718, %v906
      %v908 = vpop.f32.mrb[0].mxu0
      %909 = vmatprep.mubr.bf16.mxu0 0
      %910 = vmatmul.mubr.bf16.gmra.mrb[0].mxu0 %v770
      %v911 = vpop.f32.mrb[0].mxu0
      %v912 = vadd.f32 %v718, %v911
      %v913 = vpop.f32.mrb[0].mxu0
      %v914 = vpop.f32.mrb[0].mxu0
      %v915 = vadd.f32 %v718, %v914
      %v916 = vpop.f32.mrb[0].mxu0
      %917 = vmatprep.mubr.bf16.mxu0 0
      %918 = vmatmul.mubr.bf16.gmra.mrb[0].mxu0 %v773
      %v919 = vpop.f32.mrb[0].mxu0
      %v920 = vadd.f32 %v718, %v919
      %v921 = vpop.f32.mrb[0].mxu0
      %v922 = vpop.f32.mrb[0].mxu0
      %v923 = vadd.f32 %v718, %v922
      %v924 = vpop.f32.mrb[0].mxu0
      %925 = vmatprep.mubr.bf16.mxu0 0
      %926 = vmatmul.mubr.bf16.gmra.mrb[0].mxu0 %v776
      %v927 = vpop.f32.mrb[0].mxu0
      %v928 = vadd.f32 %v718, %v927
      %v929 = vpop.f32.mrb[0].mxu0
      %v930 = vpop.f32.mrb[0].mxu0
      %v931 = vadd.f32 %v718, %v930
      %v932 = vpop.f32.mrb[0].mxu0
      %933 = vmatprep.mubr.bf16.mxu0 0
      %934 = vmatmul.mubr.bf16.gmra.mrb[0].mxu0 %v779
      %v935 = vpop.f32.mrb[0].mxu0
      %v936 = vadd.f32 %v718, %v935
      %v937 = vpop.f32.mrb[0].mxu0
      %v938 = vpop.f32.mrb[0].mxu0
      %v939 = vadd.f32 %v718, %v938
      %v940 = vpop.f32.mrb[0].mxu0
      %941 = vdwg.mxu0
      %v942 = vmax.f32 %v816, 0.0
      %v943 = vmax.f32 %v819, 0.0
      %v944 = vmax.f32 %v824, 0.0
      %v945 = vmax.f32 %v827, 0.0
      %v946 = vmax.f32 %v832, 0.0
      %v947 = vmax.f32 %v835, 0.0
      %v948 = vmax.f32 %v840, 0.0
      %v949 = vmax.f32 %v843, 0.0
      %v950 = vmax.f32 %v848, 0.0
      %v951 = vmax.f32 %v851, 0.0
      %v952 = vmax.f32 %v856, 0.0
      %v953 = vmax.f32 %v859, 0.0
      %v954 = vmax.f32 %v864, 0.0
      %v955 = vmax.f32 %v867, 0.0
      %v956 = vmax.f32 %v872, 0.0
      %v957 = vmax.f32 %v875, 0.0
      %v958 = vmax.f32 %v880, 0.0
      %v959 = vmax.f32 %v883, 0.0
      %v960 = vmax.f32 %v888, 0.0
      %v961 = vmax.f32 %v891, 0.0
      %v962 = vmax.f32 %v896, 0.0
      %v963 = vmax.f32 %v899, 0.0
      %v964 = vmax.f32 %v904, 0.0
      %v965 = vmax.f32 %v907, 0.0
      %v966 = vmax.f32 %v912, 0.0
      %v967 = vmax.f32 %v915, 0.0
      %v968 = vmax.f32 %v920, 0.0
      %v969 = vmax.f32 %v923, 0.0
      %v970 = vmax.f32 %v928, 0.0
      %v971 = vmax.f32 %v931, 0.0
      %v972 = vmax.f32 %v936, 0.0
      %v973 = vmax.f32 %v939, 0.0
      %v974 = vld [vmem:[%s3] sm:$0xf]
      %v975 = vld [vmem:[%s3 + $0x4] sm:$0xf]
      %v976 = vld [vmem:[%s3 + $0x8] sm:$0xf]
      %v977 = vld [vmem:[%s3 + $0xc] sm:$0xf]
      %v978 = vld [vmem:[%s3 + $0x10] sm:$0xf]
      %v979 = vld [vmem:[%s3 + $0x14] sm:$0xf]
      %v980 = vld [vmem:[%s3 + $0x18] sm:$0xf]
      %v981 = vld [vmem:[%s3 + $0x1c] sm:$0xf]
      %v982 = vld [vmem:[%s4] sm:$0x1]
      %v983 = vpack.c.bf16 %v943, %v942
      %v984 = vpack.c.bf16 %v945, %v944
      %v985 = vpack.c.bf16 %v947, %v946
      %v986 = vpack.c.bf16 %v949, %v948
      %v987 = vpack.c.bf16 %v951, %v950
      %v988 = vpack.c.bf16 %v953, %v952
      %v989 = vpack.c.bf16 %v955, %v954
      %v990 = vpack.c.bf16 %v957, %v956
      %v991 = vpack.c.bf16 %v959, %v958
      %v992 = vpack.c.bf16 %v961, %v960
      %v993 = vpack.c.bf16 %v963, %v962
      %v994 = vpack.c.bf16 %v965, %v964
      %v995 = vpack.c.bf16 %v967, %v966
      %v996 = vpack.c.bf16 %v969, %v968
      %v997 = vpack.c.bf16 %v971, %v970
      %v998 = vpack.c.bf16 %v973, %v972
      %v1000 = vlaneseq
      %v1001 = vshrl.u32 %v1000, 7
      %v1002 = vsub.s32 0, %v1001
      %v1003 = vrot.slane %v982, %v1002
      %v1013 = vunpack.c.l.b16 %v974
      %v1014 = vunpack.c.l.b16 %v975
      %v1015 = vunpack.c.l.b16 %v976
      %v1016 = vunpack.c.l.b16 %v977
      %v1017 = vunpack.c.l.b16 %v978
      %v1018 = vunpack.c.l.b16 %v979
      %v1019 = vunpack.c.l.b16 %v980
      %v1020 = vunpack.c.l.b16 %v981
      %v1021 = vpack.c.b16 %v1014, %v1013
      %v1022 = vpack.c.b16 %v1016, %v1015
      %v1023 = vpack.c.b16 %v1018, %v1017
      %v1024 = vpack.c.b16 %v1020, %v1019
      %vm1029 = vcmask 523264
      %v1031 = vsel %vm1029, %v983, 0
      %v1034 = vsel %vm1029, %v984, 0
      %v1037 = vsel %vm1029, %v985, 0
      %v1040 = vsel %vm1029, %v986, 0
      %v1043 = vsel %vm1029, %v987, 0
      %v1046 = vsel %vm1029, %v988, 0
      %v1049 = vsel %vm1029, %v989, 0
      %v1052 = vsel %vm1029, %v990, 0
      %v1055 = vsel %vm1029, %v991, 0
      %v1058 = vsel %vm1029, %v992, 0
      %v1061 = vsel %vm1029, %v993, 0
      %v1064 = vsel %vm1029, %v994, 0
      %v1067 = vsel %vm1029, %v995, 0
      %v1070 = vsel %vm1029, %v996, 0
      %v1073 = vsel %vm1029, %v997, 0
      %v1076 = vsel %vm1029, %v998, 0
      %1078 = vmatprep.subr.bf16.mxu0 0
      %1079 = vmatpush1.bf16.msra.mxu0 %v1021
      %1080 = vmatprep.subr.bf16.mxu0 0
      %1081 = vmatpush1.bf16.msra.mxu0 %v1022
      %1082 = vmatprep.subr.bf16.mxu0 0
      %1083 = vmatpush1.bf16.msra.mxu0 %v1023
      %1084 = vmatprep.subr.bf16.mxu0 0
      %1085 = vmatpush1.bf16.msra.mxu0 %v1024
      %1086 = vmatprep.subr.bf16.mxu0 0
      %1087 = vmatpush1.bf16.msra.mxu0 0
      %1088 = vmatprep.subr.bf16.mxu0 0
      %1089 = vmatpush1.bf16.msra.mxu0 0
      %1090 = vmatprep.subr.bf16.mxu0 0
      %1091 = vmatpush1.bf16.msra.mxu0 0
      %1092 = vmatprep.subr.bf16.mxu0 0
      %1093 = vmatpush1.bf16.msra.mxu0 0
      %1094 = vmatprep.subr.bf16.mxu0 0
      %1095 = vmatpush1.bf16.msra.mxu0 0
      %1096 = vmatprep.subr.bf16.mxu0 0
      %1097 = vmatpush1.bf16.msra.mxu0 0
      %1098 = vmatprep.subr.bf16.mxu0 0
      %1099 = vmatpush1.bf16.msra.mxu0 0
      %1100 = vmatprep.subr.bf16.mxu0 0
      %1101 = vmatpush1.bf16.msra.mxu0 0
      %1102 = vmatprep.subr.bf16.mxu0 0
      %1103 = vmatpush1.bf16.msra.mxu0 0
      %1104 = vmatprep.subr.bf16.mxu0 0
      %1105 = vmatpush1.bf16.msra.mxu0 0
      %1106 = vmatprep.subr.bf16.mxu0 0
      %1107 = vmatpush1.bf16.msra.mxu0 0
      %1108 = vmatprep.subr.bf16.mxu0 0
      %1109 = vmatpush1.bf16.msra.mxu0 0
      %1110 = vmatprep.mubr.bf16.mxu0 0
      %1111 = vmatmul.mubr.bf16.gmra.mrb[0].mxu0 %v1031
      %v1112 = vpop.f32.mrb[0].mxu0
      %v1113 = vadd.f32 %v1003, %v1112
      %v1114 = vpop.f32.mrb[0].mxu0
      %v1115 = vpop.f32.mrb[0].mxu0
      %v1116 = vadd.f32 %v1003, %v1115
      %v1117 = vpop.f32.mrb[0].mxu0
      %1118 = vmatprep.mubr.bf16.mxu0 0
      %1119 = vmatmul.mubr.bf16.gmra.mrb[0].mxu0 %v1034
      %v1120 = vpop.f32.mrb[0].mxu0
      %v1121 = vadd.f32 %v1003, %v1120
      %v1122 = vpop.f32.mrb[0].mxu0
      %v1123 = vpop.f32.mrb[0].mxu0
      %v1124 = vadd.f32 %v1003, %v1123
      %v1125 = vpop.f32.mrb[0].mxu0
      %1126 = vmatprep.mubr.bf16.mxu0 0
      %1127 = vmatmul.mubr.bf16.gmra.mrb[0].mxu0 %v1037
      %v1128 = vpop.f32.mrb[0].mxu0
      %v1129 = vadd.f32 %v1003, %v1128
      %v1130 = vpop.f32.mrb[0].mxu0
      %v1131 = vpop.f32.mrb[0].mxu0
      %v1132 = vadd.f32 %v1003, %v1131
      %v1133 = vpop.f32.mrb[0].mxu0
      %1134 = vmatprep.mubr.bf16.mxu0 0
      %1135 = vmatmul.mubr.bf16.gmra.mrb[0].mxu0 %v1040
      %v1136 = vpop.f32.mrb[0].mxu0
      %v1137 = vadd.f32 %v1003, %v1136
      %v1138 = vpop.f32.mrb[0].mxu0
      %v1139 = vpop.f32.mrb[0].mxu0
      %v1140 = vadd.f32 %v1003, %v1139
      %v1141 = vpop.f32.mrb[0].mxu0
      %1142 = vmatprep.mubr.bf16.mxu0 0
      %1143 = vmatmul.mubr.bf16.gmra.mrb[0].mxu0 %v1043
      %v1144 = vpop.f32.mrb[0].mxu0
      %v1145 = vadd.f32 %v1003, %v1144
      %v1146 = vpop.f32.mrb[0].mxu0
      %v1147 = vpop.f32.mrb[0].mxu0
      %v1148 = vadd.f32 %v1003, %v1147
      %v1149 = vpop.f32.mrb[0].mxu0
      %1150 = vmatprep.mubr.bf16.mxu0 0
      %1151 = vmatmul.mubr.bf16.gmra.mrb[0].mxu0 %v1046
      %v1152 = vpop.f32.mrb[0].mxu0
      %v1153 = vadd.f32 %v1003, %v1152
      %v1154 = vpop.f32.mrb[0].mxu0
      %v1155 = vpop.f32.mrb[0].mxu0
      %v1156 = vadd.f32 %v1003, %v1155
      %v1157 = vpop.f32.mrb[0].mxu0
      %1158 = vmatprep.mubr.bf16.mxu0 0
      %1159 = vmatmul.mubr.bf16.gmra.mrb[0].mxu0 %v1049
      %v1160 = vpop.f32.mrb[0].mxu0
      %v1161 = vadd.f32 %v1003, %v1160
      %v1162 = vpop.f32.mrb[0].mxu0
      %v1163 = vpop.f32.mrb[0].mxu0
      %v1164 = vadd.f32 %v1003, %v1163
      %v1165 = vpop.f32.mrb[0].mxu0
      %1166 = vmatprep.mubr.bf16.mxu0 0
      %1167 = vmatmul.mubr.bf16.gmra.mrb[0].mxu0 %v1052
      %v1168 = vpop.f32.mrb[0].mxu0
      %v1169 = vadd.f32 %v1003, %v1168
      %v1170 = vpop.f32.mrb[0].mxu0
      %v1171 = vpop.f32.mrb[0].mxu0
      %v1172 = vadd.f32 %v1003, %v1171
      %v1173 = vpop.f32.mrb[0].mxu0
      %1174 = vmatprep.mubr.bf16.mxu0 0
      %1175 = vmatmul.mubr.bf16.gmra.mrb[0].mxu0 %v1055
      %v1176 = vpop.f32.mrb[0].mxu0
      %v1177 = vadd.f32 %v1003, %v1176
      %v1178 = vpop.f32.mrb[0].mxu0
      %v1179 = vpop.f32.mrb[0].mxu0
      %v1180 = vadd.f32 %v1003, %v1179
      %v1181 = vpop.f32.mrb[0].mxu0
      %1182 = vmatprep.mubr.bf16.mxu0 0
      %1183 = vmatmul.mubr.bf16.gmra.mrb[0].mxu0 %v1058
      %v1184 = vpop.f32.mrb[0].mxu0
      %v1185 = vadd.f32 %v1003, %v1184
      %v1186 = vpop.f32.mrb[0].mxu0
      %v1187 = vpop.f32.mrb[0].mxu0
      %v1188 = vadd.f32 %v1003, %v1187
      %v1189 = vpop.f32.mrb[0].mxu0
      %1190 = vmatprep.mubr.bf16.mxu0 0
      %1191 = vmatmul.mubr.bf16.gmra.mrb[0].mxu0 %v1061
      %v1192 = vpop.f32.mrb[0].mxu0
      %v1193 = vadd.f32 %v1003, %v1192
      %v1194 = vpop.f32.mrb[0].mxu0
      %v1195 = vpop.f32.mrb[0].mxu0
      %v1196 = vadd.f32 %v1003, %v1195
      %v1197 = vpop.f32.mrb[0].mxu0
      %1198 = vmatprep.mubr.bf16.mxu0 0
      %1199 = vmatmul.mubr.bf16.gmra.mrb[0].mxu0 %v1064
      %v1200 = vpop.f32.mrb[0].mxu0
      %v1201 = vadd.f32 %v1003, %v1200
      %v1202 = vpop.f32.mrb[0].mxu0
      %v1203 = vpop.f32.mrb[0].mxu0
      %v1204 = vadd.f32 %v1003, %v1203
      %v1205 = vpop.f32.mrb[0].mxu0
      %1206 = vmatprep.mubr.bf16.mxu0 0
      %1207 = vmatmul.mubr.bf16.gmra.mrb[0].mxu0 %v1067
      %v1208 = vpop.f32.mrb[0].mxu0
      %v1209 = vadd.f32 %v1003, %v1208
      %v1210 = vpop.f32.mrb[0].mxu0
      %v1211 = vpop.f32.mrb[0].mxu0
      %v1212 = vadd.f32 %v1003, %v1211
      %v1213 = vpop.f32.mrb[0].mxu0
      %1214 = vmatprep.mubr.bf16.mxu0 0
      %1215 = vmatmul.mubr.bf16.gmra.mrb[0].mxu0 %v1070
      %v1216 = vpop.f32.mrb[0].mxu0
      %v1217 = vadd.f32 %v1003, %v1216
      %v1218 = vpop.f32.mrb[0].mxu0
      %v1219 = vpop.f32.mrb[0].mxu0
      %v1220 = vadd.f32 %v1003, %v1219
      %v1221 = vpop.f32.mrb[0].mxu0
      %1222 = vmatprep.mubr.bf16.mxu0 0
      %1223 = vmatmul.mubr.bf16.gmra.mrb[0].mxu0 %v1073
      %v1224 = vpop.f32.mrb[0].mxu0
      %v1225 = vadd.f32 %v1003, %v1224
      %v1226 = vpop.f32.mrb[0].mxu0
      %v1227 = vpop.f32.mrb[0].mxu0
      %v1228 = vadd.f32 %v1003, %v1227
      %v1229 = vpop.f32.mrb[0].mxu0
      %1230 = vmatprep.mubr.bf16.mxu0 0
      %1231 = vmatmul.mubr.bf16.gmra.mrb[0].mxu0 %v1076
      %v1232 = vpop.f32.mrb[0].mxu0
      %v1233 = vadd.f32 %v1003, %v1232
      %v1234 = vpop.f32.mrb[0].mxu0
      %v1235 = vpop.f32.mrb[0].mxu0
      %v1236 = vadd.f32 %v1003, %v1235
      %v1237 = vpop.f32.mrb[0].mxu0
      %1238 = vdwg.mxu0
      %v1239 = vmax.f32 %v1113, 0.0
      %v1240 = vmax.f32 %v1116, 0.0
      %v1241 = vmax.f32 %v1121, 0.0
      %v1242 = vmax.f32 %v1124, 0.0
      %v1243 = vmax.f32 %v1129, 0.0
      %v1244 = vmax.f32 %v1132, 0.0
      %v1245 = vmax.f32 %v1137, 0.0
      %v1246 = vmax.f32 %v1140, 0.0
      %v1247 = vmax.f32 %v1145, 0.0
      %v1248 = vmax.f32 %v1148, 0.0
      %v1249 = vmax.f32 %v1153, 0.0
      %v1250 = vmax.f32 %v1156, 0.0
      %v1251 = vmax.f32 %v1161, 0.0
      %v1252 = vmax.f32 %v1164, 0.0
      %v1253 = vmax.f32 %v1169, 0.0
      %v1254 = vmax.f32 %v1172, 0.0
      %v1255 = vmax.f32 %v1177, 0.0
      %v1256 = vmax.f32 %v1180, 0.0
      %v1257 = vmax.f32 %v1185, 0.0
      %v1258 = vmax.f32 %v1188, 0.0
      %v1259 = vmax.f32 %v1193, 0.0
      %v1260 = vmax.f32 %v1196, 0.0
      %v1261 = vmax.f32 %v1201, 0.0
      %v1262 = vmax.f32 %v1204, 0.0
      %v1263 = vmax.f32 %v1209, 0.0
      %v1264 = vmax.f32 %v1212, 0.0
      %v1265 = vmax.f32 %v1217, 0.0
      %v1266 = vmax.f32 %v1220, 0.0
      %v1267 = vmax.f32 %v1225, 0.0
      %v1268 = vmax.f32 %v1228, 0.0
      %v1269 = vmax.f32 %v1233, 0.0
      %v1270 = vmax.f32 %v1236, 0.0
      %v1271 = vld [vmem:[%s5] sm:$0xf]
      %v1272 = vld [vmem:[%s5 + $0x4] sm:$0xf]
      %v1273 = vld [vmem:[%s5 + $0x8] sm:$0xf]
      %v1274 = vld [vmem:[%s5 + $0xc] sm:$0xf]
      %v1275 = vld [vmem:[%s5 + $0x10] sm:$0xf]
      %v1276 = vld [vmem:[%s5 + $0x14] sm:$0xf]
      %v1277 = vld [vmem:[%s6] sm:$0x1]
      %v1278 = vpack.c.bf16 %v1240, %v1239
      %v1279 = vpack.c.bf16 %v1242, %v1241
      %v1280 = vpack.c.bf16 %v1244, %v1243
      %v1281 = vpack.c.bf16 %v1246, %v1245
      %v1282 = vpack.c.bf16 %v1248, %v1247
      %v1283 = vpack.c.bf16 %v1250, %v1249
      %v1284 = vpack.c.bf16 %v1252, %v1251
      %v1285 = vpack.c.bf16 %v1254, %v1253
      %v1286 = vpack.c.bf16 %v1256, %v1255
      %v1287 = vpack.c.bf16 %v1258, %v1257
      %v1288 = vpack.c.bf16 %v1260, %v1259
      %v1289 = vpack.c.bf16 %v1262, %v1261
      %v1290 = vpack.c.bf16 %v1264, %v1263
      %v1291 = vpack.c.bf16 %v1266, %v1265
      %v1292 = vpack.c.bf16 %v1268, %v1267
      %v1293 = vpack.c.bf16 %v1270, %v1269
      %v1295 = vlaneseq
      %v1296 = vshrl.u32 %v1295, 7
      %v1297 = vsub.s32 0, %v1296
      %v1298 = vrot.slane %v1277, %v1297
      %v1306 = vunpack.c.l.b16 %v1271
      %v1307 = vunpack.c.l.b16 %v1272
      %v1308 = vunpack.c.l.b16 %v1273
      %v1309 = vunpack.c.l.b16 %v1274
      %v1310 = vunpack.c.l.b16 %v1275
      %v1311 = vunpack.c.l.b16 %v1276
      %v1312 = vpack.c.b16 %v1307, %v1306
      %v1313 = vpack.c.b16 %v1309, %v1308
      %v1314 = vpack.c.b16 %v1311, %v1310
      %vm1318 = vcmask 392192
      %v1320 = vsel %vm1318, %v1278, 0
      %v1323 = vsel %vm1318, %v1279, 0
      %v1326 = vsel %vm1318, %v1280, 0
      %v1329 = vsel %vm1318, %v1281, 0
      %v1332 = vsel %vm1318, %v1282, 0
      %v1335 = vsel %vm1318, %v1283, 0
      %v1338 = vsel %vm1318, %v1284, 0
      %v1341 = vsel %vm1318, %v1285, 0
      %v1344 = vsel %vm1318, %v1286, 0
      %v1347 = vsel %vm1318, %v1287, 0
      %v1350 = vsel %vm1318, %v1288, 0
      %v1353 = vsel %vm1318, %v1289, 0
      %v1356 = vsel %vm1318, %v1290, 0
      %v1359 = vsel %vm1318, %v1291, 0
      %v1362 = vsel %vm1318, %v1292, 0
      %v1365 = vsel %vm1318, %v1293, 0
      %1367 = vmatprep.subr.bf16.mxu0 0
      %1368 = vmatpush1.bf16.msra.mxu0 %v1312
      %1369 = vmatprep.subr.bf16.mxu0 0
      %1370 = vmatpush1.bf16.msra.mxu0 %v1313
      %1371 = vmatprep.subr.bf16.mxu0 0
      %1372 = vmatpush1.bf16.msra.mxu0 %v1314
      %1373 = vmatprep.subr.bf16.mxu0 0
      %1374 = vmatpush1.bf16.msra.mxu0 0
      %1375 = vmatprep.subr.bf16.mxu0 0
      %1376 = vmatpush1.bf16.msra.mxu0 0
      %1377 = vmatprep.subr.bf16.mxu0 0
      %1378 = vmatpush1.bf16.msra.mxu0 0
      %1379 = vmatprep.subr.bf16.mxu0 0
      %1380 = vmatpush1.bf16.msra.mxu0 0
      %1381 = vmatprep.subr.bf16.mxu0 0
      %1382 = vmatpush1.bf16.msra.mxu0 0
      %1383 = vmatprep.subr.bf16.mxu0 0
      %1384 = vmatpush1.bf16.msra.mxu0 0
      %1385 = vmatprep.subr.bf16.mxu0 0
      %1386 = vmatpush1.bf16.msra.mxu0 0
      %1387 = vmatprep.subr.bf16.mxu0 0
      %1388 = vmatpush1.bf16.msra.mxu0 0
      %1389 = vmatprep.subr.bf16.mxu0 0
      %1390 = vmatpush1.bf16.msra.mxu0 0
      %1391 = vmatprep.subr.bf16.mxu0 0
      %1392 = vmatpush1.bf16.msra.mxu0 0
      %1393 = vmatprep.subr.bf16.mxu0 0
      %1394 = vmatpush1.bf16.msra.mxu0 0
      %1395 = vmatprep.subr.bf16.mxu0 0
      %1396 = vmatpush1.bf16.msra.mxu0 0
      %1397 = vmatprep.subr.bf16.mxu0 0
      %1398 = vmatpush1.bf16.msra.mxu0 0
      %1399 = vmatprep.mubr.bf16.mxu0 0
      %1400 = vmatmul.mubr.bf16.gmra.mrb[0].mxu0 %v1320
      %v1401 = vpop.f32.mrb[0].mxu0
      %v1402 = vadd.f32 %v1298, %v1401
      %v1403 = vpop.f32.mrb[0].mxu0
      %v1404 = vpop.f32.mrb[0].mxu0
      %v1405 = vadd.f32 %v1298, %v1404
      %v1406 = vpop.f32.mrb[0].mxu0
      %1407 = vmatprep.mubr.bf16.mxu0 0
      %1408 = vmatmul.mubr.bf16.gmra.mrb[0].mxu0 %v1323
      %v1409 = vpop.f32.mrb[0].mxu0
      %v1410 = vadd.f32 %v1298, %v1409
      %v1411 = vpop.f32.mrb[0].mxu0
      %v1412 = vpop.f32.mrb[0].mxu0
      %v1413 = vadd.f32 %v1298, %v1412
      %v1414 = vpop.f32.mrb[0].mxu0
      %1415 = vmatprep.mubr.bf16.mxu0 0
      %1416 = vmatmul.mubr.bf16.gmra.mrb[0].mxu0 %v1326
      %v1417 = vpop.f32.mrb[0].mxu0
      %v1418 = vadd.f32 %v1298, %v1417
      %v1419 = vpop.f32.mrb[0].mxu0
      %v1420 = vpop.f32.mrb[0].mxu0
      %v1421 = vadd.f32 %v1298, %v1420
      %v1422 = vpop.f32.mrb[0].mxu0
      %1423 = vmatprep.mubr.bf16.mxu0 0
      %1424 = vmatmul.mubr.bf16.gmra.mrb[0].mxu0 %v1329
      %v1425 = vpop.f32.mrb[0].mxu0
      %v1426 = vadd.f32 %v1298, %v1425
      %v1427 = vpop.f32.mrb[0].mxu0
      %v1428 = vpop.f32.mrb[0].mxu0
      %v1429 = vadd.f32 %v1298, %v1428
      %v1430 = vpop.f32.mrb[0].mxu0
      %1431 = vmatprep.mubr.bf16.mxu0 0
      %1432 = vmatmul.mubr.bf16.gmra.mrb[0].mxu0 %v1332
      %v1433 = vpop.f32.mrb[0].mxu0
      %v1434 = vadd.f32 %v1298, %v1433
      %v1435 = vpop.f32.mrb[0].mxu0
      %v1436 = vpop.f32.mrb[0].mxu0
      %v1437 = vadd.f32 %v1298, %v1436
      %v1438 = vpop.f32.mrb[0].mxu0
      %1439 = vmatprep.mubr.bf16.mxu0 0
      %1440 = vmatmul.mubr.bf16.gmra.mrb[0].mxu0 %v1335
      %v1441 = vpop.f32.mrb[0].mxu0
      %v1442 = vadd.f32 %v1298, %v1441
      %v1443 = vpop.f32.mrb[0].mxu0
      %v1444 = vpop.f32.mrb[0].mxu0
      %v1445 = vadd.f32 %v1298, %v1444
      %v1446 = vpop.f32.mrb[0].mxu0
      %1447 = vmatprep.mubr.bf16.mxu0 0
      %1448 = vmatmul.mubr.bf16.gmra.mrb[0].mxu0 %v1338
      %v1449 = vpop.f32.mrb[0].mxu0
      %v1450 = vadd.f32 %v1298, %v1449
      %v1451 = vpop.f32.mrb[0].mxu0
      %v1452 = vpop.f32.mrb[0].mxu0
      %v1453 = vadd.f32 %v1298, %v1452
      %v1454 = vpop.f32.mrb[0].mxu0
      %1455 = vmatprep.mubr.bf16.mxu0 0
      %1456 = vmatmul.mubr.bf16.gmra.mrb[0].mxu0 %v1341
      %v1457 = vpop.f32.mrb[0].mxu0
      %v1458 = vadd.f32 %v1298, %v1457
      %v1459 = vpop.f32.mrb[0].mxu0
      %v1460 = vpop.f32.mrb[0].mxu0
      %v1461 = vadd.f32 %v1298, %v1460
      %v1462 = vpop.f32.mrb[0].mxu0
      %1463 = vmatprep.mubr.bf16.mxu0 0
      %1464 = vmatmul.mubr.bf16.gmra.mrb[0].mxu0 %v1344
      %v1465 = vpop.f32.mrb[0].mxu0
      %v1466 = vadd.f32 %v1298, %v1465
      %v1467 = vpop.f32.mrb[0].mxu0
      %v1468 = vpop.f32.mrb[0].mxu0
      %v1469 = vadd.f32 %v1298, %v1468
      %v1470 = vpop.f32.mrb[0].mxu0
      %1471 = vmatprep.mubr.bf16.mxu0 0
      %1472 = vmatmul.mubr.bf16.gmra.mrb[0].mxu0 %v1347
      %v1473 = vpop.f32.mrb[0].mxu0
      %v1474 = vadd.f32 %v1298, %v1473
      %v1475 = vpop.f32.mrb[0].mxu0
      %v1476 = vpop.f32.mrb[0].mxu0
      %v1477 = vadd.f32 %v1298, %v1476
      %v1478 = vpop.f32.mrb[0].mxu0
      %1479 = vmatprep.mubr.bf16.mxu0 0
      %1480 = vmatmul.mubr.bf16.gmra.mrb[0].mxu0 %v1350
      %v1481 = vpop.f32.mrb[0].mxu0
      %v1482 = vadd.f32 %v1298, %v1481
      %v1483 = vpop.f32.mrb[0].mxu0
      %v1484 = vpop.f32.mrb[0].mxu0
      %v1485 = vadd.f32 %v1298, %v1484
      %v1486 = vpop.f32.mrb[0].mxu0
      %1487 = vmatprep.mubr.bf16.mxu0 0
      %1488 = vmatmul.mubr.bf16.gmra.mrb[0].mxu0 %v1353
      %v1489 = vpop.f32.mrb[0].mxu0
      %v1490 = vadd.f32 %v1298, %v1489
      %v1491 = vpop.f32.mrb[0].mxu0
      %v1492 = vpop.f32.mrb[0].mxu0
      %v1493 = vadd.f32 %v1298, %v1492
      %v1494 = vpop.f32.mrb[0].mxu0
      %1495 = vmatprep.mubr.bf16.mxu0 0
      %1496 = vmatmul.mubr.bf16.gmra.mrb[0].mxu0 %v1356
      %v1497 = vpop.f32.mrb[0].mxu0
      %v1498 = vadd.f32 %v1298, %v1497
      %v1499 = vpop.f32.mrb[0].mxu0
      %v1500 = vpop.f32.mrb[0].mxu0
      %v1501 = vadd.f32 %v1298, %v1500
      %v1502 = vpop.f32.mrb[0].mxu0
      %1503 = vmatprep.mubr.bf16.mxu0 0
      %1504 = vmatmul.mubr.bf16.gmra.mrb[0].mxu0 %v1359
      %v1505 = vpop.f32.mrb[0].mxu0
      %v1506 = vadd.f32 %v1298, %v1505
      %v1507 = vpop.f32.mrb[0].mxu0
      %v1508 = vpop.f32.mrb[0].mxu0
      %v1509 = vadd.f32 %v1298, %v1508
      %v1510 = vpop.f32.mrb[0].mxu0
      %1511 = vmatprep.mubr.bf16.mxu0 0
      %1512 = vmatmul.mubr.bf16.gmra.mrb[0].mxu0 %v1362
      %v1513 = vpop.f32.mrb[0].mxu0
      %v1514 = vadd.f32 %v1298, %v1513
      %v1515 = vpop.f32.mrb[0].mxu0
      %v1516 = vpop.f32.mrb[0].mxu0
      %v1517 = vadd.f32 %v1298, %v1516
      %v1518 = vpop.f32.mrb[0].mxu0
      %1519 = vmatprep.mubr.bf16.mxu0 0
      %1520 = vmatmul.mubr.bf16.gmra.mrb[0].mxu0 %v1365
      %v1521 = vpop.f32.mrb[0].mxu0
      %v1522 = vadd.f32 %v1298, %v1521
      %v1523 = vpop.f32.mrb[0].mxu0
      %v1524 = vpop.f32.mrb[0].mxu0
      %v1525 = vadd.f32 %v1298, %v1524
      %v1526 = vpop.f32.mrb[0].mxu0
      %1527 = vdwg.mxu0
      %v1528 = vld [vmem:[%s7] sm:$0xf]
      %v1529 = vld [vmem:[%s7 + $0x4] sm:$0xf]
      %v1530 = vld [vmem:[%s7 + $0x8] sm:$0xf]
      %v1531 = vld [vmem:[%s7 + $0xc] sm:$0xf]
      %v1532 = vld [vmem:[%s8] sm:$0x1]
      %v1533 = vpack.c.bf16 %v1405, %v1402
      %v1534 = vpack.c.bf16 %v1413, %v1410
      %v1535 = vpack.c.bf16 %v1421, %v1418
      %v1536 = vpack.c.bf16 %v1429, %v1426
      %v1537 = vpack.c.bf16 %v1437, %v1434
      %v1538 = vpack.c.bf16 %v1445, %v1442
      %v1539 = vpack.c.bf16 %v1453, %v1450
      %v1540 = vpack.c.bf16 %v1461, %v1458
      %v1541 = vpack.c.bf16 %v1469, %v1466
      %v1542 = vpack.c.bf16 %v1477, %v1474
      %v1543 = vpack.c.bf16 %v1485, %v1482
      %v1544 = vpack.c.bf16 %v1493, %v1490
      %v1545 = vpack.c.bf16 %v1501, %v1498
      %v1546 = vpack.c.bf16 %v1509, %v1506
      %v1547 = vpack.c.bf16 %v1517, %v1514
      %v1548 = vpack.c.bf16 %v1525, %v1522
      %v1550 = vlaneseq
      %v1551 = vshrl.u32 %v1550, 7
      %v1552 = vsub.s32 0, %v1551
      %v1553 = vrot.slane %v1532, %v1552
      %v1559 = vunpack.c.l.b16 %v1528
      %v1560 = vunpack.c.l.b16 %v1529
      %v1561 = vunpack.c.l.b16 %v1530
      %v1562 = vunpack.c.l.b16 %v1531
      %v1563 = vpack.c.b16 %v1560, %v1559
      %v1564 = vpack.c.b16 %v1562, %v1561
      %v1568 = vsel %vm732, %v1533, 0
      %v1571 = vsel %vm732, %v1534, 0
      %v1574 = vsel %vm732, %v1535, 0
      %v1577 = vsel %vm732, %v1536, 0
      %v1580 = vsel %vm732, %v1537, 0
      %v1583 = vsel %vm732, %v1538, 0
      %v1586 = vsel %vm732, %v1539, 0
      %v1589 = vsel %vm732, %v1540, 0
      %v1592 = vsel %vm732, %v1541, 0
      %v1595 = vsel %vm732, %v1542, 0
      %v1598 = vsel %vm732, %v1543, 0
      %v1601 = vsel %vm732, %v1544, 0
      %v1604 = vsel %vm732, %v1545, 0
      %v1607 = vsel %vm732, %v1546, 0
      %v1610 = vsel %vm732, %v1547, 0
      %v1613 = vsel %vm732, %v1548, 0
      %1615 = vmatprep.subr.bf16.mxu0 0
      %1616 = vmatpush1.bf16.msra.mxu0 %v1563
      %1617 = vmatprep.subr.bf16.mxu0 0
      %1618 = vmatpush1.bf16.msra.mxu0 %v1564
      %1619 = vmatprep.subr.bf16.mxu0 0
      %1620 = vmatpush1.bf16.msra.mxu0 0
      %1621 = vmatprep.subr.bf16.mxu0 0
      %1622 = vmatpush1.bf16.msra.mxu0 0
      %1623 = vmatprep.subr.bf16.mxu0 0
      %1624 = vmatpush1.bf16.msra.mxu0 0
      %1625 = vmatprep.subr.bf16.mxu0 0
      %1626 = vmatpush1.bf16.msra.mxu0 0
      %1627 = vmatprep.subr.bf16.mxu0 0
      %1628 = vmatpush1.bf16.msra.mxu0 0
      %1629 = vmatprep.subr.bf16.mxu0 0
      %1630 = vmatpush1.bf16.msra.mxu0 0
      %1631 = vmatprep.subr.bf16.mxu0 0
      %1632 = vmatpush1.bf16.msra.mxu0 0
      %1633 = vmatprep.subr.bf16.mxu0 0
      %1634 = vmatpush1.bf16.msra.mxu0 0
      %1635 = vmatprep.subr.bf16.mxu0 0
      %1636 = vmatpush1.bf16.msra.mxu0 0
      %1637 = vmatprep.subr.bf16.mxu0 0
      %1638 = vmatpush1.bf16.msra.mxu0 0
      %1639 = vmatprep.subr.bf16.mxu0 0
      %1640 = vmatpush1.bf16.msra.mxu0 0
      %1641 = vmatprep.subr.bf16.mxu0 0
      %1642 = vmatpush1.bf16.msra.mxu0 0
      %1643 = vmatprep.subr.bf16.mxu0 0
      %1644 = vmatpush1.bf16.msra.mxu0 0
      %1645 = vmatprep.subr.bf16.mxu0 0
      %1646 = vmatpush1.bf16.msra.mxu0 0
      %1647 = vmatprep.mubr.bf16.mxu0 0
      %1648 = vmatmul.mubr.bf16.gmra.mrb[0].mxu0 %v1568
      %v1649 = vpop.f32.mrb[0].mxu0
      %v1650 = vadd.f32 %v1553, %v1649
      %v1651 = vpop.f32.mrb[0].mxu0
      %v1652 = vpop.f32.mrb[0].mxu0
      %v1653 = vadd.f32 %v1553, %v1652
      %v1654 = vpop.f32.mrb[0].mxu0
      %1655 = vmatprep.mubr.bf16.mxu0 0
      %1656 = vmatmul.mubr.bf16.gmra.mrb[0].mxu0 %v1571
      %v1657 = vpop.f32.mrb[0].mxu0
      %v1658 = vadd.f32 %v1553, %v1657
      %v1659 = vpop.f32.mrb[0].mxu0
      %v1660 = vpop.f32.mrb[0].mxu0
      %v1661 = vadd.f32 %v1553, %v1660
      %v1662 = vpop.f32.mrb[0].mxu0
      %1663 = vmatprep.mubr.bf16.mxu0 0
      %1664 = vmatmul.mubr.bf16.gmra.mrb[0].mxu0 %v1574
      %v1665 = vpop.f32.mrb[0].mxu0
      %v1666 = vadd.f32 %v1553, %v1665
      %v1667 = vpop.f32.mrb[0].mxu0
      %v1668 = vpop.f32.mrb[0].mxu0
      %v1669 = vadd.f32 %v1553, %v1668
      %v1670 = vpop.f32.mrb[0].mxu0
      %1671 = vmatprep.mubr.bf16.mxu0 0
      %1672 = vmatmul.mubr.bf16.gmra.mrb[0].mxu0 %v1577
      %v1673 = vpop.f32.mrb[0].mxu0
      %v1674 = vadd.f32 %v1553, %v1673
      %v1675 = vpop.f32.mrb[0].mxu0
      %v1676 = vpop.f32.mrb[0].mxu0
      %v1677 = vadd.f32 %v1553, %v1676
      %v1678 = vpop.f32.mrb[0].mxu0
      %1679 = vmatprep.mubr.bf16.mxu0 0
      %1680 = vmatmul.mubr.bf16.gmra.mrb[0].mxu0 %v1580
      %v1681 = vpop.f32.mrb[0].mxu0
      %v1682 = vadd.f32 %v1553, %v1681
      %v1683 = vpop.f32.mrb[0].mxu0
      %v1684 = vpop.f32.mrb[0].mxu0
      %v1685 = vadd.f32 %v1553, %v1684
      %v1686 = vpop.f32.mrb[0].mxu0
      %1687 = vmatprep.mubr.bf16.mxu0 0
      %1688 = vmatmul.mubr.bf16.gmra.mrb[0].mxu0 %v1583
      %v1689 = vpop.f32.mrb[0].mxu0
      %v1690 = vadd.f32 %v1553, %v1689
      %v1691 = vpop.f32.mrb[0].mxu0
      %v1692 = vpop.f32.mrb[0].mxu0
      %v1693 = vadd.f32 %v1553, %v1692
      %v1694 = vpop.f32.mrb[0].mxu0
      %1695 = vmatprep.mubr.bf16.mxu0 0
      %1696 = vmatmul.mubr.bf16.gmra.mrb[0].mxu0 %v1586
      %v1697 = vpop.f32.mrb[0].mxu0
      %v1698 = vadd.f32 %v1553, %v1697
      %v1699 = vpop.f32.mrb[0].mxu0
      %v1700 = vpop.f32.mrb[0].mxu0
      %v1701 = vadd.f32 %v1553, %v1700
      %v1702 = vpop.f32.mrb[0].mxu0
      %1703 = vmatprep.mubr.bf16.mxu0 0
      %1704 = vmatmul.mubr.bf16.gmra.mrb[0].mxu0 %v1589
      %v1705 = vpop.f32.mrb[0].mxu0
      %v1706 = vadd.f32 %v1553, %v1705
      %v1707 = vpop.f32.mrb[0].mxu0
      %v1708 = vpop.f32.mrb[0].mxu0
      %v1709 = vadd.f32 %v1553, %v1708
      %v1710 = vpop.f32.mrb[0].mxu0
      %1711 = vmatprep.mubr.bf16.mxu0 0
      %1712 = vmatmul.mubr.bf16.gmra.mrb[0].mxu0 %v1592
      %v1713 = vpop.f32.mrb[0].mxu0
      %v1714 = vadd.f32 %v1553, %v1713
      %v1715 = vpop.f32.mrb[0].mxu0
      %v1716 = vpop.f32.mrb[0].mxu0
      %v1717 = vadd.f32 %v1553, %v1716
      %v1718 = vpop.f32.mrb[0].mxu0
      %1719 = vmatprep.mubr.bf16.mxu0 0
      %1720 = vmatmul.mubr.bf16.gmra.mrb[0].mxu0 %v1595
      %v1721 = vpop.f32.mrb[0].mxu0
      %v1722 = vadd.f32 %v1553, %v1721
      %v1723 = vpop.f32.mrb[0].mxu0
      %v1724 = vpop.f32.mrb[0].mxu0
      %v1725 = vadd.f32 %v1553, %v1724
      %v1726 = vpop.f32.mrb[0].mxu0
      %1727 = vmatprep.mubr.bf16.mxu0 0
      %1728 = vmatmul.mubr.bf16.gmra.mrb[0].mxu0 %v1598
      %v1729 = vpop.f32.mrb[0].mxu0
      %v1730 = vadd.f32 %v1553, %v1729
      %v1731 = vpop.f32.mrb[0].mxu0
      %v1732 = vpop.f32.mrb[0].mxu0
      %v1733 = vadd.f32 %v1553, %v1732
      %v1734 = vpop.f32.mrb[0].mxu0
      %1735 = vmatprep.mubr.bf16.mxu0 0
      %1736 = vmatmul.mubr.bf16.gmra.mrb[0].mxu0 %v1601
      %v1737 = vpop.f32.mrb[0].mxu0
      %v1738 = vadd.f32 %v1553, %v1737
      %v1739 = vpop.f32.mrb[0].mxu0
      %v1740 = vpop.f32.mrb[0].mxu0
      %v1741 = vadd.f32 %v1553, %v1740
      %v1742 = vpop.f32.mrb[0].mxu0
      %1743 = vmatprep.mubr.bf16.mxu0 0
      %1744 = vmatmul.mubr.bf16.gmra.mrb[0].mxu0 %v1604
      %v1745 = vpop.f32.mrb[0].mxu0
      %v1746 = vadd.f32 %v1553, %v1745
      %v1747 = vpop.f32.mrb[0].mxu0
      %v1748 = vpop.f32.mrb[0].mxu0
      %v1749 = vadd.f32 %v1553, %v1748
      %v1750 = vpop.f32.mrb[0].mxu0
      %1751 = vmatprep.mubr.bf16.mxu0 0
      %1752 = vmatmul.mubr.bf16.gmra.mrb[0].mxu0 %v1607
      %v1753 = vpop.f32.mrb[0].mxu0
      %v1754 = vadd.f32 %v1553, %v1753
      %v1755 = vpop.f32.mrb[0].mxu0
      %v1756 = vpop.f32.mrb[0].mxu0
      %v1757 = vadd.f32 %v1553, %v1756
      %v1758 = vpop.f32.mrb[0].mxu0
      %1759 = vmatprep.mubr.bf16.mxu0 0
      %1760 = vmatmul.mubr.bf16.gmra.mrb[0].mxu0 %v1610
      %v1761 = vpop.f32.mrb[0].mxu0
      %v1762 = vadd.f32 %v1553, %v1761
      %v1763 = vpop.f32.mrb[0].mxu0
      %v1764 = vpop.f32.mrb[0].mxu0
      %v1765 = vadd.f32 %v1553, %v1764
      %v1766 = vpop.f32.mrb[0].mxu0
      %1767 = vmatprep.mubr.bf16.mxu0 0
      %1768 = vmatmul.mubr.bf16.gmra.mrb[0].mxu0 %v1613
      %v1769 = vpop.f32.mrb[0].mxu0
      %v1770 = vadd.f32 %v1553, %v1769
      %v1771 = vpop.f32.mrb[0].mxu0
      %v1772 = vpop.f32.mrb[0].mxu0
      %v1773 = vadd.f32 %v1553, %v1772
      %v1774 = vpop.f32.mrb[0].mxu0
      %1775 = vdwg.mxu0
      %v1776 = vmax.f32 %v1650, 0.0
      %v1777 = vmax.f32 %v1653, 0.0
      %v1778 = vmax.f32 %v1658, 0.0
      %v1779 = vmax.f32 %v1661, 0.0
      %v1780 = vmax.f32 %v1666, 0.0
      %v1781 = vmax.f32 %v1669, 0.0
      %v1782 = vmax.f32 %v1674, 0.0
      %v1783 = vmax.f32 %v1677, 0.0
      %v1784 = vmax.f32 %v1682, 0.0
      %v1785 = vmax.f32 %v1685, 0.0
      %v1786 = vmax.f32 %v1690, 0.0
      %v1787 = vmax.f32 %v1693, 0.0
      %v1788 = vmax.f32 %v1698, 0.0
      %v1789 = vmax.f32 %v1701, 0.0
      %v1790 = vmax.f32 %v1706, 0.0
      %v1791 = vmax.f32 %v1709, 0.0
      %v1792 = vmax.f32 %v1714, 0.0
      %v1793 = vmax.f32 %v1717, 0.0
      %v1794 = vmax.f32 %v1722, 0.0
      %v1795 = vmax.f32 %v1725, 0.0
      %v1796 = vmax.f32 %v1730, 0.0
      %v1797 = vmax.f32 %v1733, 0.0
      %v1798 = vmax.f32 %v1738, 0.0
      %v1799 = vmax.f32 %v1741, 0.0
      %v1800 = vmax.f32 %v1746, 0.0
      %v1801 = vmax.f32 %v1749, 0.0
      %v1802 = vmax.f32 %v1754, 0.0
      %v1803 = vmax.f32 %v1757, 0.0
      %v1804 = vmax.f32 %v1762, 0.0
      %v1805 = vmax.f32 %v1765, 0.0
      %v1806 = vmax.f32 %v1770, 0.0
      %v1807 = vmax.f32 %v1773, 0.0
      %v1808 = vld [vmem:[%s9] sm:$0xf]
      %v1809 = vld [vmem:[%s9 + $0x4] sm:$0xf]
      %v1810 = vld [vmem:[%s9 + $0x8] sm:$0xf]
      %v1811 = vld [vmem:[%s9 + $0xc] sm:$0xf]
      %v1812 = vld [vmem:[%s9 + $0x10] sm:$0xf]
      %v1813 = vld [vmem:[%s9 + $0x14] sm:$0xf]
      %v1814 = vld [vmem:[%s10] sm:$0x1]
      %v1815 = vpack.c.bf16 %v1777, %v1776
      %v1816 = vpack.c.bf16 %v1779, %v1778
      %v1817 = vpack.c.bf16 %v1781, %v1780
      %v1818 = vpack.c.bf16 %v1783, %v1782
      %v1819 = vpack.c.bf16 %v1785, %v1784
      %v1820 = vpack.c.bf16 %v1787, %v1786
      %v1821 = vpack.c.bf16 %v1789, %v1788
      %v1822 = vpack.c.bf16 %v1791, %v1790
      %v1823 = vpack.c.bf16 %v1793, %v1792
      %v1824 = vpack.c.bf16 %v1795, %v1794
      %v1825 = vpack.c.bf16 %v1797, %v1796
      %v1826 = vpack.c.bf16 %v1799, %v1798
      %v1827 = vpack.c.bf16 %v1801, %v1800
      %v1828 = vpack.c.bf16 %v1803, %v1802
      %v1829 = vpack.c.bf16 %v1805, %v1804
      %v1830 = vpack.c.bf16 %v1807, %v1806
      %v1832 = vlaneseq
      %v1833 = vshrl.u32 %v1832, 7
      %v1834 = vsub.s32 0, %v1833
      %v1835 = vrot.slane %v1814, %v1834
      %v1843 = vunpack.c.l.b16 %v1808
      %v1844 = vunpack.c.l.b16 %v1809
      %v1845 = vunpack.c.l.b16 %v1810
      %v1846 = vunpack.c.l.b16 %v1811
      %v1847 = vunpack.c.l.b16 %v1812
      %v1848 = vunpack.c.l.b16 %v1813
      %v1849 = vpack.c.b16 %v1844, %v1843
      %v1850 = vpack.c.b16 %v1846, %v1845
      %v1851 = vpack.c.b16 %v1848, %v1847
      %v1856 = vsel %vm1318, %v1815, 0
      %v1859 = vsel %vm1318, %v1816, 0
      %v1862 = vsel %vm1318, %v1817, 0
      %v1865 = vsel %vm1318, %v1818, 0
      %v1868 = vsel %vm1318, %v1819, 0
      %v1871 = vsel %vm1318, %v1820, 0
      %v1874 = vsel %vm1318, %v1821, 0
      %v1877 = vsel %vm1318, %v1822, 0
      %v1880 = vsel %vm1318, %v1823, 0
      %v1883 = vsel %vm1318, %v1824, 0
      %v1886 = vsel %vm1318, %v1825, 0
      %v1889 = vsel %vm1318, %v1826, 0
      %v1892 = vsel %vm1318, %v1827, 0
      %v1895 = vsel %vm1318, %v1828, 0
      %v1898 = vsel %vm1318, %v1829, 0
      %v1901 = vsel %vm1318, %v1830, 0
      %1903 = vmatprep.subr.bf16.mxu0 0
      %1904 = vmatpush1.bf16.msra.mxu0 %v1849
      %1905 = vmatprep.subr.bf16.mxu0 0
      %1906 = vmatpush1.bf16.msra.mxu0 %v1850
      %1907 = vmatprep.subr.bf16.mxu0 0
      %1908 = vmatpush1.bf16.msra.mxu0 %v1851
      %1909 = vmatprep.subr.bf16.mxu0 0
      %1910 = vmatpush1.bf16.msra.mxu0 0
      %1911 = vmatprep.subr.bf16.mxu0 0
      %1912 = vmatpush1.bf16.msra.mxu0 0
      %1913 = vmatprep.subr.bf16.mxu0 0
      %1914 = vmatpush1.bf16.msra.mxu0 0
      %1915 = vmatprep.subr.bf16.mxu0 0
      %1916 = vmatpush1.bf16.msra.mxu0 0
      %1917 = vmatprep.subr.bf16.mxu0 0
      %1918 = vmatpush1.bf16.msra.mxu0 0
      %1919 = vmatprep.subr.bf16.mxu0 0
      %1920 = vmatpush1.bf16.msra.mxu0 0
      %1921 = vmatprep.subr.bf16.mxu0 0
      %1922 = vmatpush1.bf16.msra.mxu0 0
      %1923 = vmatprep.subr.bf16.mxu0 0
      %1924 = vmatpush1.bf16.msra.mxu0 0
      %1925 = vmatprep.subr.bf16.mxu0 0
      %1926 = vmatpush1.bf16.msra.mxu0 0
      %1927 = vmatprep.subr.bf16.mxu0 0
      %1928 = vmatpush1.bf16.msra.mxu0 0
      %1929 = vmatprep.subr.bf16.mxu0 0
      %1930 = vmatpush1.bf16.msra.mxu0 0
      %1931 = vmatprep.subr.bf16.mxu0 0
      %1932 = vmatpush1.bf16.msra.mxu0 0
      %1933 = vmatprep.subr.bf16.mxu0 0
      %1934 = vmatpush1.bf16.msra.mxu0 0
      %1935 = vmatprep.mubr.bf16.mxu0 0
      %1936 = vmatmul.mubr.bf16.gmra.mrb[0].mxu0 %v1856
      %v1937 = vpop.f32.mrb[0].mxu0
      %v1938 = vadd.f32 %v1835, %v1937
      %v1939 = vpop.f32.mrb[0].mxu0
      %v1940 = vpop.f32.mrb[0].mxu0
      %v1941 = vadd.f32 %v1835, %v1940
      %v1942 = vpop.f32.mrb[0].mxu0
      %1943 = vmatprep.mubr.bf16.mxu0 0
      %1944 = vmatmul.mubr.bf16.gmra.mrb[0].mxu0 %v1859
      %v1945 = vpop.f32.mrb[0].mxu0
      %v1946 = vadd.f32 %v1835, %v1945
      %v1947 = vpop.f32.mrb[0].mxu0
      %v1948 = vpop.f32.mrb[0].mxu0
      %v1949 = vadd.f32 %v1835, %v1948
      %v1950 = vpop.f32.mrb[0].mxu0
      %1951 = vmatprep.mubr.bf16.mxu0 0
      %1952 = vmatmul.mubr.bf16.gmra.mrb[0].mxu0 %v1862
      %v1953 = vpop.f32.mrb[0].mxu0
      %v1954 = vadd.f32 %v1835, %v1953
      %v1955 = vpop.f32.mrb[0].mxu0
      %v1956 = vpop.f32.mrb[0].mxu0
      %v1957 = vadd.f32 %v1835, %v1956
      %v1958 = vpop.f32.mrb[0].mxu0
      %1959 = vmatprep.mubr.bf16.mxu0 0
      %1960 = vmatmul.mubr.bf16.gmra.mrb[0].mxu0 %v1865
      %v1961 = vpop.f32.mrb[0].mxu0
      %v1962 = vadd.f32 %v1835, %v1961
      %v1963 = vpop.f32.mrb[0].mxu0
      %v1964 = vpop.f32.mrb[0].mxu0
      %v1965 = vadd.f32 %v1835, %v1964
      %v1966 = vpop.f32.mrb[0].mxu0
      %1967 = vmatprep.mubr.bf16.mxu0 0
      %1968 = vmatmul.mubr.bf16.gmra.mrb[0].mxu0 %v1868
      %v1969 = vpop.f32.mrb[0].mxu0
      %v1970 = vadd.f32 %v1835, %v1969
      %v1971 = vpop.f32.mrb[0].mxu0
      %v1972 = vpop.f32.mrb[0].mxu0
      %v1973 = vadd.f32 %v1835, %v1972
      %v1974 = vpop.f32.mrb[0].mxu0
      %1975 = vmatprep.mubr.bf16.mxu0 0
      %1976 = vmatmul.mubr.bf16.gmra.mrb[0].mxu0 %v1871
      %v1977 = vpop.f32.mrb[0].mxu0
      %v1978 = vadd.f32 %v1835, %v1977
      %v1979 = vpop.f32.mrb[0].mxu0
      %v1980 = vpop.f32.mrb[0].mxu0
      %v1981 = vadd.f32 %v1835, %v1980
      %v1982 = vpop.f32.mrb[0].mxu0
      %1983 = vmatprep.mubr.bf16.mxu0 0
      %1984 = vmatmul.mubr.bf16.gmra.mrb[0].mxu0 %v1874
      %v1985 = vpop.f32.mrb[0].mxu0
      %v1986 = vadd.f32 %v1835, %v1985
      %v1987 = vpop.f32.mrb[0].mxu0
      %v1988 = vpop.f32.mrb[0].mxu0
      %v1989 = vadd.f32 %v1835, %v1988
      %v1990 = vpop.f32.mrb[0].mxu0
      %1991 = vmatprep.mubr.bf16.mxu0 0
      %1992 = vmatmul.mubr.bf16.gmra.mrb[0].mxu0 %v1877
      %v1993 = vpop.f32.mrb[0].mxu0
      %v1994 = vadd.f32 %v1835, %v1993
      %v1995 = vpop.f32.mrb[0].mxu0
      %v1996 = vpop.f32.mrb[0].mxu0
      %v1997 = vadd.f32 %v1835, %v1996
      %v1998 = vpop.f32.mrb[0].mxu0
      %1999 = vmatprep.mubr.bf16.mxu0 0
      %2000 = vmatmul.mubr.bf16.gmra.mrb[0].mxu0 %v1880
      %v2001 = vpop.f32.mrb[0].mxu0
      %v2002 = vadd.f32 %v1835, %v2001
      %v2003 = vpop.f32.mrb[0].mxu0
      %v2004 = vpop.f32.mrb[0].mxu0
      %v2005 = vadd.f32 %v1835, %v2004
      %v2006 = vpop.f32.mrb[0].mxu0
      %2007 = vmatprep.mubr.bf16.mxu0 0
      %2008 = vmatmul.mubr.bf16.gmra.mrb[0].mxu0 %v1883
      %v2009 = vpop.f32.mrb[0].mxu0
      %v2010 = vadd.f32 %v1835, %v2009
      %v2011 = vpop.f32.mrb[0].mxu0
      %v2012 = vpop.f32.mrb[0].mxu0
      %v2013 = vadd.f32 %v1835, %v2012
      %v2014 = vpop.f32.mrb[0].mxu0
      %2015 = vmatprep.mubr.bf16.mxu0 0
      %2016 = vmatmul.mubr.bf16.gmra.mrb[0].mxu0 %v1886
      %v2017 = vpop.f32.mrb[0].mxu0
      %v2018 = vadd.f32 %v1835, %v2017
      %v2019 = vpop.f32.mrb[0].mxu0
      %v2020 = vpop.f32.mrb[0].mxu0
      %v2021 = vadd.f32 %v1835, %v2020
      %v2022 = vpop.f32.mrb[0].mxu0
      %2023 = vmatprep.mubr.bf16.mxu0 0
      %2024 = vmatmul.mubr.bf16.gmra.mrb[0].mxu0 %v1889
      %v2025 = vpop.f32.mrb[0].mxu0
      %v2026 = vadd.f32 %v1835, %v2025
      %v2027 = vpop.f32.mrb[0].mxu0
      %v2028 = vpop.f32.mrb[0].mxu0
      %v2029 = vadd.f32 %v1835, %v2028
      %v2030 = vpop.f32.mrb[0].mxu0
      %2031 = vmatprep.mubr.bf16.mxu0 0
      %2032 = vmatmul.mubr.bf16.gmra.mrb[0].mxu0 %v1892
      %v2033 = vpop.f32.mrb[0].mxu0
      %v2034 = vadd.f32 %v1835, %v2033
      %v2035 = vpop.f32.mrb[0].mxu0
      %v2036 = vpop.f32.mrb[0].mxu0
      %v2037 = vadd.f32 %v1835, %v2036
      %v2038 = vpop.f32.mrb[0].mxu0
      %2039 = vmatprep.mubr.bf16.mxu0 0
      %2040 = vmatmul.mubr.bf16.gmra.mrb[0].mxu0 %v1895
      %v2041 = vpop.f32.mrb[0].mxu0
      %v2042 = vadd.f32 %v1835, %v2041
      %v2043 = vpop.f32.mrb[0].mxu0
      %v2044 = vpop.f32.mrb[0].mxu0
      %v2045 = vadd.f32 %v1835, %v2044
      %v2046 = vpop.f32.mrb[0].mxu0
      %2047 = vmatprep.mubr.bf16.mxu0 0
      %2048 = vmatmul.mubr.bf16.gmra.mrb[0].mxu0 %v1898
      %v2049 = vpop.f32.mrb[0].mxu0
      %v2050 = vadd.f32 %v1835, %v2049
      %v2051 = vpop.f32.mrb[0].mxu0
      %v2052 = vpop.f32.mrb[0].mxu0
      %v2053 = vadd.f32 %v1835, %v2052
      %v2054 = vpop.f32.mrb[0].mxu0
      %2055 = vmatprep.mubr.bf16.mxu0 0
      %2056 = vmatmul.mubr.bf16.gmra.mrb[0].mxu0 %v1901
      %v2057 = vpop.f32.mrb[0].mxu0
      %v2058 = vadd.f32 %v1835, %v2057
      %v2059 = vpop.f32.mrb[0].mxu0
      %v2060 = vpop.f32.mrb[0].mxu0
      %v2061 = vadd.f32 %v1835, %v2060
      %v2062 = vpop.f32.mrb[0].mxu0
      %2063 = vdwg.mxu0
      %v2064 = vmax.f32 %v1938, 0.0
      %v2065 = vmax.f32 %v1941, 0.0
      %v2066 = vmax.f32 %v1946, 0.0
      %v2067 = vmax.f32 %v1949, 0.0
      %v2068 = vmax.f32 %v1954, 0.0
      %v2069 = vmax.f32 %v1957, 0.0
      %v2070 = vmax.f32 %v1962, 0.0
      %v2071 = vmax.f32 %v1965, 0.0
      %v2072 = vmax.f32 %v1970, 0.0
      %v2073 = vmax.f32 %v1973, 0.0
      %v2074 = vmax.f32 %v1978, 0.0
      %v2075 = vmax.f32 %v1981, 0.0
      %v2076 = vmax.f32 %v1986, 0.0
      %v2077 = vmax.f32 %v1989, 0.0
      %v2078 = vmax.f32 %v1994, 0.0
      %v2079 = vmax.f32 %v1997, 0.0
      %v2080 = vmax.f32 %v2002, 0.0
      %v2081 = vmax.f32 %v2005, 0.0
      %v2082 = vmax.f32 %v2010, 0.0
      %v2083 = vmax.f32 %v2013, 0.0
      %v2084 = vmax.f32 %v2018, 0.0
      %v2085 = vmax.f32 %v2021, 0.0
      %v2086 = vmax.f32 %v2026, 0.0
      %v2087 = vmax.f32 %v2029, 0.0
      %v2088 = vmax.f32 %v2034, 0.0
      %v2089 = vmax.f32 %v2037, 0.0
      %v2090 = vmax.f32 %v2042, 0.0
      %v2091 = vmax.f32 %v2045, 0.0
      %v2092 = vmax.f32 %v2050, 0.0
      %v2093 = vmax.f32 %v2053, 0.0
      %v2094 = vmax.f32 %v2058, 0.0
      %v2095 = vmax.f32 %v2061, 0.0
      %v2096 = vld [vmem:[%s11] sm:$0xf]
      %v2097 = vld [vmem:[%s11 + $0x4] sm:$0xf]
      %v2098 = vld [vmem:[%s11 + $0x8] sm:$0xf]
      %v2099 = vld [vmem:[%s11 + $0xc] sm:$0xf]
      %v2100 = vld [vmem:[%s12] sm:$0x1]
      %v2101 = vpack.c.bf16 %v2065, %v2064
      %v2102 = vpack.c.bf16 %v2067, %v2066
      %v2103 = vpack.c.bf16 %v2069, %v2068
      %v2104 = vpack.c.bf16 %v2071, %v2070
      %v2105 = vpack.c.bf16 %v2073, %v2072
      %v2106 = vpack.c.bf16 %v2075, %v2074
      %v2107 = vpack.c.bf16 %v2077, %v2076
      %v2108 = vpack.c.bf16 %v2079, %v2078
      %v2109 = vpack.c.bf16 %v2081, %v2080
      %v2110 = vpack.c.bf16 %v2083, %v2082
      %v2111 = vpack.c.bf16 %v2085, %v2084
      %v2112 = vpack.c.bf16 %v2087, %v2086
      %v2113 = vpack.c.bf16 %v2089, %v2088
      %v2114 = vpack.c.bf16 %v2091, %v2090
      %v2115 = vpack.c.bf16 %v2093, %v2092
      %v2116 = vpack.c.bf16 %v2095, %v2094
      %v2118 = vlaneseq
      %v2119 = vshrl.u32 %v2118, 7
      %v2120 = vsub.s32 0, %v2119
      %v2121 = vrot.slane %v2100, %v2120
      %v2127 = vunpack.c.l.b16 %v2096
      %v2128 = vunpack.c.l.b16 %v2097
      %v2129 = vunpack.c.l.b16 %v2098
      %v2130 = vunpack.c.l.b16 %v2099
      %v2131 = vpack.c.b16 %v2128, %v2127
      %v2132 = vpack.c.b16 %v2130, %v2129
      %v2136 = vsel %vm732, %v2101, 0
      %v2139 = vsel %vm732, %v2102, 0
      %v2142 = vsel %vm732, %v2103, 0
      %v2145 = vsel %vm732, %v2104, 0
      %v2148 = vsel %vm732, %v2105, 0
      %v2151 = vsel %vm732, %v2106, 0
      %v2154 = vsel %vm732, %v2107, 0
      %v2157 = vsel %vm732, %v2108, 0
      %v2160 = vsel %vm732, %v2109, 0
      %v2163 = vsel %vm732, %v2110, 0
      %v2166 = vsel %vm732, %v2111, 0
      %v2169 = vsel %vm732, %v2112, 0
      %v2172 = vsel %vm732, %v2113, 0
      %v2175 = vsel %vm732, %v2114, 0
      %v2178 = vsel %vm732, %v2115, 0
      %v2181 = vsel %vm732, %v2116, 0
      %2183 = vmatprep.subr.bf16.mxu0 0
      %2184 = vmatpush1.bf16.msra.mxu0 %v2131
      %2185 = vmatprep.subr.bf16.mxu0 0
      %2186 = vmatpush1.bf16.msra.mxu0 %v2132
      %2187 = vmatprep.subr.bf16.mxu0 0
      %2188 = vmatpush1.bf16.msra.mxu0 0
      %2189 = vmatprep.subr.bf16.mxu0 0
      %2190 = vmatpush1.bf16.msra.mxu0 0
      %2191 = vmatprep.subr.bf16.mxu0 0
      %2192 = vmatpush1.bf16.msra.mxu0 0
      %2193 = vmatprep.subr.bf16.mxu0 0
      %2194 = vmatpush1.bf16.msra.mxu0 0
      %2195 = vmatprep.subr.bf16.mxu0 0
      %2196 = vmatpush1.bf16.msra.mxu0 0
      %2197 = vmatprep.subr.bf16.mxu0 0
      %2198 = vmatpush1.bf16.msra.mxu0 0
      %2199 = vmatprep.subr.bf16.mxu0 0
      %2200 = vmatpush1.bf16.msra.mxu0 0
      %2201 = vmatprep.subr.bf16.mxu0 0
      %2202 = vmatpush1.bf16.msra.mxu0 0
      %2203 = vmatprep.subr.bf16.mxu0 0
      %2204 = vmatpush1.bf16.msra.mxu0 0
      %2205 = vmatprep.subr.bf16.mxu0 0
      %2206 = vmatpush1.bf16.msra.mxu0 0
      %2207 = vmatprep.subr.bf16.mxu0 0
      %2208 = vmatpush1.bf16.msra.mxu0 0
      %2209 = vmatprep.subr.bf16.mxu0 0
      %2210 = vmatpush1.bf16.msra.mxu0 0
      %2211 = vmatprep.subr.bf16.mxu0 0
      %2212 = vmatpush1.bf16.msra.mxu0 0
      %2213 = vmatprep.subr.bf16.mxu0 0
      %2214 = vmatpush1.bf16.msra.mxu0 0
      %2215 = vmatprep.mubr.bf16.mxu0 0
      %2216 = vmatmul.mubr.bf16.gmra.mrb[0].mxu0 %v2136
      %v2217 = vpop.f32.mrb[0].mxu0
      %v2218 = vadd.f32 %v2121, %v2217
      %v2219 = vpop.f32.mrb[0].mxu0
      %v2220 = vpop.f32.mrb[0].mxu0
      %v2221 = vadd.f32 %v2121, %v2220
      %v2222 = vpop.f32.mrb[0].mxu0
      %2223 = vmatprep.mubr.bf16.mxu0 0
      %2224 = vmatmul.mubr.bf16.gmra.mrb[0].mxu0 %v2139
      %v2225 = vpop.f32.mrb[0].mxu0
      %v2226 = vadd.f32 %v2121, %v2225
      %v2227 = vpop.f32.mrb[0].mxu0
      %v2228 = vpop.f32.mrb[0].mxu0
      %v2229 = vadd.f32 %v2121, %v2228
      %v2230 = vpop.f32.mrb[0].mxu0
      %2231 = vmatprep.mubr.bf16.mxu0 0
      %2232 = vmatmul.mubr.bf16.gmra.mrb[0].mxu0 %v2142
      %v2233 = vpop.f32.mrb[0].mxu0
      %v2234 = vadd.f32 %v2121, %v2233
      %v2235 = vpop.f32.mrb[0].mxu0
      %v2236 = vpop.f32.mrb[0].mxu0
      %v2237 = vadd.f32 %v2121, %v2236
      %v2238 = vpop.f32.mrb[0].mxu0
      %2239 = vmatprep.mubr.bf16.mxu0 0
      %2240 = vmatmul.mubr.bf16.gmra.mrb[0].mxu0 %v2145
      %v2241 = vpop.f32.mrb[0].mxu0
      %v2242 = vadd.f32 %v2121, %v2241
      %v2243 = vpop.f32.mrb[0].mxu0
      %v2244 = vpop.f32.mrb[0].mxu0
      %v2245 = vadd.f32 %v2121, %v2244
      %v2246 = vpop.f32.mrb[0].mxu0
      %2247 = vmatprep.mubr.bf16.mxu0 0
      %2248 = vmatmul.mubr.bf16.gmra.mrb[0].mxu0 %v2148
      %v2249 = vpop.f32.mrb[0].mxu0
      %v2250 = vadd.f32 %v2121, %v2249
      %v2251 = vpop.f32.mrb[0].mxu0
      %v2252 = vpop.f32.mrb[0].mxu0
      %v2253 = vadd.f32 %v2121, %v2252
      %v2254 = vpop.f32.mrb[0].mxu0
      %2255 = vmatprep.mubr.bf16.mxu0 0
      %2256 = vmatmul.mubr.bf16.gmra.mrb[0].mxu0 %v2151
      %v2257 = vpop.f32.mrb[0].mxu0
      %v2258 = vadd.f32 %v2121, %v2257
      %v2259 = vpop.f32.mrb[0].mxu0
      %v2260 = vpop.f32.mrb[0].mxu0
      %v2261 = vadd.f32 %v2121, %v2260
      %v2262 = vpop.f32.mrb[0].mxu0
      %2263 = vmatprep.mubr.bf16.mxu0 0
      %2264 = vmatmul.mubr.bf16.gmra.mrb[0].mxu0 %v2154
      %v2265 = vpop.f32.mrb[0].mxu0
      %v2266 = vadd.f32 %v2121, %v2265
      %v2267 = vpop.f32.mrb[0].mxu0
      %v2268 = vpop.f32.mrb[0].mxu0
      %v2269 = vadd.f32 %v2121, %v2268
      %v2270 = vpop.f32.mrb[0].mxu0
      %2271 = vmatprep.mubr.bf16.mxu0 0
      %2272 = vmatmul.mubr.bf16.gmra.mrb[0].mxu0 %v2157
      %v2273 = vpop.f32.mrb[0].mxu0
      %v2274 = vadd.f32 %v2121, %v2273
      %v2275 = vpop.f32.mrb[0].mxu0
      %v2276 = vpop.f32.mrb[0].mxu0
      %v2277 = vadd.f32 %v2121, %v2276
      %v2278 = vpop.f32.mrb[0].mxu0
      %2279 = vmatprep.mubr.bf16.mxu0 0
      %2280 = vmatmul.mubr.bf16.gmra.mrb[0].mxu0 %v2160
      %v2281 = vpop.f32.mrb[0].mxu0
      %v2282 = vadd.f32 %v2121, %v2281
      %v2283 = vpop.f32.mrb[0].mxu0
      %v2284 = vpop.f32.mrb[0].mxu0
      %v2285 = vadd.f32 %v2121, %v2284
      %v2286 = vpop.f32.mrb[0].mxu0
      %2287 = vmatprep.mubr.bf16.mxu0 0
      %2288 = vmatmul.mubr.bf16.gmra.mrb[0].mxu0 %v2163
      %v2289 = vpop.f32.mrb[0].mxu0
      %v2290 = vadd.f32 %v2121, %v2289
      %v2291 = vpop.f32.mrb[0].mxu0
      %v2292 = vpop.f32.mrb[0].mxu0
      %v2293 = vadd.f32 %v2121, %v2292
      %v2294 = vpop.f32.mrb[0].mxu0
      %2295 = vmatprep.mubr.bf16.mxu0 0
      %2296 = vmatmul.mubr.bf16.gmra.mrb[0].mxu0 %v2166
      %v2297 = vpop.f32.mrb[0].mxu0
      %v2298 = vadd.f32 %v2121, %v2297
      %v2299 = vpop.f32.mrb[0].mxu0
      %v2300 = vpop.f32.mrb[0].mxu0
      %v2301 = vadd.f32 %v2121, %v2300
      %v2302 = vpop.f32.mrb[0].mxu0
      %2303 = vmatprep.mubr.bf16.mxu0 0
      %2304 = vmatmul.mubr.bf16.gmra.mrb[0].mxu0 %v2169
      %v2305 = vpop.f32.mrb[0].mxu0
      %v2306 = vadd.f32 %v2121, %v2305
      %v2307 = vpop.f32.mrb[0].mxu0
      %v2308 = vpop.f32.mrb[0].mxu0
      %v2309 = vadd.f32 %v2121, %v2308
      %v2310 = vpop.f32.mrb[0].mxu0
      %2311 = vmatprep.mubr.bf16.mxu0 0
      %2312 = vmatmul.mubr.bf16.gmra.mrb[0].mxu0 %v2172
      %v2313 = vpop.f32.mrb[0].mxu0
      %v2314 = vadd.f32 %v2121, %v2313
      %v2315 = vpop.f32.mrb[0].mxu0
      %v2316 = vpop.f32.mrb[0].mxu0
      %v2317 = vadd.f32 %v2121, %v2316
      %v2318 = vpop.f32.mrb[0].mxu0
      %2319 = vmatprep.mubr.bf16.mxu0 0
      %2320 = vmatmul.mubr.bf16.gmra.mrb[0].mxu0 %v2175
      %v2321 = vpop.f32.mrb[0].mxu0
      %v2322 = vadd.f32 %v2121, %v2321
      %v2323 = vpop.f32.mrb[0].mxu0
      %v2324 = vpop.f32.mrb[0].mxu0
      %v2325 = vadd.f32 %v2121, %v2324
      %v2326 = vpop.f32.mrb[0].mxu0
      %2327 = vmatprep.mubr.bf16.mxu0 0
      %2328 = vmatmul.mubr.bf16.gmra.mrb[0].mxu0 %v2178
      %v2329 = vpop.f32.mrb[0].mxu0
      %v2330 = vadd.f32 %v2121, %v2329
      %v2331 = vpop.f32.mrb[0].mxu0
      %v2332 = vpop.f32.mrb[0].mxu0
      %v2333 = vadd.f32 %v2121, %v2332
      %v2334 = vpop.f32.mrb[0].mxu0
      %2335 = vmatprep.mubr.bf16.mxu0 0
      %2336 = vmatmul.mubr.bf16.gmra.mrb[0].mxu0 %v2181
      %v2337 = vpop.f32.mrb[0].mxu0
      %v2338 = vadd.f32 %v2121, %v2337
      %v2339 = vpop.f32.mrb[0].mxu0
      %v2340 = vpop.f32.mrb[0].mxu0
      %v2341 = vadd.f32 %v2121, %v2340
      %v2342 = vpop.f32.mrb[0].mxu0
      %2343 = vdwg.mxu0
      %v2344 = vld [vmem:[%s13] sm:$0xf]
      %v2345 = vld [vmem:[%s13 + $0x4] sm:$0xf]
      %v2346 = vld [vmem:[%s14] sm:$0x1]
      %v2347 = vpack.c.bf16 %v2221, %v2218
      %v2348 = vpack.c.bf16 %v2229, %v2226
      %v2349 = vpack.c.bf16 %v2237, %v2234
      %v2350 = vpack.c.bf16 %v2245, %v2242
      %v2351 = vpack.c.bf16 %v2253, %v2250
      %v2352 = vpack.c.bf16 %v2261, %v2258
      %v2353 = vpack.c.bf16 %v2269, %v2266
      %v2354 = vpack.c.bf16 %v2277, %v2274
      %v2355 = vpack.c.bf16 %v2285, %v2282
      %v2356 = vpack.c.bf16 %v2293, %v2290
      %v2357 = vpack.c.bf16 %v2301, %v2298
      %v2358 = vpack.c.bf16 %v2309, %v2306
      %v2359 = vpack.c.bf16 %v2317, %v2314
      %v2360 = vpack.c.bf16 %v2325, %v2322
      %v2361 = vpack.c.bf16 %v2333, %v2330
      %v2362 = vpack.c.bf16 %v2341, %v2338
      %v2364 = vlaneseq
      %v2365 = vshrl.u32 %v2364, 7
      %v2366 = vsub.s32 0, %v2365
      %v2367 = vrot.slane %v2346, %v2366
      %v2371 = vunpack.c.l.b16 %v2344
      %v2372 = vunpack.c.l.b16 %v2345
      %v2373 = vpack.c.b16 %v2372, %v2371
      %vm2375 = vcmask 130048
      %v2377 = vsel %vm2375, %v2347, 0
      %v2380 = vsel %vm2375, %v2348, 0
      %v2383 = vsel %vm2375, %v2349, 0
      %v2386 = vsel %vm2375, %v2350, 0
      %v2389 = vsel %vm2375, %v2351, 0
      %v2392 = vsel %vm2375, %v2352, 0
      %v2395 = vsel %vm2375, %v2353, 0
      %v2398 = vsel %vm2375, %v2354, 0
      %v2401 = vsel %vm2375, %v2355, 0
      %v2404 = vsel %vm2375, %v2356, 0
      %v2407 = vsel %vm2375, %v2357, 0
      %v2410 = vsel %vm2375, %v2358, 0
      %v2413 = vsel %vm2375, %v2359, 0
      %v2416 = vsel %vm2375, %v2360, 0
      %v2419 = vsel %vm2375, %v2361, 0
      %v2422 = vsel %vm2375, %v2362, 0
      %2424 = vmatprep.subr.bf16.mxu0 0
      %2425 = vmatpush1.bf16.msra.mxu0 %v2373
      %2426 = vmatprep.subr.bf16.mxu0 0
      %2427 = vmatpush1.bf16.msra.mxu0 0
      %2428 = vmatprep.subr.bf16.mxu0 0
      %2429 = vmatpush1.bf16.msra.mxu0 0
      %2430 = vmatprep.subr.bf16.mxu0 0
      %2431 = vmatpush1.bf16.msra.mxu0 0
      %2432 = vmatprep.subr.bf16.mxu0 0
      %2433 = vmatpush1.bf16.msra.mxu0 0
      %2434 = vmatprep.subr.bf16.mxu0 0
      %2435 = vmatpush1.bf16.msra.mxu0 0
      %2436 = vmatprep.subr.bf16.mxu0 0
      %2437 = vmatpush1.bf16.msra.mxu0 0
      %2438 = vmatprep.subr.bf16.mxu0 0
      %2439 = vmatpush1.bf16.msra.mxu0 0
      %2440 = vmatprep.subr.bf16.mxu0 0
      %2441 = vmatpush1.bf16.msra.mxu0 0
      %2442 = vmatprep.subr.bf16.mxu0 0
      %2443 = vmatpush1.bf16.msra.mxu0 0
      %2444 = vmatprep.subr.bf16.mxu0 0
      %2445 = vmatpush1.bf16.msra.mxu0 0
      %2446 = vmatprep.subr.bf16.mxu0 0
      %2447 = vmatpush1.bf16.msra.mxu0 0
      %2448 = vmatprep.subr.bf16.mxu0 0
      %2449 = vmatpush1.bf16.msra.mxu0 0
      %2450 = vmatprep.subr.bf16.mxu0 0
      %2451 = vmatpush1.bf16.msra.mxu0 0
      %2452 = vmatprep.subr.bf16.mxu0 0
      %2453 = vmatpush1.bf16.msra.mxu0 0
      %2454 = vmatprep.subr.bf16.mxu0 0
      %2455 = vmatpush1.bf16.msra.mxu0 0
      %2456 = vmatprep.mubr.bf16.mxu0 0
      %2457 = vmatmul.mubr.bf16.gmra.mrb[0].mxu0 %v2377
      %v2458 = vpop.f32.mrb[0].mxu0
      %v2459 = vadd.f32 %v2367, %v2458
      %v2460 = vpop.f32.mrb[0].mxu0
      %v2461 = vpop.f32.mrb[0].mxu0
      %v2462 = vadd.f32 %v2367, %v2461
      %v2463 = vpop.f32.mrb[0].mxu0
      %2464 = vmatprep.mubr.bf16.mxu0 0
      %2465 = vmatmul.mubr.bf16.gmra.mrb[0].mxu0 %v2380
      %v2466 = vpop.f32.mrb[0].mxu0
      %v2467 = vadd.f32 %v2367, %v2466
      %v2468 = vpop.f32.mrb[0].mxu0
      %v2469 = vpop.f32.mrb[0].mxu0
      %v2470 = vadd.f32 %v2367, %v2469
      %v2471 = vpop.f32.mrb[0].mxu0
      %2472 = vmatprep.mubr.bf16.mxu0 0
      %2473 = vmatmul.mubr.bf16.gmra.mrb[0].mxu0 %v2383
      %v2474 = vpop.f32.mrb[0].mxu0
      %v2475 = vadd.f32 %v2367, %v2474
      %v2476 = vpop.f32.mrb[0].mxu0
      %v2477 = vpop.f32.mrb[0].mxu0
      %v2478 = vadd.f32 %v2367, %v2477
      %v2479 = vpop.f32.mrb[0].mxu0
      %2480 = vmatprep.mubr.bf16.mxu0 0
      %2481 = vmatmul.mubr.bf16.gmra.mrb[0].mxu0 %v2386
      %v2482 = vpop.f32.mrb[0].mxu0
      %v2483 = vadd.f32 %v2367, %v2482
      %v2484 = vpop.f32.mrb[0].mxu0
      %v2485 = vpop.f32.mrb[0].mxu0
      %v2486 = vadd.f32 %v2367, %v2485
      %v2487 = vpop.f32.mrb[0].mxu0
      %2488 = vmatprep.mubr.bf16.mxu0 0
      %2489 = vmatmul.mubr.bf16.gmra.mrb[0].mxu0 %v2389
      %v2490 = vpop.f32.mrb[0].mxu0
      %v2491 = vadd.f32 %v2367, %v2490
      %v2492 = vpop.f32.mrb[0].mxu0
      %v2493 = vpop.f32.mrb[0].mxu0
      %v2494 = vadd.f32 %v2367, %v2493
      %v2495 = vpop.f32.mrb[0].mxu0
      %2496 = vmatprep.mubr.bf16.mxu0 0
      %2497 = vmatmul.mubr.bf16.gmra.mrb[0].mxu0 %v2392
      %v2498 = vpop.f32.mrb[0].mxu0
      %v2499 = vadd.f32 %v2367, %v2498
      %v2500 = vpop.f32.mrb[0].mxu0
      %v2501 = vpop.f32.mrb[0].mxu0
      %v2502 = vadd.f32 %v2367, %v2501
      %v2503 = vpop.f32.mrb[0].mxu0
      %2504 = vmatprep.mubr.bf16.mxu0 0
      %2505 = vmatmul.mubr.bf16.gmra.mrb[0].mxu0 %v2395
      %v2506 = vpop.f32.mrb[0].mxu0
      %v2507 = vadd.f32 %v2367, %v2506
      %v2508 = vpop.f32.mrb[0].mxu0
      %v2509 = vpop.f32.mrb[0].mxu0
      %v2510 = vadd.f32 %v2367, %v2509
      %v2511 = vpop.f32.mrb[0].mxu0
      %2512 = vmatprep.mubr.bf16.mxu0 0
      %2513 = vmatmul.mubr.bf16.gmra.mrb[0].mxu0 %v2398
      %v2514 = vpop.f32.mrb[0].mxu0
      %v2515 = vadd.f32 %v2367, %v2514
      %v2516 = vpop.f32.mrb[0].mxu0
      %v2517 = vpop.f32.mrb[0].mxu0
      %v2518 = vadd.f32 %v2367, %v2517
      %v2519 = vpop.f32.mrb[0].mxu0
      %2520 = vmatprep.mubr.bf16.mxu0 0
      %2521 = vmatmul.mubr.bf16.gmra.mrb[0].mxu0 %v2401
      %v2522 = vpop.f32.mrb[0].mxu0
      %v2523 = vadd.f32 %v2367, %v2522
      %v2524 = vpop.f32.mrb[0].mxu0
      %v2525 = vpop.f32.mrb[0].mxu0
      %v2526 = vadd.f32 %v2367, %v2525
      %v2527 = vpop.f32.mrb[0].mxu0
      %2528 = vmatprep.mubr.bf16.mxu0 0
      %2529 = vmatmul.mubr.bf16.gmra.mrb[0].mxu0 %v2404
      %v2530 = vpop.f32.mrb[0].mxu0
      %v2531 = vadd.f32 %v2367, %v2530
      %v2532 = vpop.f32.mrb[0].mxu0
      %v2533 = vpop.f32.mrb[0].mxu0
      %v2534 = vadd.f32 %v2367, %v2533
      %v2535 = vpop.f32.mrb[0].mxu0
      %2536 = vmatprep.mubr.bf16.mxu0 0
      %2537 = vmatmul.mubr.bf16.gmra.mrb[0].mxu0 %v2407
      %v2538 = vpop.f32.mrb[0].mxu0
      %v2539 = vadd.f32 %v2367, %v2538
      %v2540 = vpop.f32.mrb[0].mxu0
      %v2541 = vpop.f32.mrb[0].mxu0
      %v2542 = vadd.f32 %v2367, %v2541
      %v2543 = vpop.f32.mrb[0].mxu0
      %2544 = vmatprep.mubr.bf16.mxu0 0
      %2545 = vmatmul.mubr.bf16.gmra.mrb[0].mxu0 %v2410
      %v2546 = vpop.f32.mrb[0].mxu0
      %v2547 = vadd.f32 %v2367, %v2546
      %v2548 = vpop.f32.mrb[0].mxu0
      %v2549 = vpop.f32.mrb[0].mxu0
      %v2550 = vadd.f32 %v2367, %v2549
      %v2551 = vpop.f32.mrb[0].mxu0
      %2552 = vmatprep.mubr.bf16.mxu0 0
      %2553 = vmatmul.mubr.bf16.gmra.mrb[0].mxu0 %v2413
      %v2554 = vpop.f32.mrb[0].mxu0
      %v2555 = vadd.f32 %v2367, %v2554
      %v2556 = vpop.f32.mrb[0].mxu0
      %v2557 = vpop.f32.mrb[0].mxu0
      %v2558 = vadd.f32 %v2367, %v2557
      %v2559 = vpop.f32.mrb[0].mxu0
      %2560 = vmatprep.mubr.bf16.mxu0 0
      %2561 = vmatmul.mubr.bf16.gmra.mrb[0].mxu0 %v2416
      %v2562 = vpop.f32.mrb[0].mxu0
      %v2563 = vadd.f32 %v2367, %v2562
      %v2564 = vpop.f32.mrb[0].mxu0
      %v2565 = vpop.f32.mrb[0].mxu0
      %v2566 = vadd.f32 %v2367, %v2565
      %v2567 = vpop.f32.mrb[0].mxu0
      %2568 = vmatprep.mubr.bf16.mxu0 0
      %2569 = vmatmul.mubr.bf16.gmra.mrb[0].mxu0 %v2419
      %v2570 = vpop.f32.mrb[0].mxu0
      %v2571 = vadd.f32 %v2367, %v2570
      %v2572 = vpop.f32.mrb[0].mxu0
      %v2573 = vpop.f32.mrb[0].mxu0
      %v2574 = vadd.f32 %v2367, %v2573
      %v2575 = vpop.f32.mrb[0].mxu0
      %2576 = vmatprep.mubr.bf16.mxu0 0
      %2577 = vmatmul.mubr.bf16.gmra.mrb[0].mxu0 %v2422
      %v2578 = vpop.f32.mrb[0].mxu0
      %v2579 = vadd.f32 %v2367, %v2578
      %v2580 = vpop.f32.mrb[0].mxu0
      %v2581 = vpop.f32.mrb[0].mxu0
      %v2582 = vadd.f32 %v2367, %v2581
      %v2583 = vpop.f32.mrb[0].mxu0
      %2584 = vdwg.mxu0
      %v2585 = vmax.f32 %v2459, 0.0
      %v2586 = vmax.f32 %v2462, 0.0
      %v2587 = vmax.f32 %v2467, 0.0
      %v2588 = vmax.f32 %v2470, 0.0
      %v2589 = vmax.f32 %v2475, 0.0
      %v2590 = vmax.f32 %v2478, 0.0
      %v2591 = vmax.f32 %v2483, 0.0
      %v2592 = vmax.f32 %v2486, 0.0
      %v2593 = vmax.f32 %v2491, 0.0
      %v2594 = vmax.f32 %v2494, 0.0
      %v2595 = vmax.f32 %v2499, 0.0
      %v2596 = vmax.f32 %v2502, 0.0
      %v2597 = vmax.f32 %v2507, 0.0
      %v2598 = vmax.f32 %v2510, 0.0
      %v2599 = vmax.f32 %v2515, 0.0
      %v2600 = vmax.f32 %v2518, 0.0
      %v2601 = vmax.f32 %v2523, 0.0
      %v2602 = vmax.f32 %v2526, 0.0
      %v2603 = vmax.f32 %v2531, 0.0
      %v2604 = vmax.f32 %v2534, 0.0
      %v2605 = vmax.f32 %v2539, 0.0
      %v2606 = vmax.f32 %v2542, 0.0
      %v2607 = vmax.f32 %v2547, 0.0
      %v2608 = vmax.f32 %v2550, 0.0
      %v2609 = vmax.f32 %v2555, 0.0
      %v2610 = vmax.f32 %v2558, 0.0
      %v2611 = vmax.f32 %v2563, 0.0
      %v2612 = vmax.f32 %v2566, 0.0
      %v2613 = vmax.f32 %v2571, 0.0
      %v2614 = vmax.f32 %v2574, 0.0
      %v2615 = vmax.f32 %v2579, 0.0
      %v2616 = vmax.f32 %v2582, 0.0
      %v2617 = vld [vmem:[%s15] sm:$0xf]
      %v2618 = vld [vmem:[%s15 + $0x4] sm:$0xf]
      %v2619 = vld [vmem:[%s15 + $0x8] sm:$0xf]
      %v2620 = vld [vmem:[%s15 + $0xc] sm:$0xf]
      %v2621 = vld [vmem:[%s16] sm:$0x1]
      %v2622 = vpack.c.bf16 %v2586, %v2585
      %v2623 = vpack.c.bf16 %v2588, %v2587
      %v2624 = vpack.c.bf16 %v2590, %v2589
      %v2625 = vpack.c.bf16 %v2592, %v2591
      %v2626 = vpack.c.bf16 %v2594, %v2593
      %v2627 = vpack.c.bf16 %v2596, %v2595
      %v2628 = vpack.c.bf16 %v2598, %v2597
      %v2629 = vpack.c.bf16 %v2600, %v2599
      %v2630 = vpack.c.bf16 %v2602, %v2601
      %v2631 = vpack.c.bf16 %v2604, %v2603
      %v2632 = vpack.c.bf16 %v2606, %v2605
      %v2633 = vpack.c.bf16 %v2608, %v2607
      %v2634 = vpack.c.bf16 %v2610, %v2609
      %v2635 = vpack.c.bf16 %v2612, %v2611
      %v2636 = vpack.c.bf16 %v2614, %v2613
      %v2637 = vpack.c.bf16 %v2616, %v2615
      %v2639 = vlaneseq
      %v2640 = vshrl.u32 %v2639, 7
      %v2641 = vsub.s32 0, %v2640
      %v2642 = vrot.slane %v2621, %v2641
      %v2648 = vunpack.c.l.b16 %v2617
      %v2649 = vunpack.c.l.b16 %v2618
      %v2650 = vunpack.c.l.b16 %v2619
      %v2651 = vunpack.c.l.b16 %v2620
      %v2652 = vpack.c.b16 %v2649, %v2648
      %v2653 = vpack.c.b16 %v2651, %v2650
      %v2657 = vsel %vm732, %v2622, 0
      %v2660 = vsel %vm732, %v2623, 0
      %v2663 = vsel %vm732, %v2624, 0
      %v2666 = vsel %vm732, %v2625, 0
      %v2669 = vsel %vm732, %v2626, 0
      %v2672 = vsel %vm732, %v2627, 0
      %v2675 = vsel %vm732, %v2628, 0
      %v2678 = vsel %vm732, %v2629, 0
      %v2681 = vsel %vm732, %v2630, 0
      %v2684 = vsel %vm732, %v2631, 0
      %v2687 = vsel %vm732, %v2632, 0
      %v2690 = vsel %vm732, %v2633, 0
      %v2693 = vsel %vm732, %v2634, 0
      %v2696 = vsel %vm732, %v2635, 0
      %v2699 = vsel %vm732, %v2636, 0
      %v2702 = vsel %vm732, %v2637, 0
      %2704 = vmatprep.subr.bf16.mxu0 0
      %2705 = vmatpush1.bf16.msra.mxu0 %v2652
      %2706 = vmatprep.subr.bf16.mxu0 0
      %2707 = vmatpush1.bf16.msra.mxu0 %v2653
      %2708 = vmatprep.subr.bf16.mxu0 0
      %2709 = vmatpush1.bf16.msra.mxu0 0
      %2710 = vmatprep.subr.bf16.mxu0 0
      %2711 = vmatpush1.bf16.msra.mxu0 0
      %2712 = vmatprep.subr.bf16.mxu0 0
      %2713 = vmatpush1.bf16.msra.mxu0 0
      %2714 = vmatprep.subr.bf16.mxu0 0
      %2715 = vmatpush1.bf16.msra.mxu0 0
      %2716 = vmatprep.subr.bf16.mxu0 0
      %2717 = vmatpush1.bf16.msra.mxu0 0
      %2718 = vmatprep.subr.bf16.mxu0 0
      %2719 = vmatpush1.bf16.msra.mxu0 0
      %2720 = vmatprep.subr.bf16.mxu0 0
      %2721 = vmatpush1.bf16.msra.mxu0 0
      %2722 = vmatprep.subr.bf16.mxu0 0
      %2723 = vmatpush1.bf16.msra.mxu0 0
      %2724 = vmatprep.subr.bf16.mxu0 0
      %2725 = vmatpush1.bf16.msra.mxu0 0
      %2726 = vmatprep.subr.bf16.mxu0 0
      %2727 = vmatpush1.bf16.msra.mxu0 0
      %2728 = vmatprep.subr.bf16.mxu0 0
      %2729 = vmatpush1.bf16.msra.mxu0 0
      %2730 = vmatprep.subr.bf16.mxu0 0
      %2731 = vmatpush1.bf16.msra.mxu0 0
      %2732 = vmatprep.subr.bf16.mxu0 0
      %2733 = vmatpush1.bf16.msra.mxu0 0
      %2734 = vmatprep.subr.bf16.mxu0 0
      %2735 = vmatpush1.bf16.msra.mxu0 0
      %2736 = vmatprep.mubr.bf16.mxu0 0
      %2737 = vmatmul.mubr.bf16.gmra.mrb[0].mxu0 %v2657
      %v2738 = vpop.f32.mrb[0].mxu0
      %v2739 = vadd.f32 %v2642, %v2738
      %v2740 = vpop.f32.mrb[0].mxu0
      %v2741 = vpop.f32.mrb[0].mxu0
      %v2742 = vadd.f32 %v2642, %v2741
      %v2743 = vpop.f32.mrb[0].mxu0
      %2744 = vmatprep.mubr.bf16.mxu0 0
      %2745 = vmatmul.mubr.bf16.gmra.mrb[0].mxu0 %v2660
      %v2746 = vpop.f32.mrb[0].mxu0
      %v2747 = vadd.f32 %v2642, %v2746
      %v2748 = vpop.f32.mrb[0].mxu0
      %v2749 = vpop.f32.mrb[0].mxu0
      %v2750 = vadd.f32 %v2642, %v2749
      %v2751 = vpop.f32.mrb[0].mxu0
      %2752 = vmatprep.mubr.bf16.mxu0 0
      %2753 = vmatmul.mubr.bf16.gmra.mrb[0].mxu0 %v2663
      %v2754 = vpop.f32.mrb[0].mxu0
      %v2755 = vadd.f32 %v2642, %v2754
      %v2756 = vpop.f32.mrb[0].mxu0
      %v2757 = vpop.f32.mrb[0].mxu0
      %v2758 = vadd.f32 %v2642, %v2757
      %v2759 = vpop.f32.mrb[0].mxu0
      %2760 = vmatprep.mubr.bf16.mxu0 0
      %2761 = vmatmul.mubr.bf16.gmra.mrb[0].mxu0 %v2666
      %v2762 = vpop.f32.mrb[0].mxu0
      %v2763 = vadd.f32 %v2642, %v2762
      %v2764 = vpop.f32.mrb[0].mxu0
      %v2765 = vpop.f32.mrb[0].mxu0
      %v2766 = vadd.f32 %v2642, %v2765
      %v2767 = vpop.f32.mrb[0].mxu0
      %2768 = vmatprep.mubr.bf16.mxu0 0
      %2769 = vmatmul.mubr.bf16.gmra.mrb[0].mxu0 %v2669
      %v2770 = vpop.f32.mrb[0].mxu0
      %v2771 = vadd.f32 %v2642, %v2770
      %v2772 = vpop.f32.mrb[0].mxu0
      %v2773 = vpop.f32.mrb[0].mxu0
      %v2774 = vadd.f32 %v2642, %v2773
      %v2775 = vpop.f32.mrb[0].mxu0
      %2776 = vmatprep.mubr.bf16.mxu0 0
      %2777 = vmatmul.mubr.bf16.gmra.mrb[0].mxu0 %v2672
      %v2778 = vpop.f32.mrb[0].mxu0
      %v2779 = vadd.f32 %v2642, %v2778
      %v2780 = vpop.f32.mrb[0].mxu0
      %v2781 = vpop.f32.mrb[0].mxu0
      %v2782 = vadd.f32 %v2642, %v2781
      %v2783 = vpop.f32.mrb[0].mxu0
      %2784 = vmatprep.mubr.bf16.mxu0 0
      %2785 = vmatmul.mubr.bf16.gmra.mrb[0].mxu0 %v2675
      %v2786 = vpop.f32.mrb[0].mxu0
      %v2787 = vadd.f32 %v2642, %v2786
      %v2788 = vpop.f32.mrb[0].mxu0
      %v2789 = vpop.f32.mrb[0].mxu0
      %v2790 = vadd.f32 %v2642, %v2789
      %v2791 = vpop.f32.mrb[0].mxu0
      %2792 = vmatprep.mubr.bf16.mxu0 0
      %2793 = vmatmul.mubr.bf16.gmra.mrb[0].mxu0 %v2678
      %v2794 = vpop.f32.mrb[0].mxu0
      %v2795 = vadd.f32 %v2642, %v2794
      %v2796 = vpop.f32.mrb[0].mxu0
      %v2797 = vpop.f32.mrb[0].mxu0
      %v2798 = vadd.f32 %v2642, %v2797
      %v2799 = vpop.f32.mrb[0].mxu0
      %2800 = vmatprep.mubr.bf16.mxu0 0
      %2801 = vmatmul.mubr.bf16.gmra.mrb[0].mxu0 %v2681
      %v2802 = vpop.f32.mrb[0].mxu0
      %v2803 = vadd.f32 %v2642, %v2802
      %v2804 = vpop.f32.mrb[0].mxu0
      %v2805 = vpop.f32.mrb[0].mxu0
      %v2806 = vadd.f32 %v2642, %v2805
      %v2807 = vpop.f32.mrb[0].mxu0
      %2808 = vmatprep.mubr.bf16.mxu0 0
      %2809 = vmatmul.mubr.bf16.gmra.mrb[0].mxu0 %v2684
      %v2810 = vpop.f32.mrb[0].mxu0
      %v2811 = vadd.f32 %v2642, %v2810
      %v2812 = vpop.f32.mrb[0].mxu0
      %v2813 = vpop.f32.mrb[0].mxu0
      %v2814 = vadd.f32 %v2642, %v2813
      %v2815 = vpop.f32.mrb[0].mxu0
      %2816 = vmatprep.mubr.bf16.mxu0 0
      %2817 = vmatmul.mubr.bf16.gmra.mrb[0].mxu0 %v2687
      %v2818 = vpop.f32.mrb[0].mxu0
      %v2819 = vadd.f32 %v2642, %v2818
      %v2820 = vpop.f32.mrb[0].mxu0
      %v2821 = vpop.f32.mrb[0].mxu0
      %v2822 = vadd.f32 %v2642, %v2821
      %v2823 = vpop.f32.mrb[0].mxu0
      %2824 = vmatprep.mubr.bf16.mxu0 0
      %2825 = vmatmul.mubr.bf16.gmra.mrb[0].mxu0 %v2690
      %v2826 = vpop.f32.mrb[0].mxu0
      %v2827 = vadd.f32 %v2642, %v2826
      %v2828 = vpop.f32.mrb[0].mxu0
      %v2829 = vpop.f32.mrb[0].mxu0
      %v2830 = vadd.f32 %v2642, %v2829
      %v2831 = vpop.f32.mrb[0].mxu0
      %2832 = vmatprep.mubr.bf16.mxu0 0
      %2833 = vmatmul.mubr.bf16.gmra.mrb[0].mxu0 %v2693
      %v2834 = vpop.f32.mrb[0].mxu0
      %v2835 = vadd.f32 %v2642, %v2834
      %v2836 = vpop.f32.mrb[0].mxu0
      %v2837 = vpop.f32.mrb[0].mxu0
      %v2838 = vadd.f32 %v2642, %v2837
      %v2839 = vpop.f32.mrb[0].mxu0
      %2840 = vmatprep.mubr.bf16.mxu0 0
      %2841 = vmatmul.mubr.bf16.gmra.mrb[0].mxu0 %v2696
      %v2842 = vpop.f32.mrb[0].mxu0
      %v2843 = vadd.f32 %v2642, %v2842
      %v2844 = vpop.f32.mrb[0].mxu0
      %v2845 = vpop.f32.mrb[0].mxu0
      %v2846 = vadd.f32 %v2642, %v2845
      %v2847 = vpop.f32.mrb[0].mxu0
      %2848 = vmatprep.mubr.bf16.mxu0 0
      %2849 = vmatmul.mubr.bf16.gmra.mrb[0].mxu0 %v2699
      %v2850 = vpop.f32.mrb[0].mxu0
      %v2851 = vadd.f32 %v2642, %v2850
      %v2852 = vpop.f32.mrb[0].mxu0
      %v2853 = vpop.f32.mrb[0].mxu0
      %v2854 = vadd.f32 %v2642, %v2853
      %v2855 = vpop.f32.mrb[0].mxu0
      %2856 = vmatprep.mubr.bf16.mxu0 0
      %2857 = vmatmul.mubr.bf16.gmra.mrb[0].mxu0 %v2702
      %v2858 = vpop.f32.mrb[0].mxu0
      %v2859 = vadd.f32 %v2642, %v2858
      %v2860 = vpop.f32.mrb[0].mxu0
      %v2861 = vpop.f32.mrb[0].mxu0
      %v2862 = vadd.f32 %v2642, %v2861
      %v2863 = vpop.f32.mrb[0].mxu0
      %2864 = vdwg.mxu0
      %v2865 = vmax.f32 %v2739, 0.0
      %v2866 = vmax.f32 %v2742, 0.0
      %v2867 = vmax.f32 %v2747, 0.0
      %v2868 = vmax.f32 %v2750, 0.0
      %v2869 = vmax.f32 %v2755, 0.0
      %v2870 = vmax.f32 %v2758, 0.0
      %v2871 = vmax.f32 %v2763, 0.0
      %v2872 = vmax.f32 %v2766, 0.0
      %v2873 = vmax.f32 %v2771, 0.0
      %v2874 = vmax.f32 %v2774, 0.0
      %v2875 = vmax.f32 %v2779, 0.0
      %v2876 = vmax.f32 %v2782, 0.0
      %v2877 = vmax.f32 %v2787, 0.0
      %v2878 = vmax.f32 %v2790, 0.0
      %v2879 = vmax.f32 %v2795, 0.0
      %v2880 = vmax.f32 %v2798, 0.0
      %v2881 = vmax.f32 %v2803, 0.0
      %v2882 = vmax.f32 %v2806, 0.0
      %v2883 = vmax.f32 %v2811, 0.0
      %v2884 = vmax.f32 %v2814, 0.0
      %v2885 = vmax.f32 %v2819, 0.0
      %v2886 = vmax.f32 %v2822, 0.0
      %v2887 = vmax.f32 %v2827, 0.0
      %v2888 = vmax.f32 %v2830, 0.0
      %v2889 = vmax.f32 %v2835, 0.0
      %v2890 = vmax.f32 %v2838, 0.0
      %v2891 = vmax.f32 %v2843, 0.0
      %v2892 = vmax.f32 %v2846, 0.0
      %v2893 = vmax.f32 %v2851, 0.0
      %v2894 = vmax.f32 %v2854, 0.0
      %v2895 = vmax.f32 %v2859, 0.0
      %v2896 = vmax.f32 %v2862, 0.0
      %v2897 = vld [vmem:[%s17] sm:$0xf]
      %v2898 = vld [vmem:[%s17 + $0x4] sm:$0xf]
      %v2899 = vld [vmem:[%s18] sm:$0x1]
      %v2900 = vpack.c.bf16 %v2866, %v2865
      %v2901 = vpack.c.bf16 %v2868, %v2867
      %v2902 = vpack.c.bf16 %v2870, %v2869
      %v2903 = vpack.c.bf16 %v2872, %v2871
      %v2904 = vpack.c.bf16 %v2874, %v2873
      %v2905 = vpack.c.bf16 %v2876, %v2875
      %v2906 = vpack.c.bf16 %v2878, %v2877
      %v2907 = vpack.c.bf16 %v2880, %v2879
      %v2908 = vpack.c.bf16 %v2882, %v2881
      %v2909 = vpack.c.bf16 %v2884, %v2883
      %v2910 = vpack.c.bf16 %v2886, %v2885
      %v2911 = vpack.c.bf16 %v2888, %v2887
      %v2912 = vpack.c.bf16 %v2890, %v2889
      %v2913 = vpack.c.bf16 %v2892, %v2891
      %v2914 = vpack.c.bf16 %v2894, %v2893
      %v2915 = vpack.c.bf16 %v2896, %v2895
      %v2917 = vlaneseq
      %v2918 = vshrl.u32 %v2917, 7
      %v2919 = vsub.s32 0, %v2918
      %v2920 = vrot.slane %v2899, %v2919
      %v2924 = vunpack.c.l.b16 %v2897
      %v2925 = vunpack.c.l.b16 %v2898
      %v2926 = vpack.c.b16 %v2925, %v2924
      %v2929 = vsel %vm2375, %v2900, 0
      %v2932 = vsel %vm2375, %v2901, 0
      %v2935 = vsel %vm2375, %v2902, 0
      %v2938 = vsel %vm2375, %v2903, 0
      %v2941 = vsel %vm2375, %v2904, 0
      %v2944 = vsel %vm2375, %v2905, 0
      %v2947 = vsel %vm2375, %v2906, 0
      %v2950 = vsel %vm2375, %v2907, 0
      %v2953 = vsel %vm2375, %v2908, 0
      %v2956 = vsel %vm2375, %v2909, 0
      %v2959 = vsel %vm2375, %v2910, 0
      %v2962 = vsel %vm2375, %v2911, 0
      %v2965 = vsel %vm2375, %v2912, 0
      %v2968 = vsel %vm2375, %v2913, 0
      %v2971 = vsel %vm2375, %v2914, 0
      %v2974 = vsel %vm2375, %v2915, 0
      %2976 = vmatprep.subr.bf16.mxu0 0
      %2977 = vmatpush1.bf16.msra.mxu0 %v2926
      %2978 = vmatprep.subr.bf16.mxu0 0
      %2979 = vmatpush1.bf16.msra.mxu0 0
      %2980 = vmatprep.subr.bf16.mxu0 0
      %2981 = vmatpush1.bf16.msra.mxu0 0
      %2982 = vmatprep.subr.bf16.mxu0 0
      %2983 = vmatpush1.bf16.msra.mxu0 0
      %2984 = vmatprep.subr.bf16.mxu0 0
      %2985 = vmatpush1.bf16.msra.mxu0 0
      %2986 = vmatprep.subr.bf16.mxu0 0
      %2987 = vmatpush1.bf16.msra.mxu0 0
      %2988 = vmatprep.subr.bf16.mxu0 0
      %2989 = vmatpush1.bf16.msra.mxu0 0
      %2990 = vmatprep.subr.bf16.mxu0 0
      %2991 = vmatpush1.bf16.msra.mxu0 0
      %2992 = vmatprep.subr.bf16.mxu0 0
      %2993 = vmatpush1.bf16.msra.mxu0 0
      %2994 = vmatprep.subr.bf16.mxu0 0
      %2995 = vmatpush1.bf16.msra.mxu0 0
      %2996 = vmatprep.subr.bf16.mxu0 0
      %2997 = vmatpush1.bf16.msra.mxu0 0
      %2998 = vmatprep.subr.bf16.mxu0 0
      %2999 = vmatpush1.bf16.msra.mxu0 0
      %3000 = vmatprep.subr.bf16.mxu0 0
      %3001 = vmatpush1.bf16.msra.mxu0 0
      %3002 = vmatprep.subr.bf16.mxu0 0
      %3003 = vmatpush1.bf16.msra.mxu0 0
      %3004 = vmatprep.subr.bf16.mxu0 0
      %3005 = vmatpush1.bf16.msra.mxu0 0
      %3006 = vmatprep.subr.bf16.mxu0 0
      %3007 = vmatpush1.bf16.msra.mxu0 0
      %3008 = vmatprep.mubr.bf16.mxu0 0
      %3009 = vmatmul.mubr.bf16.gmra.mrb[0].mxu0 %v2929
      %v3010 = vpop.f32.mrb[0].mxu0
      %v3011 = vadd.f32 %v2920, %v3010
      %v3012 = vpop.f32.mrb[0].mxu0
      %v3013 = vpop.f32.mrb[0].mxu0
      %v3014 = vadd.f32 %v2920, %v3013
      %v3015 = vpop.f32.mrb[0].mxu0
      %3016 = vmatprep.mubr.bf16.mxu0 0
      %3017 = vmatmul.mubr.bf16.gmra.mrb[0].mxu0 %v2932
      %v3018 = vpop.f32.mrb[0].mxu0
      %v3019 = vadd.f32 %v2920, %v3018
      %v3020 = vpop.f32.mrb[0].mxu0
      %v3021 = vpop.f32.mrb[0].mxu0
      %v3022 = vadd.f32 %v2920, %v3021
      %v3023 = vpop.f32.mrb[0].mxu0
      %3024 = vmatprep.mubr.bf16.mxu0 0
      %3025 = vmatmul.mubr.bf16.gmra.mrb[0].mxu0 %v2935
      %v3026 = vpop.f32.mrb[0].mxu0
      %v3027 = vadd.f32 %v2920, %v3026
      %v3028 = vpop.f32.mrb[0].mxu0
      %v3029 = vpop.f32.mrb[0].mxu0
      %v3030 = vadd.f32 %v2920, %v3029
      %v3031 = vpop.f32.mrb[0].mxu0
      %3032 = vmatprep.mubr.bf16.mxu0 0
      %3033 = vmatmul.mubr.bf16.gmra.mrb[0].mxu0 %v2938
      %v3034 = vpop.f32.mrb[0].mxu0
      %v3035 = vadd.f32 %v2920, %v3034
      %v3036 = vpop.f32.mrb[0].mxu0
      %v3037 = vpop.f32.mrb[0].mxu0
      %v3038 = vadd.f32 %v2920, %v3037
      %v3039 = vpop.f32.mrb[0].mxu0
      %3040 = vmatprep.mubr.bf16.mxu0 0
      %3041 = vmatmul.mubr.bf16.gmra.mrb[0].mxu0 %v2941
      %v3042 = vpop.f32.mrb[0].mxu0
      %v3043 = vadd.f32 %v2920, %v3042
      %v3044 = vpop.f32.mrb[0].mxu0
      %v3045 = vpop.f32.mrb[0].mxu0
      %v3046 = vadd.f32 %v2920, %v3045
      %v3047 = vpop.f32.mrb[0].mxu0
      %3048 = vmatprep.mubr.bf16.mxu0 0
      %3049 = vmatmul.mubr.bf16.gmra.mrb[0].mxu0 %v2944
      %v3050 = vpop.f32.mrb[0].mxu0
      %v3051 = vadd.f32 %v2920, %v3050
      %v3052 = vpop.f32.mrb[0].mxu0
      %v3053 = vpop.f32.mrb[0].mxu0
      %v3054 = vadd.f32 %v2920, %v3053
      %v3055 = vpop.f32.mrb[0].mxu0
      %3056 = vmatprep.mubr.bf16.mxu0 0
      %3057 = vmatmul.mubr.bf16.gmra.mrb[0].mxu0 %v2947
      %v3058 = vpop.f32.mrb[0].mxu0
      %v3059 = vadd.f32 %v2920, %v3058
      %v3060 = vpop.f32.mrb[0].mxu0
      %v3061 = vpop.f32.mrb[0].mxu0
      %v3062 = vadd.f32 %v2920, %v3061
      %v3063 = vpop.f32.mrb[0].mxu0
      %3064 = vmatprep.mubr.bf16.mxu0 0
      %3065 = vmatmul.mubr.bf16.gmra.mrb[0].mxu0 %v2950
      %v3066 = vpop.f32.mrb[0].mxu0
      %v3067 = vadd.f32 %v2920, %v3066
      %v3068 = vpop.f32.mrb[0].mxu0
      %v3069 = vpop.f32.mrb[0].mxu0
      %v3070 = vadd.f32 %v2920, %v3069
      %v3071 = vpop.f32.mrb[0].mxu0
      %3072 = vmatprep.mubr.bf16.mxu0 0
      %3073 = vmatmul.mubr.bf16.gmra.mrb[0].mxu0 %v2953
      %v3074 = vpop.f32.mrb[0].mxu0
      %v3075 = vadd.f32 %v2920, %v3074
      %v3076 = vpop.f32.mrb[0].mxu0
      %v3077 = vpop.f32.mrb[0].mxu0
      %v3078 = vadd.f32 %v2920, %v3077
      %v3079 = vpop.f32.mrb[0].mxu0
      %3080 = vmatprep.mubr.bf16.mxu0 0
      %3081 = vmatmul.mubr.bf16.gmra.mrb[0].mxu0 %v2956
      %v3082 = vpop.f32.mrb[0].mxu0
      %v3083 = vadd.f32 %v2920, %v3082
      %v3084 = vpop.f32.mrb[0].mxu0
      %v3085 = vpop.f32.mrb[0].mxu0
      %v3086 = vadd.f32 %v2920, %v3085
      %v3087 = vpop.f32.mrb[0].mxu0
      %3088 = vmatprep.mubr.bf16.mxu0 0
      %3089 = vmatmul.mubr.bf16.gmra.mrb[0].mxu0 %v2959
      %v3090 = vpop.f32.mrb[0].mxu0
      %v3091 = vadd.f32 %v2920, %v3090
      %v3092 = vpop.f32.mrb[0].mxu0
      %v3093 = vpop.f32.mrb[0].mxu0
      %v3094 = vadd.f32 %v2920, %v3093
      %v3095 = vpop.f32.mrb[0].mxu0
      %3096 = vmatprep.mubr.bf16.mxu0 0
      %3097 = vmatmul.mubr.bf16.gmra.mrb[0].mxu0 %v2962
      %v3098 = vpop.f32.mrb[0].mxu0
      %v3099 = vadd.f32 %v2920, %v3098
      %v3100 = vpop.f32.mrb[0].mxu0
      %v3101 = vpop.f32.mrb[0].mxu0
      %v3102 = vadd.f32 %v2920, %v3101
      %v3103 = vpop.f32.mrb[0].mxu0
      %3104 = vmatprep.mubr.bf16.mxu0 0
      %3105 = vmatmul.mubr.bf16.gmra.mrb[0].mxu0 %v2965
      %v3106 = vpop.f32.mrb[0].mxu0
      %v3107 = vadd.f32 %v2920, %v3106
      %v3108 = vpop.f32.mrb[0].mxu0
      %v3109 = vpop.f32.mrb[0].mxu0
      %v3110 = vadd.f32 %v2920, %v3109
      %v3111 = vpop.f32.mrb[0].mxu0
      %3112 = vmatprep.mubr.bf16.mxu0 0
      %3113 = vmatmul.mubr.bf16.gmra.mrb[0].mxu0 %v2968
      %v3114 = vpop.f32.mrb[0].mxu0
      %v3115 = vadd.f32 %v2920, %v3114
      %v3116 = vpop.f32.mrb[0].mxu0
      %v3117 = vpop.f32.mrb[0].mxu0
      %v3118 = vadd.f32 %v2920, %v3117
      %v3119 = vpop.f32.mrb[0].mxu0
      %3120 = vmatprep.mubr.bf16.mxu0 0
      %3121 = vmatmul.mubr.bf16.gmra.mrb[0].mxu0 %v2971
      %v3122 = vpop.f32.mrb[0].mxu0
      %v3123 = vadd.f32 %v2920, %v3122
      %v3124 = vpop.f32.mrb[0].mxu0
      %v3125 = vpop.f32.mrb[0].mxu0
      %v3126 = vadd.f32 %v2920, %v3125
      %v3127 = vpop.f32.mrb[0].mxu0
      %3128 = vmatprep.mubr.bf16.mxu0 0
      %3129 = vmatmul.mubr.bf16.gmra.mrb[0].mxu0 %v2974
      %v3130 = vpop.f32.mrb[0].mxu0
      %v3131 = vadd.f32 %v2920, %v3130
      %v3132 = vpop.f32.mrb[0].mxu0
      %v3133 = vpop.f32.mrb[0].mxu0
      %v3134 = vadd.f32 %v2920, %v3133
      %v3135 = vpop.f32.mrb[0].mxu0
      %3136 = vdwg.mxu0
      %v3137 = vld [vmem:[%s19] sm:$0xf]
      %v3138 = vld [vmem:[%s19 + $0x4] sm:$0xf]
      %v3139 = vld [vmem:[%s20] sm:$0x1]
      %v3140 = vpack.c.bf16 %v3014, %v3011
      %v3141 = vpack.c.bf16 %v3022, %v3019
      %v3142 = vpack.c.bf16 %v3030, %v3027
      %v3143 = vpack.c.bf16 %v3038, %v3035
      %v3144 = vpack.c.bf16 %v3046, %v3043
      %v3145 = vpack.c.bf16 %v3054, %v3051
      %v3146 = vpack.c.bf16 %v3062, %v3059
      %v3147 = vpack.c.bf16 %v3070, %v3067
      %v3148 = vpack.c.bf16 %v3078, %v3075
      %v3149 = vpack.c.bf16 %v3086, %v3083
      %v3150 = vpack.c.bf16 %v3094, %v3091
      %v3151 = vpack.c.bf16 %v3102, %v3099
      %v3152 = vpack.c.bf16 %v3110, %v3107
      %v3153 = vpack.c.bf16 %v3118, %v3115
      %v3154 = vpack.c.bf16 %v3126, %v3123
      %v3155 = vpack.c.bf16 %v3134, %v3131
      %v3157 = vlaneseq
      %v3158 = vshrl.u32 %v3157, 7
      %v3159 = vsub.s32 0, %v3158
      %v3160 = vrot.slane %v3139, %v3159
      %v3164 = vunpack.c.l.b16 %v3137
      %v3165 = vunpack.c.l.b16 %v3138
      %v3166 = vpack.c.b16 %v3165, %v3164
      %v3169 = vsel %vm2375, %v3140, 0
      %v3172 = vsel %vm2375, %v3141, 0
      %v3175 = vsel %vm2375, %v3142, 0
      %v3178 = vsel %vm2375, %v3143, 0
      %v3181 = vsel %vm2375, %v3144, 0
      %v3184 = vsel %vm2375, %v3145, 0
      %v3187 = vsel %vm2375, %v3146, 0
      %v3190 = vsel %vm2375, %v3147, 0
      %v3193 = vsel %vm2375, %v3148, 0
      %v3196 = vsel %vm2375, %v3149, 0
      %v3199 = vsel %vm2375, %v3150, 0
      %v3202 = vsel %vm2375, %v3151, 0
      %v3205 = vsel %vm2375, %v3152, 0
      %v3208 = vsel %vm2375, %v3153, 0
      %v3211 = vsel %vm2375, %v3154, 0
      %v3214 = vsel %vm2375, %v3155, 0
      %3216 = vmatprep.subr.bf16.mxu0 0
      %3217 = vmatpush1.bf16.msra.mxu0 %v3166
      %3218 = vmatprep.subr.bf16.mxu0 0
      %3219 = vmatpush1.bf16.msra.mxu0 0
      %3220 = vmatprep.subr.bf16.mxu0 0
      %3221 = vmatpush1.bf16.msra.mxu0 0
      %3222 = vmatprep.subr.bf16.mxu0 0
      %3223 = vmatpush1.bf16.msra.mxu0 0
      %3224 = vmatprep.subr.bf16.mxu0 0
      %3225 = vmatpush1.bf16.msra.mxu0 0
      %3226 = vmatprep.subr.bf16.mxu0 0
      %3227 = vmatpush1.bf16.msra.mxu0 0
      %3228 = vmatprep.subr.bf16.mxu0 0
      %3229 = vmatpush1.bf16.msra.mxu0 0
      %3230 = vmatprep.subr.bf16.mxu0 0
      %3231 = vmatpush1.bf16.msra.mxu0 0
      %3232 = vmatprep.subr.bf16.mxu0 0
      %3233 = vmatpush1.bf16.msra.mxu0 0
      %3234 = vmatprep.subr.bf16.mxu0 0
      %3235 = vmatpush1.bf16.msra.mxu0 0
      %3236 = vmatprep.subr.bf16.mxu0 0
      %3237 = vmatpush1.bf16.msra.mxu0 0
      %3238 = vmatprep.subr.bf16.mxu0 0
      %3239 = vmatpush1.bf16.msra.mxu0 0
      %3240 = vmatprep.subr.bf16.mxu0 0
      %3241 = vmatpush1.bf16.msra.mxu0 0
      %3242 = vmatprep.subr.bf16.mxu0 0
      %3243 = vmatpush1.bf16.msra.mxu0 0
      %3244 = vmatprep.subr.bf16.mxu0 0
      %3245 = vmatpush1.bf16.msra.mxu0 0
      %3246 = vmatprep.subr.bf16.mxu0 0
      %3247 = vmatpush1.bf16.msra.mxu0 0
      %3248 = vmatprep.mubr.bf16.mxu0 0
      %3249 = vmatmul.mubr.bf16.gmra.mrb[0].mxu0 %v3169
      %v3250 = vpop.f32.mrb[0].mxu0
      %v3251 = vadd.f32 %v3160, %v3250
      %v3252 = vpop.f32.mrb[0].mxu0
      %v3253 = vpop.f32.mrb[0].mxu0
      %v3254 = vadd.f32 %v3160, %v3253
      %v3255 = vpop.f32.mrb[0].mxu0
      %3256 = vmatprep.mubr.bf16.mxu0 0
      %3257 = vmatmul.mubr.bf16.gmra.mrb[0].mxu0 %v3172
      %v3258 = vpop.f32.mrb[0].mxu0
      %v3259 = vadd.f32 %v3160, %v3258
      %v3260 = vpop.f32.mrb[0].mxu0
      %v3261 = vpop.f32.mrb[0].mxu0
      %v3262 = vadd.f32 %v3160, %v3261
      %v3263 = vpop.f32.mrb[0].mxu0
      %3264 = vmatprep.mubr.bf16.mxu0 0
      %3265 = vmatmul.mubr.bf16.gmra.mrb[0].mxu0 %v3175
      %v3266 = vpop.f32.mrb[0].mxu0
      %v3267 = vadd.f32 %v3160, %v3266
      %v3268 = vpop.f32.mrb[0].mxu0
      %v3269 = vpop.f32.mrb[0].mxu0
      %v3270 = vadd.f32 %v3160, %v3269
      %v3271 = vpop.f32.mrb[0].mxu0
      %3272 = vmatprep.mubr.bf16.mxu0 0
      %3273 = vmatmul.mubr.bf16.gmra.mrb[0].mxu0 %v3178
      %v3274 = vpop.f32.mrb[0].mxu0
      %v3275 = vadd.f32 %v3160, %v3274
      %v3276 = vpop.f32.mrb[0].mxu0
      %v3277 = vpop.f32.mrb[0].mxu0
      %v3278 = vadd.f32 %v3160, %v3277
      %v3279 = vpop.f32.mrb[0].mxu0
      %3280 = vmatprep.mubr.bf16.mxu0 0
      %3281 = vmatmul.mubr.bf16.gmra.mrb[0].mxu0 %v3181
      %v3282 = vpop.f32.mrb[0].mxu0
      %v3283 = vadd.f32 %v3160, %v3282
      %v3284 = vpop.f32.mrb[0].mxu0
      %v3285 = vpop.f32.mrb[0].mxu0
      %v3286 = vadd.f32 %v3160, %v3285
      %v3287 = vpop.f32.mrb[0].mxu0
      %3288 = vmatprep.mubr.bf16.mxu0 0
      %3289 = vmatmul.mubr.bf16.gmra.mrb[0].mxu0 %v3184
      %v3290 = vpop.f32.mrb[0].mxu0
      %v3291 = vadd.f32 %v3160, %v3290
      %v3292 = vpop.f32.mrb[0].mxu0
      %v3293 = vpop.f32.mrb[0].mxu0
      %v3294 = vadd.f32 %v3160, %v3293
      %v3295 = vpop.f32.mrb[0].mxu0
      %3296 = vmatprep.mubr.bf16.mxu0 0
      %3297 = vmatmul.mubr.bf16.gmra.mrb[0].mxu0 %v3187
      %v3298 = vpop.f32.mrb[0].mxu0
      %v3299 = vadd.f32 %v3160, %v3298
      %v3300 = vpop.f32.mrb[0].mxu0
      %v3301 = vpop.f32.mrb[0].mxu0
      %v3302 = vadd.f32 %v3160, %v3301
      %v3303 = vpop.f32.mrb[0].mxu0
      %3304 = vmatprep.mubr.bf16.mxu0 0
      %3305 = vmatmul.mubr.bf16.gmra.mrb[0].mxu0 %v3190
      %v3306 = vpop.f32.mrb[0].mxu0
      %v3307 = vadd.f32 %v3160, %v3306
      %v3308 = vpop.f32.mrb[0].mxu0
      %v3309 = vpop.f32.mrb[0].mxu0
      %v3310 = vadd.f32 %v3160, %v3309
      %v3311 = vpop.f32.mrb[0].mxu0
      %3312 = vmatprep.mubr.bf16.mxu0 0
      %3313 = vmatmul.mubr.bf16.gmra.mrb[0].mxu0 %v3193
      %v3314 = vpop.f32.mrb[0].mxu0
      %v3315 = vadd.f32 %v3160, %v3314
      %v3316 = vpop.f32.mrb[0].mxu0
      %v3317 = vpop.f32.mrb[0].mxu0
      %v3318 = vadd.f32 %v3160, %v3317
      %v3319 = vpop.f32.mrb[0].mxu0
      %3320 = vmatprep.mubr.bf16.mxu0 0
      %3321 = vmatmul.mubr.bf16.gmra.mrb[0].mxu0 %v3196
      %v3322 = vpop.f32.mrb[0].mxu0
      %v3323 = vadd.f32 %v3160, %v3322
      %v3324 = vpop.f32.mrb[0].mxu0
      %v3325 = vpop.f32.mrb[0].mxu0
      %v3326 = vadd.f32 %v3160, %v3325
      %v3327 = vpop.f32.mrb[0].mxu0
      %3328 = vmatprep.mubr.bf16.mxu0 0
      %3329 = vmatmul.mubr.bf16.gmra.mrb[0].mxu0 %v3199
      %v3330 = vpop.f32.mrb[0].mxu0
      %v3331 = vadd.f32 %v3160, %v3330
      %v3332 = vpop.f32.mrb[0].mxu0
      %v3333 = vpop.f32.mrb[0].mxu0
      %v3334 = vadd.f32 %v3160, %v3333
      %v3335 = vpop.f32.mrb[0].mxu0
      %3336 = vmatprep.mubr.bf16.mxu0 0
      %3337 = vmatmul.mubr.bf16.gmra.mrb[0].mxu0 %v3202
      %v3338 = vpop.f32.mrb[0].mxu0
      %v3339 = vadd.f32 %v3160, %v3338
      %v3340 = vpop.f32.mrb[0].mxu0
      %v3341 = vpop.f32.mrb[0].mxu0
      %v3342 = vadd.f32 %v3160, %v3341
      %v3343 = vpop.f32.mrb[0].mxu0
      %3344 = vmatprep.mubr.bf16.mxu0 0
      %3345 = vmatmul.mubr.bf16.gmra.mrb[0].mxu0 %v3205
      %v3346 = vpop.f32.mrb[0].mxu0
      %v3347 = vadd.f32 %v3160, %v3346
      %v3348 = vpop.f32.mrb[0].mxu0
      %v3349 = vpop.f32.mrb[0].mxu0
      %v3350 = vadd.f32 %v3160, %v3349
      %v3351 = vpop.f32.mrb[0].mxu0
      %3352 = vmatprep.mubr.bf16.mxu0 0
      %3353 = vmatmul.mubr.bf16.gmra.mrb[0].mxu0 %v3208
      %v3354 = vpop.f32.mrb[0].mxu0
      %v3355 = vadd.f32 %v3160, %v3354
      %v3356 = vpop.f32.mrb[0].mxu0
      %v3357 = vpop.f32.mrb[0].mxu0
      %v3358 = vadd.f32 %v3160, %v3357
      %v3359 = vpop.f32.mrb[0].mxu0
      %3360 = vmatprep.mubr.bf16.mxu0 0
      %3361 = vmatmul.mubr.bf16.gmra.mrb[0].mxu0 %v3211
      %v3362 = vpop.f32.mrb[0].mxu0
      %v3363 = vadd.f32 %v3160, %v3362
      %v3364 = vpop.f32.mrb[0].mxu0
      %v3365 = vpop.f32.mrb[0].mxu0
      %v3366 = vadd.f32 %v3160, %v3365
      %v3367 = vpop.f32.mrb[0].mxu0
      %3368 = vmatprep.mubr.bf16.mxu0 0
      %3369 = vmatmul.mubr.bf16.gmra.mrb[0].mxu0 %v3214
      %v3370 = vpop.f32.mrb[0].mxu0
      %v3371 = vadd.f32 %v3160, %v3370
      %v3372 = vpop.f32.mrb[0].mxu0
      %v3373 = vpop.f32.mrb[0].mxu0
      %v3374 = vadd.f32 %v3160, %v3373
      %v3375 = vpop.f32.mrb[0].mxu0
      %3376 = vdwg.mxu0
      %3377 = vmax.xlane.f32.xlu0 %v3251
      %v3378 = vpop.xlane.xlu0 %3377
      %3379 = vmax.xlane.f32.xlu0 %v3254
      %v3380 = vpop.xlane.xlu0 %3379
      %3381 = vmax.xlane.f32.xlu0 %v3259
      %v3382 = vpop.xlane.xlu0 %3381
      %3383 = vmax.xlane.f32.xlu0 %v3262
      %v3384 = vpop.xlane.xlu0 %3383
      %3385 = vmax.xlane.f32.xlu0 %v3267
      %v3386 = vpop.xlane.xlu0 %3385
      %3387 = vmax.xlane.f32.xlu0 %v3270
      %v3388 = vpop.xlane.xlu0 %3387
      %3389 = vmax.xlane.f32.xlu0 %v3275
      %v3390 = vpop.xlane.xlu0 %3389
      %3391 = vmax.xlane.f32.xlu0 %v3278
      %v3392 = vpop.xlane.xlu0 %3391
      %3393 = vmax.xlane.f32.xlu0 %v3283
      %v3394 = vpop.xlane.xlu0 %3393
      %3395 = vmax.xlane.f32.xlu0 %v3286
      %v3396 = vpop.xlane.xlu0 %3395
      %3397 = vmax.xlane.f32.xlu0 %v3291
      %v3398 = vpop.xlane.xlu0 %3397
      %3399 = vmax.xlane.f32.xlu0 %v3294
      %v3400 = vpop.xlane.xlu0 %3399
      %3401 = vmax.xlane.f32.xlu0 %v3299
      %v3402 = vpop.xlane.xlu0 %3401
      %3403 = vmax.xlane.f32.xlu0 %v3302
      %v3404 = vpop.xlane.xlu0 %3403
      %3405 = vmax.xlane.f32.xlu0 %v3307
      %v3406 = vpop.xlane.xlu0 %3405
      %3407 = vmax.xlane.f32.xlu0 %v3310
      %v3408 = vpop.xlane.xlu0 %3407
      %3409 = vmax.xlane.f32.xlu0 %v3315
      %v3410 = vpop.xlane.xlu0 %3409
      %3411 = vmax.xlane.f32.xlu0 %v3318
      %v3412 = vpop.xlane.xlu0 %3411
      %3413 = vmax.xlane.f32.xlu0 %v3323
      %v3414 = vpop.xlane.xlu0 %3413
      %3415 = vmax.xlane.f32.xlu0 %v3326
      %v3416 = vpop.xlane.xlu0 %3415
      %3417 = vmax.xlane.f32.xlu0 %v3331
      %v3418 = vpop.xlane.xlu0 %3417
      %3419 = vmax.xlane.f32.xlu0 %v3334
      %v3420 = vpop.xlane.xlu0 %3419
      %3421 = vmax.xlane.f32.xlu0 %v3339
      %v3422 = vpop.xlane.xlu0 %3421
      %3423 = vmax.xlane.f32.xlu0 %v3342
      %v3424 = vpop.xlane.xlu0 %3423
      %3425 = vmax.xlane.f32.xlu0 %v3347
      %v3426 = vpop.xlane.xlu0 %3425
      %3427 = vmax.xlane.f32.xlu0 %v3350
      %v3428 = vpop.xlane.xlu0 %3427
      %3429 = vmax.xlane.f32.xlu0 %v3355
      %v3430 = vpop.xlane.xlu0 %3429
      %3431 = vmax.xlane.f32.xlu0 %v3358
      %v3432 = vpop.xlane.xlu0 %3431
      %3433 = vmax.xlane.f32.xlu0 %v3363
      %v3434 = vpop.xlane.xlu0 %3433
      %3435 = vmax.xlane.f32.xlu0 %v3366
      %v3436 = vpop.xlane.xlu0 %3435
      %3437 = vmax.xlane.f32.xlu0 %v3371
      %v3438 = vpop.xlane.xlu0 %3437
      %3439 = vmax.xlane.f32.xlu0 %v3374
      %v3440 = vpop.xlane.xlu0 %3439
      %v3441 = vsub.f32 %v3251, %v3378
      %v3442 = vsub.f32 %v3254, %v3380
      %v3443 = vsub.f32 %v3259, %v3382
      %v3444 = vsub.f32 %v3262, %v3384
      %v3445 = vsub.f32 %v3267, %v3386
      %v3446 = vsub.f32 %v3270, %v3388
      %v3447 = vsub.f32 %v3275, %v3390
      %v3448 = vsub.f32 %v3278, %v3392
      %v3449 = vsub.f32 %v3283, %v3394
      %v3450 = vsub.f32 %v3286, %v3396
      %v3451 = vsub.f32 %v3291, %v3398
      %v3452 = vsub.f32 %v3294, %v3400
      %v3453 = vsub.f32 %v3299, %v3402
      %v3454 = vsub.f32 %v3302, %v3404
      %v3455 = vsub.f32 %v3307, %v3406
      %v3456 = vsub.f32 %v3310, %v3408
      %v3457 = vsub.f32 %v3315, %v3410
      %v3458 = vsub.f32 %v3318, %v3412
      %v3459 = vsub.f32 %v3323, %v3414
      %v3460 = vsub.f32 %v3326, %v3416
      %v3461 = vsub.f32 %v3331, %v3418
      %v3462 = vsub.f32 %v3334, %v3420
      %v3463 = vsub.f32 %v3339, %v3422
      %v3464 = vsub.f32 %v3342, %v3424
      %v3465 = vsub.f32 %v3347, %v3426
      %v3466 = vsub.f32 %v3350, %v3428
      %v3467 = vsub.f32 %v3355, %v3430
      %v3468 = vsub.f32 %v3358, %v3432
      %v3469 = vsub.f32 %v3363, %v3434
      %v3470 = vsub.f32 %v3366, %v3436
      %v3471 = vsub.f32 %v3371, %v3438
      %v3472 = vsub.f32 %v3374, %v3440
      %v3473 = vmul.f32 %v3441, 1.442695
      %v3474 = vpow.pop %v3473
      %v3475 = vmul.f32 %v3442, 1.442695
      %v3476 = vpow.pop %v3475
      %v3477 = vmul.f32 %v3443, 1.442695
      %v3478 = vpow.pop %v3477
      %v3479 = vmul.f32 %v3444, 1.442695
      %v3480 = vpow.pop %v3479
      %v3481 = vmul.f32 %v3445, 1.442695
      %v3482 = vpow.pop %v3481
      %v3483 = vmul.f32 %v3446, 1.442695
      %v3484 = vpow.pop %v3483
      %v3485 = vmul.f32 %v3447, 1.442695
      %v3486 = vpow.pop %v3485
      %v3487 = vmul.f32 %v3448, 1.442695
      %v3488 = vpow.pop %v3487
      %v3489 = vmul.f32 %v3449, 1.442695
      %v3490 = vpow.pop %v3489
      %v3491 = vmul.f32 %v3450, 1.442695
      %v3492 = vpow.pop %v3491
      %v3493 = vmul.f32 %v3451, 1.442695
      %v3494 = vpow.pop %v3493
      %v3495 = vmul.f32 %v3452, 1.442695
      %v3496 = vpow.pop %v3495
      %v3497 = vmul.f32 %v3453, 1.442695
      %v3498 = vpow.pop %v3497
      %v3499 = vmul.f32 %v3454, 1.442695
      %v3500 = vpow.pop %v3499
      %v3501 = vmul.f32 %v3455, 1.442695
      %v3502 = vpow.pop %v3501
      %v3503 = vmul.f32 %v3456, 1.442695
      %v3504 = vpow.pop %v3503
      %v3505 = vmul.f32 %v3457, 1.442695
      %v3506 = vpow.pop %v3505
      %v3507 = vmul.f32 %v3458, 1.442695
      %v3508 = vpow.pop %v3507
      %v3509 = vmul.f32 %v3459, 1.442695
      %v3510 = vpow.pop %v3509
      %v3511 = vmul.f32 %v3460, 1.442695
      %v3512 = vpow.pop %v3511
      %v3513 = vmul.f32 %v3461, 1.442695
      %v3514 = vpow.pop %v3513
      %v3515 = vmul.f32 %v3462, 1.442695
      %v3516 = vpow.pop %v3515
      %v3517 = vmul.f32 %v3463, 1.442695
      %v3518 = vpow.pop %v3517
      %v3519 = vmul.f32 %v3464, 1.442695
      %v3520 = vpow.pop %v3519
      %v3521 = vmul.f32 %v3465, 1.442695
      %v3522 = vpow.pop %v3521
      %v3523 = vmul.f32 %v3466, 1.442695
      %v3524 = vpow.pop %v3523
      %v3525 = vmul.f32 %v3467, 1.442695
      %v3526 = vpow.pop %v3525
      %v3527 = vmul.f32 %v3468, 1.442695
      %v3528 = vpow.pop %v3527
      %v3529 = vmul.f32 %v3469, 1.442695
      %v3530 = vpow.pop %v3529
      %v3531 = vmul.f32 %v3470, 1.442695
      %v3532 = vpow.pop %v3531
      %v3533 = vmul.f32 %v3471, 1.442695
      %v3534 = vpow.pop %v3533
      %v3535 = vmul.f32 %v3472, 1.442695
      %v3536 = vpow.pop %v3535
      %3537 = vadd.xlane.f32.xlu0 %v3474
      %v3538 = vpop.xlane.xlu0 %3537
      %3539 = vadd.xlane.f32.xlu0 %v3476
      %v3540 = vpop.xlane.xlu0 %3539
      %3541 = vadd.xlane.f32.xlu0 %v3478
      %v3542 = vpop.xlane.xlu0 %3541
      %3543 = vadd.xlane.f32.xlu0 %v3480
      %v3544 = vpop.xlane.xlu0 %3543
      %3545 = vadd.xlane.f32.xlu0 %v3482
      %v3546 = vpop.xlane.xlu0 %3545
      %3547 = vadd.xlane.f32.xlu0 %v3484
      %v3548 = vpop.xlane.xlu0 %3547
      %3549 = vadd.xlane.f32.xlu0 %v3486
      %v3550 = vpop.xlane.xlu0 %3549
      %3551 = vadd.xlane.f32.xlu0 %v3488
      %v3552 = vpop.xlane.xlu0 %3551
      %3553 = vadd.xlane.f32.xlu0 %v3490
      %v3554 = vpop.xlane.xlu0 %3553
      %3555 = vadd.xlane.f32.xlu0 %v3492
      %v3556 = vpop.xlane.xlu0 %3555
      %3557 = vadd.xlane.f32.xlu0 %v3494
      %v3558 = vpop.xlane.xlu0 %3557
      %3559 = vadd.xlane.f32.xlu0 %v3496
      %v3560 = vpop.xlane.xlu0 %3559
      %3561 = vadd.xlane.f32.xlu0 %v3498
      %v3562 = vpop.xlane.xlu0 %3561
      %3563 = vadd.xlane.f32.xlu0 %v3500
      %v3564 = vpop.xlane.xlu0 %3563
      %3565 = vadd.xlane.f32.xlu0 %v3502
      %v3566 = vpop.xlane.xlu0 %3565
      %3567 = vadd.xlane.f32.xlu0 %v3504
      %v3568 = vpop.xlane.xlu0 %3567
      %3569 = vadd.xlane.f32.xlu0 %v3506
      %v3570 = vpop.xlane.xlu0 %3569
      %3571 = vadd.xlane.f32.xlu0 %v3508
      %v3572 = vpop.xlane.xlu0 %3571
      %3573 = vadd.xlane.f32.xlu0 %v3510
      %v3574 = vpop.xlane.xlu0 %3573
      %3575 = vadd.xlane.f32.xlu0 %v3512
      %v3576 = vpop.xlane.xlu0 %3575
      %3577 = vadd.xlane.f32.xlu0 %v3514
      %v3578 = vpop.xlane.xlu0 %3577
      %3579 = vadd.xlane.f32.xlu0 %v3516
      %v3580 = vpop.xlane.xlu0 %3579
      %3581 = vadd.xlane.f32.xlu0 %v3518
      %v3582 = vpop.xlane.xlu0 %3581
      %3583 = vadd.xlane.f32.xlu0 %v3520
      %v3584 = vpop.xlane.xlu0 %3583
      %3585 = vadd.xlane.f32.xlu0 %v3522
      %v3586 = vpop.xlane.xlu0 %3585
      %3587 = vadd.xlane.f32.xlu0 %v3524
      %v3588 = vpop.xlane.xlu0 %3587
      %3589 = vadd.xlane.f32.xlu0 %v3526
      %v3590 = vpop.xlane.xlu0 %3589
      %3591 = vadd.xlane.f32.xlu0 %v3528
      %v3592 = vpop.xlane.xlu0 %3591
      %3593 = vadd.xlane.f32.xlu0 %v3530
      %v3594 = vpop.xlane.xlu0 %3593
      %3595 = vadd.xlane.f32.xlu0 %v3532
      %v3596 = vpop.xlane.xlu0 %3595
      %3597 = vadd.xlane.f32.xlu0 %v3534
      %v3598 = vpop.xlane.xlu0 %3597
      %3599 = vadd.xlane.f32.xlu0 %v3536
      %v3600 = vpop.xlane.xlu0 %3599
      %v3601 = vrcp.pop %v3538
      %v3602 = vrcp.pop %v3540
      %v3603 = vrcp.pop %v3542
      %v3604 = vrcp.pop %v3544
      %v3605 = vrcp.pop %v3546
      %v3606 = vrcp.pop %v3548
      %v3607 = vrcp.pop %v3550
      %v3608 = vrcp.pop %v3552
      %v3609 = vrcp.pop %v3554
      %v3610 = vrcp.pop %v3556
      %v3611 = vrcp.pop %v3558
      %v3612 = vrcp.pop %v3560
      %v3613 = vrcp.pop %v3562
      %v3614 = vrcp.pop %v3564
      %v3615 = vrcp.pop %v3566
      %v3616 = vrcp.pop %v3568
      %v3617 = vrcp.pop %v3570
      %v3618 = vrcp.pop %v3572
      %v3619 = vrcp.pop %v3574
      %v3620 = vrcp.pop %v3576
      %v3621 = vrcp.pop %v3578
      %v3622 = vrcp.pop %v3580
      %v3623 = vrcp.pop %v3582
      %v3624 = vrcp.pop %v3584
      %v3625 = vrcp.pop %v3586
      %v3626 = vrcp.pop %v3588
      %v3627 = vrcp.pop %v3590
      %v3628 = vrcp.pop %v3592
      %v3629 = vrcp.pop %v3594
      %v3630 = vrcp.pop %v3596
      %v3631 = vrcp.pop %v3598
      %v3632 = vrcp.pop %v3600
      %v3633 = vmul.f32 %v3474, %v3601
      %v3634 = vmul.f32 %v3476, %v3602
      %v3635 = vmul.f32 %v3478, %v3603
      %v3636 = vmul.f32 %v3480, %v3604
      %v3637 = vmul.f32 %v3482, %v3605
      %v3638 = vmul.f32 %v3484, %v3606
      %v3639 = vmul.f32 %v3486, %v3607
      %v3640 = vmul.f32 %v3488, %v3608
      %v3641 = vmul.f32 %v3490, %v3609
      %v3642 = vmul.f32 %v3492, %v3610
      %v3643 = vmul.f32 %v3494, %v3611
      %v3644 = vmul.f32 %v3496, %v3612
      %v3645 = vmul.f32 %v3498, %v3613
      %v3646 = vmul.f32 %v3500, %v3614
      %v3647 = vmul.f32 %v3502, %v3615
      %v3648 = vmul.f32 %v3504, %v3616
      %v3649 = vmul.f32 %v3506, %v3617
      %v3650 = vmul.f32 %v3508, %v3618
      %v3651 = vmul.f32 %v3510, %v3619
      %v3652 = vmul.f32 %v3512, %v3620
      %v3653 = vmul.f32 %v3514, %v3621
      %v3654 = vmul.f32 %v3516, %v3622
      %v3655 = vmul.f32 %v3518, %v3623
      %v3656 = vmul.f32 %v3520, %v3624
      %v3657 = vmul.f32 %v3522, %v3625
      %v3658 = vmul.f32 %v3524, %v3626
      %v3659 = vmul.f32 %v3526, %v3627
      %v3660 = vmul.f32 %v3528, %v3628
      %v3661 = vmul.f32 %v3530, %v3629
      %v3662 = vmul.f32 %v3532, %v3630
      %v3663 = vmul.f32 %v3534, %v3631
      %v3664 = vmul.f32 %v3536, %v3632
      %3665 = vst [vmem:[%s658] sm:$0xff] %v3633
      %3666 = vst [vmem:[%s658 + $0x8] sm:$0xff] %v3634
      %3667 = vst [vmem:[%s658 + $0x10] sm:$0xff] %v3635
      %3668 = vst [vmem:[%s658 + $0x18] sm:$0xff] %v3636
      %3669 = vst [vmem:[%s658 + $0x20] sm:$0xff] %v3637
      %3670 = vst [vmem:[%s658 + $0x28] sm:$0xff] %v3638
      %3671 = vst [vmem:[%s658 + $0x30] sm:$0xff] %v3639
      %3672 = vst [vmem:[%s658 + $0x38] sm:$0xff] %v3640
      %3673 = vst [vmem:[%s658 + $0x40] sm:$0xff] %v3641
      %3674 = vst [vmem:[%s658 + $0x48] sm:$0xff] %v3642
      %3675 = vst [vmem:[%s658 + $0x50] sm:$0xff] %v3643
      %3676 = vst [vmem:[%s658 + $0x58] sm:$0xff] %v3644
      %3677 = vst [vmem:[%s658 + $0x60] sm:$0xff] %v3645
      %3678 = vst [vmem:[%s658 + $0x68] sm:$0xff] %v3646
      %3679 = vst [vmem:[%s658 + $0x70] sm:$0xff] %v3647
      %3680 = vst [vmem:[%s658 + $0x78] sm:$0xff] %v3648
      %3681 = vst [vmem:[%s658 + $0x80] sm:$0xff] %v3649
      %3682 = vst [vmem:[%s658 + $0x88] sm:$0xff] %v3650
      %3683 = vst [vmem:[%s658 + $0x90] sm:$0xff] %v3651
      %3684 = vst [vmem:[%s658 + $0x98] sm:$0xff] %v3652
      %3685 = vst [vmem:[%s658 + $0xa0] sm:$0xff] %v3653
      %3686 = vst [vmem:[%s658 + $0xa8] sm:$0xff] %v3654
      %3687 = vst [vmem:[%s658 + $0xb0] sm:$0xff] %v3655
      %3688 = vst [vmem:[%s658 + $0xb8] sm:$0xff] %v3656
      %3689 = vst [vmem:[%s658 + $0xc0] sm:$0xff] %v3657
      %3690 = vst [vmem:[%s658 + $0xc8] sm:$0xff] %v3658
      %3691 = vst [vmem:[%s658 + $0xd0] sm:$0xff] %v3659
      %3692 = vst [vmem:[%s658 + $0xd8] sm:$0xff] %v3660
      %3693 = vst [vmem:[%s658 + $0xe0] sm:$0xff] %v3661
      %3694 = vst [vmem:[%s658 + $0xe8] sm:$0xff] %v3662
      %3695 = vst [vmem:[%s658 + $0xf0] sm:$0xff] %v3663
      %3696 = vst [vmem:[%s658 + $0xf8] sm:$0xff] %v3664
      %s3697 = smul.u32 32, %s32
      %p3698 = scmp.lt.s32.totalorder %s3697, 63
      %s3699 = scalar_select %p3698, %s3697, 63
      %s3700 = smul.addr %s3699, 8
      %s3701 = scalar_lea.vmem %s21, %s3700
      // Predicated region
      $region105: #{stacked_autoencoder_forward.1} parent=103 // pred_check
        %p3702 = pneg %p496
      $region106: #{stacked_autoencoder_forward.1} parent=103 // pred_check_branch
        %3704 = sbr.rel (%p3702) target = $region108
      $region107: #{stacked_autoencoder_forward.1} parent=103 // pred_region
        %s3705 = smul.u32 32, %s32
      $region108: #{stacked_autoencoder_forward.1} parent=103 // pred_fallthru
        _
    $region104: #{stacked_autoencoder_forward.1} parent=5 // pred_fallthru
      _
    %p3706 = scmp.le.s32.totalorder 2, %s27
    // Predicated region
    $region109: #{stacked_autoencoder_forward.1} parent=5 // pred_check
      %p3707 = pneg %p3706
    $region110: #{stacked_autoencoder_forward.1} parent=5 // pred_check_branch
      %3709 = sbr.rel (%p3707) target = $region112
    $region111: #{stacked_autoencoder_forward.1} parent=5 // pred_region
      %s3710 = ssub.s32 %s27, 2
      // Predicated region
      $region113: #{stacked_autoencoder_forward.1} parent=111 // pred_check
        %p3711 = pneg %p502
      $region114: #{stacked_autoencoder_forward.1} parent=111 // pred_check_branch
        %3713 = sbr.rel (%p3711) target = $region116
      $region115: #{stacked_autoencoder_forward.1} parent=111 // pred_region
        %s3714 = smul.u32 32, %s33
        %p3715 = scmp.lt.s32.totalorder %s3714, 63
        %s3716 = scalar_select %p3715, %s3714, 63
        %s3717 = smul.addr %s3716, 8
        %s3718 = scalar_lea.vmem %s21, %s3717
      $region116: #{stacked_autoencoder_forward.1} parent=111 // pred_fallthru
        _
    $region112: #{stacked_autoencoder_forward.1} parent=5 // pred_fallthru
      _
  $region6: #{stacked_autoencoder_forward.1} parent=0 // loop_footer
    %s31 = sadd.s32 1, %s27
  $region7: #{stacked_autoencoder_forward.1} parent=0 // loop_footer_branch
    %26 = sbr.rel target = $region3
  $region8: #{stacked_autoencoder_forward.1} parent=0 // loop_exit
    _

</llo_original>
